<compile_context>
chip_gen: v7x
topology: tpu7x:2x2x1
jax: 0.10.0
libtpu: 0.0.40
codegen_flags: <defaults>
</compile_context>

<pallas_src>
import numpy as np

import jax
import jax.numpy as jnp
from jax.experimental import pallas as pl
from jax.experimental.pallas import tpu as pltpu


_TRANSPORT_DTYPE = jnp.float32        # flip to jnp.bfloat16 on v6e/v7x deployments
_VMEM_LIMIT_BYTES = 32 * 1024 * 1024
_PIXEL_VMEM_BUDGET = 6 * 1024 * 1024  # HBM<->VMEM block buffers (double-buffered)

# ConvTranspose2d(k=4, s=2, p=1) sub-pixel decomposition:
#   output parity d in {0,1}  ->  [(input shift, kernel tap), ...]
_PARITY_TAPS = (((0, 1), (-1, 3)), ((0, 2), (1, 0)))
# per phase (dy*2+dx), per term (a*2+b): index into the 9-way shifted-x stack
_PHASE_SHIFT = tuple(
    tuple((_PARITY_TAPS[dy][a][0] + 1) * 3 + (_PARITY_TAPS[dx][b][0] + 1)
          for a in range(2) for b in range(2))
    for dy in range(2) for dx in range(2))


# ------------------------------ helpers ------------------------------------ #

def _lane_tile(lanes, rows_per_lane, dtype_bytes=4, budget=_PIXEL_VMEM_BUDGET):
    """Largest lane tile: full `lanes` if it fits the budget, else a big
    multiple of 128 (double buffering accounted for)."""
    cap = budget // (2 * rows_per_lane * dtype_bytes)
    cap = max(128, (cap // 128) * 128)
    return lanes if lanes <= cap else cap


def _conv1x1(x, w, b=None):
    """Per-pixel 1x1 conv as Cin broadcast FMAs on the VPU.

    x: (Cin, L) lane-dense pixels, w: (Cout, Cin), b: (Cout, 1) or None.
    (For large C, pad toward 128 and switch to jnp.dot / MXU instead.)
    """
    cout, cin = w.shape
    acc = w[:, 0:1] * x[0:1, :]
    for ci in range(1, cin):
        acc = acc + w[:, ci:ci + 1] * x[ci:ci + 1, :]
    if b is not None:
        acc = acc + b
    return acc


def _lrelu(a):
    return jnp.where(a > 0, a, 0.1 * a)


# ------------------------------ Pallas kernels ------------------------------ #

def _stage1_kernel(mag_ref, pha_ref, s_ref, x9_ref,
                   w1a_ref, b1a_ref, w2a_ref, b2a_ref,
                   w1p_ref, b1p_ref, w2p_ref, b2p_ref,
                   wz_ref,
                   re_ref, im_ref, z_ref):
    """Fused low-res pass:
       * amp_fuse / pha_fuse (1x1 -> LeakyReLU -> 1x1)
       * folded 0.5 Nyquist row/col scaling + polar->cartesian
       * ConvTranspose2d as 4 sub-pixel phase projections of shifted x."""
    f32 = jnp.float32
    C = mag_ref.shape[1]
    cout = z_ref.shape[1] // 4

    # --- frequency branch ---------------------------------------------------
    mag = mag_ref[0].astype(f32)          # (C, L)
    pha = pha_ref[0].astype(f32)          # (C, L)
    s = s_ref[...].astype(f32)            # (1, L)

    h = _lrelu(_conv1x1(mag, w1a_ref[...], b1a_ref[...]))
    Mag = _conv1x1(h, w2a_ref[...], b2a_ref[...]) * s

    g = _lrelu(_conv1x1(pha, w1p_ref[...], b1p_ref[...]))
    Pha = _conv1x1(g, w2p_ref[...], b2p_ref[...]) * s

    re_ref[0] = Mag * jnp.cos(Pha)
    im_ref[0] = Mag * jnp.sin(Pha)

    # --- ConvTranspose phase projections (bias folded into the fuse kernel) --
    x9 = x9_ref[0].astype(f32)            # (9*C, L)  shift-major, then channel
    wz = wz_ref[...].astype(f32)          # (16*cout, C)  (phase, term)-major
    for ph in range(4):
        acc = None
        for t in range(4):
            blk = ph * 4 + t
            w = wz[blk * cout:(blk + 1) * cout, :]
            sh = _PHASE_SHIFT[ph][t]
            xs = x9[sh * C:(sh + 1) * C, :]
            term = _conv1x1(xs, w)
            acc = term if acc is None else acc + term
        z_ref[0, ph * cout:(ph + 1) * cout, :] = acc


def _cat_fuse_kernel(x2_ref, re_ref, im_ref, w2_ref, w3_ref, b_ref, out_ref):
    """|ifft2| + Conv2d(2*C_out, C_out, 1) on cat([x2, x3]) without the cat."""
    re = re_ref[0].astype(jnp.float32)
    im = im_ref[0].astype(jnp.float32)
    x3 = jnp.sqrt(re * re + im * im)
    x2 = x2_ref[0].astype(jnp.float32)
    out_ref[0] = _conv1x1(x2, w2_ref[...]) + _conv1x1(x3, w3_ref[...]) + b_ref[...]


# ------------------------------ pallas_call wrappers ------------------------ #

def _compiler_params():
    return pltpu.CompilerParams(
        dimension_semantics=("parallel", "parallel"),
        vmem_limit_bytes=_VMEM_LIMIT_BYTES)


def stage1_pallas(mag, pha, scale, x9,
                  w1a, b1a, w2a, b2a, w1p, b1p, w2p, b2p, wz):
    N, C, L = mag.shape
    cout = wz.shape[0] // 16
    R = 4 * cout                          # phase-major ConvTranspose rows
    tl = _lane_tile(L, rows_per_lane=13 * C + 1 + R)
    grid = (N, pl.cdiv(L, tl))
    pix = lambda ch: pl.BlockSpec((1, ch, tl), lambda n, j: (n, 0, j))
    svec = pl.BlockSpec((1, tl), lambda n, j: (0, j))
    wsp = lambda a: pl.BlockSpec(a.shape, lambda n, j: (0, 0))
    weights = (w1a, b1a, w2a, b2a, w1p, b1p, w2p, b2p, wz)
    cost = pl.CostEstimate(
        flops=int(N * L * (8 * C * C + 14 * C + 32 * cout * C)),
        transcendentals=int(2 * N * C * L),
        bytes_accessed=int(4 * (N * L * (13 * C + R) + L
                                + sum(int(w.size) for w in weights))))
    return pl.pallas_call(
        _stage1_kernel,
        out_shape=(jax.ShapeDtypeStruct((N, C, L), jnp.float32),
                   jax.ShapeDtypeStruct((N, C, L), jnp.float32),
                   jax.ShapeDtypeStruct((N, R, L), jnp.float32)),
        grid=grid,
        in_specs=[pix(C), pix(C), svec, pix(9 * C)] + [wsp(w) for w in weights],
        out_specs=(pix(C), pix(C), pix(R)),
        compiler_params=_compiler_params(),
        cost_estimate=cost,
    )(mag, pha, scale, x9, *weights)


def cat_fuse_pallas(x2, re_i, im_i, w2, w3, b):
    N, C2, L = x2.shape
    C3 = re_i.shape[1]
    Cout = w2.shape[0]
    tl = _lane_tile(L, rows_per_lane=C2 + 2 * C3 + Cout)
    grid = (N, pl.cdiv(L, tl))
    pix = lambda c: pl.BlockSpec((1, c, tl), lambda n, j: (n, 0, j))
    wsp = lambda a: pl.BlockSpec(a.shape, lambda n, j: (0, 0))
    cost = pl.CostEstimate(
        flops=int(N * L * (2 * Cout * (C2 + C3) + 4 * C3)),
        transcendentals=int(N * C3 * L),
        bytes_accessed=int(4 * (N * L * (C2 + 2 * C3 + Cout)
                                + int(w2.size) + int(w3.size) + int(b.size))))
    return pl.pallas_call(
        _cat_fuse_kernel,
        out_shape=jax.ShapeDtypeStruct((N, Cout, L), jnp.float32),
        grid=grid,
        in_specs=[pix(C2), pix(C3), pix(C3), wsp(w2), wsp(w3), wsp(b)],
        out_specs=pix(Cout),
        compiler_params=_compiler_params(),
        cost_estimate=cost,
    )(x2, re_i, im_i, w2, w3, b)


# ------------------------------ XLA glue ------------------------------------ #

def _corner_scale(h, w):
    """0.5 scaling of the Nyquist row/col (even sizes only), folded at low res."""
    sr = np.ones((h, 1), np.float32)
    if h % 2 == 0:
        sr[h // 2, 0] = 0.5
    sc = np.ones((1, w), np.float32)
    if w % 2 == 0:
        sc[0, w // 2] = 0.5
    return jnp.asarray((sr * sc).reshape(1, h * w))


def _corner_place(a):
    """Corner-spectrum placement (N,C,H,W)->(N,C,2H,2W); the 0.5 scaling was
    already applied at low resolution inside the Pallas stage-1 kernel."""
    n, ch, r, c = a.shape
    ir1 = r // 2 + 1
    ir2 = r // 2 + (1 if r % 2 == 1 else 0)
    ic1 = c // 2 + 1
    ic2 = c // 2 + (1 if c % 2 == 1 else 0)
    out = jnp.zeros((n, ch, 2 * r, 2 * c), a.dtype)
    out = out.at[:, :, :ir1, :ic1].set(a[:, :, :ir1, :ic1])
    out = out.at[:, :, :ir1, ic2 + c:].set(a[:, :, :ir1, ic2:])
    out = out.at[:, :, ir2 + r:, :ic1].set(a[:, :, ir2:, :ic1])
    out = out.at[:, :, ir2 + r:, ic2 + c:].set(a[:, :, ir2:, ic2:])
    return out


def _phase_weights(up_w):
    """Fold ConvTranspose2d weights (Cin, Cout, 4, 4) into the (16*Cout, Cin)
    phase/term-major matrix consumed by the stage-1 kernel."""
    blocks = []
    for dy in range(2):
        for dx in range(2):
            for a in range(2):
                for b in range(2):
                    ky = _PARITY_TAPS[dy][a][1]
                    kx = _PARITY_TAPS[dx][b][1]
                    blocks.append(jnp.transpose(up_w[:, :, ky, kx]))  # (Cout, Cin)
    return jnp.concatenate(blocks, axis=0)


def _shifted_stack(x):
    """9 shifted copies x[n,c,i+sy,j+sx] (zero-padded), shift-major rows."""
    n, c, h, w = x.shape
    xp = jnp.pad(x, ((0, 0), (0, 0), (1, 1), (1, 1)))
    shifts = [xp[:, :, 1 + sy:1 + sy + h, 1 + sx:1 + sx + w]
              for sy in (-1, 0, 1) for sx in (-1, 0, 1)]
    return jnp.stack(shifts, axis=1).reshape(n, 9 * c, h * w)


# ------------------------------ forward pass -------------------------------- #

def frescat_corner_forward(x, p):
    n, c, h, w = x.shape
    l = h * w
    cout = p["fuse_w"].shape[0]
    t = _TRANSPORT_DTYPE

    # ---- freup_Cornerdinterpolation: frequency branch ---------------------- #
    # TODO(synk): fft2/ifft2 have no Pallas TPU primitive; kept as XLA glue.
    fx = jnp.fft.fft2(x)
    mag = jnp.abs(fx).reshape(n, c, l)
    # TODO(synk): angle/arctan2 Mosaic lowering unverified; kept as XLA glue.
    pha = jnp.angle(fx).reshape(n, c, l)

    # shifted-x stack and phase weights for the ConvTranspose sub-pixel form
    x9 = _shifted_stack(x)
    wz = _phase_weights(p["up_w"])

    re0, im0, z = stage1_pallas(
        mag.astype(t), pha.astype(t), _corner_scale(h, w), x9.astype(t),
        p["amp_w1"], p["amp_b1"], p["amp_w2"], p["amp_b2"],
        p["pha_w1"], p["pha_b1"], p["pha_w2"], p["pha_b2"], wz)

    re_up = _corner_place(re0.reshape(n, c, h, w))
    im_up = _corner_place(im0.reshape(n, c, h, w))
    y = jnp.fft.ifft2(jax.lax.complex(re_up, im_up))
    yr = jnp.real(y).reshape(n, c, 4 * l)
    yi = jnp.imag(y).reshape(n, c, 4 * l)     # |y| fused into the cat-fuse kernel

    # ---- up = ConvTranspose2d: interleave the 4 phases (pure data movement) - #
    x2 = (z.reshape(n, 2, 2, cout, h, w)
            .transpose(0, 3, 4, 1, 5, 2)
            .reshape(n, cout, 4 * l))
    # (the ConvTranspose bias is folded into the fused bias below)

    # ---- fuse = Conv2d(2*cout, cout, 1) on cat([x2, x3]) -------------------- #
    wf2 = p["fuse_w"][:, :cout]
    wf3 = p["fuse_w"][:, cout:]
    b_eff = p["fuse_b"] + jnp.matmul(wf2, p["up_b"],
                                     precision=jax.lax.Precision.HIGHEST)
    out = cat_fuse_pallas(x2.astype(t), yr.astype(t), yi.astype(t), wf2, wf3, b_eff)
    return out.reshape(n, cout, 2 * h, 2 * w)


# ------------------------------ params / reference -------------------------- #

def init_params(key, c_in, c_out):
    # NOTE: the original module requires channels_in == channels_out
    # (cat([x2, x3]) must have 2*channels_out channels for `fuse`).
    assert c_in == c_out, "frescat_corner requires channels_in == channels_out"
    ks = jax.random.split(key, 12)
    wmat = lambda k, co, ci: jax.random.normal(k, (co, ci), jnp.float32) * 0.2
    bvec = lambda k, co: jax.random.normal(k, (co, 1), jnp.float32) * 0.05
    return dict(
        amp_w1=wmat(ks[0], c_in, c_in), amp_b1=bvec(ks[1], c_in),
        amp_w2=wmat(ks[2], c_in, c_in), amp_b2=bvec(ks[3], c_in),
        pha_w1=wmat(ks[4], c_in, c_in), pha_b1=bvec(ks[5], c_in),
        pha_w2=wmat(ks[6], c_in, c_in), pha_b2=bvec(ks[7], c_in),
        up_w=jax.random.normal(ks[8], (c_in, c_out, 4, 4), jnp.float32) * 0.2,
        up_b=bvec(ks[9], c_out),
        fuse_w=wmat(ks[10], c_out, 2 * c_out), fuse_b=bvec(ks[11], c_out),
    )


def reference(x, p):
    """Pure-JAX transcription of the PyTorch forward (verification only)."""
    N, C, H, W = x.shape
    hp = jax.lax.Precision.HIGHEST

    def conv1x1(a, w, b):
        return (jnp.einsum("oc,nchw->nohw", w, a, precision=hp)
                + b[:, 0][None, :, None, None])

    def lrelu(a):
        return jnp.where(a > 0, a, 0.1 * a)

    # freup_Cornerdinterpolation
    fx = jnp.fft.fft2(x)
    mag = jnp.abs(fx)
    pha = jnp.angle(fx)
    Mag = conv1x1(lrelu(conv1x1(mag, p["amp_w1"], p["amp_b1"])), p["amp_w2"], p["amp_b2"])
    Pha = conv1x1(lrelu(conv1x1(pha, p["pha_w1"], p["pha_b1"])), p["pha_w2"], p["pha_b2"])
    r, c = H, W
    ir1, ir2 = (r // 2 + 1, r // 2 + 1) if r % 2 == 1 else (r // 2 + 1, r // 2)
    ic1, ic2 = (c // 2 + 1, c // 2 + 1) if c % 2 == 1 else (c // 2 + 1, c // 2)

    def place_and_scale(A):
        I = jnp.zeros((N, C, 2 * H, 2 * W), jnp.float32)
        I = I.at[:, :, :ir1, :ic1].set(A[:, :, :ir1, :ic1])
        I = I.at[:, :, :ir1, ic2 + c:].set(A[:, :, :ir1, ic2:])
        I = I.at[:, :, ir2 + r:, :ic1].set(A[:, :, ir2:, :ic1])
        I = I.at[:, :, ir2 + r:, ic2 + c:].set(A[:, :, ir2:, ic2:])
        if r % 2 == 0:
            I = I.at[:, :, ir2, :].multiply(0.5)
            I = I.at[:, :, ir2 + r, :].multiply(0.5)
        if c % 2 == 0:
            I = I.at[:, :, :, ic2].multiply(0.5)
            I = I.at[:, :, :, ic2 + c].multiply(0.5)
        return I

    I_Mup = place_and_scale(Mag)
    I_Pup = place_and_scale(Pha)
    real = I_Mup * jnp.cos(I_Pup)
    imag = I_Mup * jnp.sin(I_Pup)
    x3 = jnp.abs(jnp.fft.ifft2(jax.lax.complex(real, imag)))

    # ConvTranspose2d(C, C_out, 4, stride=2, padding=1) (gather-conv form)
    k, pad, stride = 4, 1, 2
    w_conv = jnp.transpose(p["up_w"][:, :, ::-1, ::-1], (1, 0, 2, 3))
    x2 = jax.lax.conv_general_dilated(
        x, w_conv, window_strides=(1, 1),
        padding=[(k - 1 - pad, k - 1 - pad)] * 2,
        lhs_dilation=(stride, stride),
        dimension_numbers=("NCHW", "OIHW", "NCHW"),
        precision=hp)
    x2 = x2 + p["up_b"][:, 0][None, :, None, None]

    cat = jnp.concatenate([x2, x3], axis=1)
    return conv1x1(cat, p["fuse_w"], p["fuse_b"])


if __name__ == "__main__":
    key = jax.random.PRNGKey(0)
    kx, kp = jax.random.split(key)
    n, c_in, c_out, h, w = 2, 4, 4, 16, 16
    x = jax.random.normal(kx, (n, c_in, h, w), jnp.float32)
    params = init_params(kp, c_in, c_out)

    fwd = jax.jit(frescat_corner_forward)
    out = jax.block_until_ready(fwd(x, params))
    assert out.shape == (n, c_out, 2 * h, 2 * w), out.shape

    ref = reference(x, params)
    err = float(jnp.max(jnp.abs(out - ref)))
    assert jnp.allclose(out, ref, rtol=1e-3, atol=1e-3), f"max abs err = {err}"

    print("KERNEL_OK")
</pallas_src>

<mosaic_0001>
module attributes {stable_mosaic.version = 11 : i64} {
  func.func @_stage1_kernel(%arg0: i32, %arg1: i32, %arg2: memref<1x4x256xf32, #tpu.memory_space<vmem>>, %arg3: memref<1x4x256xf32, #tpu.memory_space<vmem>>, %arg4: memref<1x256xf32, #tpu.memory_space<vmem>>, %arg5: memref<1x36x256xf32, #tpu.memory_space<vmem>>, %arg6: memref<4x4xf32, #tpu.memory_space<vmem>>, %arg7: memref<4x1xf32, #tpu.memory_space<vmem>>, %arg8: memref<4x4xf32, #tpu.memory_space<vmem>>, %arg9: memref<4x1xf32, #tpu.memory_space<vmem>>, %arg10: memref<4x4xf32, #tpu.memory_space<vmem>>, %arg11: memref<4x1xf32, #tpu.memory_space<vmem>>, %arg12: memref<4x4xf32, #tpu.memory_space<vmem>>, %arg13: memref<4x1xf32, #tpu.memory_space<vmem>>, %arg14: memref<64x4xf32, #tpu.memory_space<vmem>>, %arg15: memref<1x4x256xf32, #tpu.memory_space<vmem>>, %arg16: memref<1x4x256xf32, #tpu.memory_space<vmem>>, %arg17: memref<1x16x256xf32, #tpu.memory_space<vmem>>) attributes {dimension_semantics = [#tpu.dimension_semantics<parallel>, #tpu.dimension_semantics<parallel>], iteration_bounds = array<i64: 2, 1>, scalar_prefetch = 0 : i64, scratch_operands = 0 : i64, tpu.core_type = #tpu.core_type<tc>, window_params = [{transform_indices = @transform_0, window_bounds = array<i64: 1, 4, 256>}, {transform_indices = @transform_1, window_bounds = array<i64: 1, 4, 256>}, {transform_indices = @transform_2, window_bounds = array<i64: 1, 256>}, {transform_indices = @transform_3, window_bounds = array<i64: 1, 36, 256>}, {pipeline_mode = #tpu.pipeline_mode<synchronous>, transform_indices = @transform_4, window_bounds = array<i64: 4, 4>}, {pipeline_mode = #tpu.pipeline_mode<synchronous>, transform_indices = @transform_5, window_bounds = array<i64: 4, 1>}, {pipeline_mode = #tpu.pipeline_mode<synchronous>, transform_indices = @transform_6, window_bounds = array<i64: 4, 4>}, {pipeline_mode = #tpu.pipeline_mode<synchronous>, transform_indices = @transform_7, window_bounds = array<i64: 4, 1>}, {pipeline_mode = #tpu.pipeline_mode<synchronous>, transform_indices = @transform_8, window_bounds = array<i64: 4, 4>}, {pipeline_mode = #tpu.pipeline_mode<synchronous>, transform_indices = @transform_9, window_bounds = array<i64: 4, 1>}, {pipeline_mode = #tpu.pipeline_mode<synchronous>, transform_indices = @transform_10, window_bounds = array<i64: 4, 4>}, {pipeline_mode = #tpu.pipeline_mode<synchronous>, transform_indices = @transform_11, window_bounds = array<i64: 4, 1>}, {pipeline_mode = #tpu.pipeline_mode<synchronous>, transform_indices = @transform_12, window_bounds = array<i64: 64, 4>}, {transform_indices = @transform_13, window_bounds = array<i64: 1, 4, 256>}, {transform_indices = @transform_14, window_bounds = array<i64: 1, 4, 256>}, {transform_indices = @transform_15, window_bounds = array<i64: 1, 16, 256>}]} {
    %c0 = arith.constant 0 : index
    %c0_0 = arith.constant 0 : index
    %c0_1 = arith.constant 0 : index
    %0 = vector.load %arg2[%c0, %c0_0, %c0_1] : memref<1x4x256xf32, #tpu.memory_space<vmem>>, vector<1x4x256xf32>
    %1 = vector.shape_cast %0 : vector<1x4x256xf32> to vector<4x256xf32>
    %c0_2 = arith.constant 0 : index
    %c0_3 = arith.constant 0 : index
    %c0_4 = arith.constant 0 : index
    %2 = vector.load %arg3[%c0_2, %c0_3, %c0_4] : memref<1x4x256xf32, #tpu.memory_space<vmem>>, vector<1x4x256xf32>
    %3 = vector.shape_cast %2 : vector<1x4x256xf32> to vector<4x256xf32>
    %c0_5 = arith.constant 0 : index
    %c0_6 = arith.constant 0 : index
    %4 = vector.load %arg4[%c0_5, %c0_6] : memref<1x256xf32, #tpu.memory_space<vmem>>, vector<1x256xf32>
    %c0_7 = arith.constant 0 : index
    %c0_8 = arith.constant 0 : index
    %5 = vector.load %arg6[%c0_7, %c0_8] : memref<4x4xf32, #tpu.memory_space<vmem>>, vector<4x4xf32>
    %c0_9 = arith.constant 0 : index
    %c0_10 = arith.constant 0 : index
    %6 = vector.load %arg7[%c0_9, %c0_10] : memref<4x1xf32, #tpu.memory_space<vmem>>, vector<4x1xf32>
    %7 = vector.extract_strided_slice %5 {offsets = [0, 0], sizes = [4, 1], strides = [1, 1]} : vector<4x4xf32> to vector<4x1xf32>
    %8 = vector.extract_strided_slice %1 {offsets = [0, 0], sizes = [1, 256], strides = [1, 1]} : vector<4x256xf32> to vector<1x256xf32>
    %9 = vector.broadcast %7 : vector<4x1xf32> to vector<4x256xf32>
    %10 = vector.broadcast %8 : vector<1x256xf32> to vector<4x256xf32>
    %11 = arith.mulf %9, %10 : vector<4x256xf32>
    %12 = vector.extract_strided_slice %5 {offsets = [0, 1], sizes = [4, 1], strides = [1, 1]} : vector<4x4xf32> to vector<4x1xf32>
    %13 = vector.extract_strided_slice %1 {offsets = [1, 0], sizes = [1, 256], strides = [1, 1]} : vector<4x256xf32> to vector<1x256xf32>
    %14 = vector.broadcast %12 : vector<4x1xf32> to vector<4x256xf32>
    %15 = vector.broadcast %13 : vector<1x256xf32> to vector<4x256xf32>
    %16 = arith.mulf %14, %15 : vector<4x256xf32>
    %17 = arith.addf %11, %16 : vector<4x256xf32>
    %18 = vector.extract_strided_slice %5 {offsets = [0, 2], sizes = [4, 1], strides = [1, 1]} : vector<4x4xf32> to vector<4x1xf32>
    %19 = vector.extract_strided_slice %1 {offsets = [2, 0], sizes = [1, 256], strides = [1, 1]} : vector<4x256xf32> to vector<1x256xf32>
    %20 = vector.broadcast %18 : vector<4x1xf32> to vector<4x256xf32>
    %21 = vector.broadcast %19 : vector<1x256xf32> to vector<4x256xf32>
    %22 = arith.mulf %20, %21 : vector<4x256xf32>
    %23 = arith.addf %17, %22 : vector<4x256xf32>
    %24 = vector.extract_strided_slice %5 {offsets = [0, 3], sizes = [4, 1], strides = [1, 1]} : vector<4x4xf32> to vector<4x1xf32>
    %25 = vector.extract_strided_slice %1 {offsets = [3, 0], sizes = [1, 256], strides = [1, 1]} : vector<4x256xf32> to vector<1x256xf32>
    %26 = vector.broadcast %24 : vector<4x1xf32> to vector<4x256xf32>
    %27 = vector.broadcast %25 : vector<1x256xf32> to vector<4x256xf32>
    %28 = arith.mulf %26, %27 : vector<4x256xf32>
    %29 = arith.addf %23, %28 : vector<4x256xf32>
    %30 = vector.broadcast %6 : vector<4x1xf32> to vector<4x256xf32>
    %31 = arith.addf %29, %30 : vector<4x256xf32>
    %cst = arith.constant 0.000000e+00 : f32
    %32 = vector.broadcast %cst : f32 to vector<4x256xf32>
    %33 = arith.cmpf ogt, %31, %32 : vector<4x256xf32>
    %cst_11 = arith.constant 1.000000e-01 : f32
    %34 = vector.broadcast %cst_11 : f32 to vector<4x256xf32>
    %35 = arith.mulf %34, %31 : vector<4x256xf32>
    %36 = arith.select %33, %31, %35 : vector<4x256xi1>, vector<4x256xf32>
    %c0_12 = arith.constant 0 : index
    %c0_13 = arith.constant 0 : index
    %37 = vector.load %arg8[%c0_12, %c0_13] : memref<4x4xf32, #tpu.memory_space<vmem>>, vector<4x4xf32>
    %c0_14 = arith.constant 0 : index
    %c0_15 = arith.constant 0 : index
    %38 = vector.load %arg9[%c0_14, %c0_15] : memref<4x1xf32, #tpu.memory_space<vmem>>, vector<4x1xf32>
    %39 = vector.extract_strided_slice %37 {offsets = [0, 0], sizes = [4, 1], strides = [1, 1]} : vector<4x4xf32> to vector<4x1xf32>
    %40 = vector.extract_strided_slice %36 {offsets = [0, 0], sizes = [1, 256], strides = [1, 1]} : vector<4x256xf32> to vector<1x256xf32>
    %41 = vector.broadcast %39 : vector<4x1xf32> to vector<4x256xf32>
    %42 = vector.broadcast %40 : vector<1x256xf32> to vector<4x256xf32>
    %43 = arith.mulf %41, %42 : vector<4x256xf32>
    %44 = vector.extract_strided_slice %37 {offsets = [0, 1], sizes = [4, 1], strides = [1, 1]} : vector<4x4xf32> to vector<4x1xf32>
    %45 = vector.extract_strided_slice %36 {offsets = [1, 0], sizes = [1, 256], strides = [1, 1]} : vector<4x256xf32> to vector<1x256xf32>
    %46 = vector.broadcast %44 : vector<4x1xf32> to vector<4x256xf32>
    %47 = vector.broadcast %45 : vector<1x256xf32> to vector<4x256xf32>
    %48 = arith.mulf %46, %47 : vector<4x256xf32>
    %49 = arith.addf %43, %48 : vector<4x256xf32>
    %50 = vector.extract_strided_slice %37 {offsets = [0, 2], sizes = [4, 1], strides = [1, 1]} : vector<4x4xf32> to vector<4x1xf32>
    %51 = vector.extract_strided_slice %36 {offsets = [2, 0], sizes = [1, 256], strides = [1, 1]} : vector<4x256xf32> to vector<1x256xf32>
    %52 = vector.broadcast %50 : vector<4x1xf32> to vector<4x256xf32>
    %53 = vector.broadcast %51 : vector<1x256xf32> to vector<4x256xf32>
    %54 = arith.mulf %52, %53 : vector<4x256xf32>
    %55 = arith.addf %49, %54 : vector<4x256xf32>
    %56 = vector.extract_strided_slice %37 {offsets = [0, 3], sizes = [4, 1], strides = [1, 1]} : vector<4x4xf32> to vector<4x1xf32>
    %57 = vector.extract_strided_slice %36 {offsets = [3, 0], sizes = [1, 256], strides = [1, 1]} : vector<4x256xf32> to vector<1x256xf32>
    %58 = vector.broadcast %56 : vector<4x1xf32> to vector<4x256xf32>
    %59 = vector.broadcast %57 : vector<1x256xf32> to vector<4x256xf32>
    %60 = arith.mulf %58, %59 : vector<4x256xf32>
    %61 = arith.addf %55, %60 : vector<4x256xf32>
    %62 = vector.broadcast %38 : vector<4x1xf32> to vector<4x256xf32>
    %63 = arith.addf %61, %62 : vector<4x256xf32>
    %64 = vector.broadcast %4 : vector<1x256xf32> to vector<4x256xf32>
    %65 = arith.mulf %63, %64 : vector<4x256xf32>
    %c0_16 = arith.constant 0 : index
    %c0_17 = arith.constant 0 : index
    %66 = vector.load %arg10[%c0_16, %c0_17] : memref<4x4xf32, #tpu.memory_space<vmem>>, vector<4x4xf32>
    %c0_18 = arith.constant 0 : index
    %c0_19 = arith.constant 0 : index
    %67 = vector.load %arg11[%c0_18, %c0_19] : memref<4x1xf32, #tpu.memory_space<vmem>>, vector<4x1xf32>
    %68 = vector.extract_strided_slice %66 {offsets = [0, 0], sizes = [4, 1], strides = [1, 1]} : vector<4x4xf32> to vector<4x1xf32>
    %69 = vector.extract_strided_slice %3 {offsets = [0, 0], sizes = [1, 256], strides = [1, 1]} : vector<4x256xf32> to vector<1x256xf32>
    %70 = vector.broadcast %68 : vector<4x1xf32> to vector<4x256xf32>
    %71 = vector.broadcast %69 : vector<1x256xf32> to vector<4x256xf32>
    %72 = arith.mulf %70, %71 : vector<4x256xf32>
    %73 = vector.extract_strided_slice %66 {offsets = [0, 1], sizes = [4, 1], strides = [1, 1]} : vector<4x4xf32> to vector<4x1xf32>
    %74 = vector.extract_strided_slice %3 {offsets = [1, 0], sizes = [1, 256], strides = [1, 1]} : vector<4x256xf32> to vector<1x256xf32>
    %75 = vector.broadcast %73 : vector<4x1xf32> to vector<4x256xf32>
    %76 = vector.broadcast %74 : vector<1x256xf32> to vector<4x256xf32>
    %77 = arith.mulf %75, %76 : vector<4x256xf32>
    %78 = arith.addf %72, %77 : vector<4x256xf32>
    %79 = vector.extract_strided_slice %66 {offsets = [0, 2], sizes = [4, 1], strides = [1, 1]} : vector<4x4xf32> to vector<4x1xf32>
    %80 = vector.extract_strided_slice %3 {offsets = [2, 0], sizes = [1, 256], strides = [1, 1]} : vector<4x256xf32> to vector<1x256xf32>
    %81 = vector.broadcast %79 : vector<4x1xf32> to vector<4x256xf32>
    %82 = vector.broadcast %80 : vector<1x256xf32> to vector<4x256xf32>
    %83 = arith.mulf %81, %82 : vector<4x256xf32>
    %84 = arith.addf %78, %83 : vector<4x256xf32>
    %85 = vector.extract_strided_slice %66 {offsets = [0, 3], sizes = [4, 1], strides = [1, 1]} : vector<4x4xf32> to vector<4x1xf32>
    %86 = vector.extract_strided_slice %3 {offsets = [3, 0], sizes = [1, 256], strides = [1, 1]} : vector<4x256xf32> to vector<1x256xf32>
    %87 = vector.broadcast %85 : vector<4x1xf32> to vector<4x256xf32>
    %88 = vector.broadcast %86 : vector<1x256xf32> to vector<4x256xf32>
    %89 = arith.mulf %87, %88 : vector<4x256xf32>
    %90 = arith.addf %84, %89 : vector<4x256xf32>
    %91 = vector.broadcast %67 : vector<4x1xf32> to vector<4x256xf32>
    %92 = arith.addf %90, %91 : vector<4x256xf32>
    %cst_20 = arith.constant 0.000000e+00 : f32
    %93 = vector.broadcast %cst_20 : f32 to vector<4x256xf32>
    %94 = arith.cmpf ogt, %92, %93 : vector<4x256xf32>
    %cst_21 = arith.constant 1.000000e-01 : f32
    %95 = vector.broadcast %cst_21 : f32 to vector<4x256xf32>
    %96 = arith.mulf %95, %92 : vector<4x256xf32>
    %97 = arith.select %94, %92, %96 : vector<4x256xi1>, vector<4x256xf32>
    %c0_22 = arith.constant 0 : index
    %c0_23 = arith.constant 0 : index
    %98 = vector.load %arg12[%c0_22, %c0_23] : memref<4x4xf32, #tpu.memory_space<vmem>>, vector<4x4xf32>
    %c0_24 = arith.constant 0 : index
    %c0_25 = arith.constant 0 : index
    %99 = vector.load %arg13[%c0_24, %c0_25] : memref<4x1xf32, #tpu.memory_space<vmem>>, vector<4x1xf32>
    %100 = vector.extract_strided_slice %98 {offsets = [0, 0], sizes = [4, 1], strides = [1, 1]} : vector<4x4xf32> to vector<4x1xf32>
    %101 = vector.extract_strided_slice %97 {offsets = [0, 0], sizes = [1, 256], strides = [1, 1]} : vector<4x256xf32> to vector<1x256xf32>
    %102 = vector.broadcast %100 : vector<4x1xf32> to vector<4x256xf32>
    %103 = vector.broadcast %101 : vector<1x256xf32> to vector<4x256xf32>
    %104 = arith.mulf %102, %103 : vector<4x256xf32>
    %105 = vector.extract_strided_slice %98 {offsets = [0, 1], sizes = [4, 1], strides = [1, 1]} : vector<4x4xf32> to vector<4x1xf32>
    %106 = vector.extract_strided_slice %97 {offsets = [1, 0], sizes = [1, 256], strides = [1, 1]} : vector<4x256xf32> to vector<1x256xf32>
    %107 = vector.broadcast %105 : vector<4x1xf32> to vector<4x256xf32>
    %108 = vector.broadcast %106 : vector<1x256xf32> to vector<4x256xf32>
    %109 = arith.mulf %107, %108 : vector<4x256xf32>
    %110 = arith.addf %104, %109 : vector<4x256xf32>
    %111 = vector.extract_strided_slice %98 {offsets = [0, 2], sizes = [4, 1], strides = [1, 1]} : vector<4x4xf32> to vector<4x1xf32>
    %112 = vector.extract_strided_slice %97 {offsets = [2, 0], sizes = [1, 256], strides = [1, 1]} : vector<4x256xf32> to vector<1x256xf32>
    %113 = vector.broadcast %111 : vector<4x1xf32> to vector<4x256xf32>
    %114 = vector.broadcast %112 : vector<1x256xf32> to vector<4x256xf32>
    %115 = arith.mulf %113, %114 : vector<4x256xf32>
    %116 = arith.addf %110, %115 : vector<4x256xf32>
    %117 = vector.extract_strided_slice %98 {offsets = [0, 3], sizes = [4, 1], strides = [1, 1]} : vector<4x4xf32> to vector<4x1xf32>
    %118 = vector.extract_strided_slice %97 {offsets = [3, 0], sizes = [1, 256], strides = [1, 1]} : vector<4x256xf32> to vector<1x256xf32>
    %119 = vector.broadcast %117 : vector<4x1xf32> to vector<4x256xf32>
    %120 = vector.broadcast %118 : vector<1x256xf32> to vector<4x256xf32>
    %121 = arith.mulf %119, %120 : vector<4x256xf32>
    %122 = arith.addf %116, %121 : vector<4x256xf32>
    %123 = vector.broadcast %99 : vector<4x1xf32> to vector<4x256xf32>
    %124 = arith.addf %122, %123 : vector<4x256xf32>
    %125 = vector.broadcast %4 : vector<1x256xf32> to vector<4x256xf32>
    %126 = arith.mulf %124, %125 : vector<4x256xf32>
    %127 = math.cos %126 : vector<4x256xf32>
    %128 = arith.mulf %65, %127 : vector<4x256xf32>
    %c0_26 = arith.constant 0 : index
    %c0_27 = arith.constant 0 : index
    %c0_28 = arith.constant 0 : index
    %129 = vector.load %arg15[%c0_26, %c0_27, %c0_28] : memref<1x4x256xf32, #tpu.memory_space<vmem>>, vector<1x4x256xf32>
    %130 = vector.shape_cast %129 : vector<1x4x256xf32> to vector<4x256xf32>
    %131 = vector.shape_cast %128 : vector<4x256xf32> to vector<1x4x256xf32>
    tpu.vector_store %arg15[%c0_26, %c0_27, %c0_28], %131 {strides = array<i32>} : memref<1x4x256xf32, #tpu.memory_space<vmem>>, vector<1x4x256xf32>,
    %132 = math.sin %126 : vector<4x256xf32>
    %133 = arith.mulf %65, %132 : vector<4x256xf32>
    %c0_29 = arith.constant 0 : index
    %c0_30 = arith.constant 0 : index
    %c0_31 = arith.constant 0 : index
    %134 = vector.load %arg16[%c0_29, %c0_30, %c0_31] : memref<1x4x256xf32, #tpu.memory_space<vmem>>, vector<1x4x256xf32>
    %135 = vector.shape_cast %134 : vector<1x4x256xf32> to vector<4x256xf32>
    %136 = vector.shape_cast %133 : vector<4x256xf32> to vector<1x4x256xf32>
    tpu.vector_store %arg16[%c0_29, %c0_30, %c0_31], %136 {strides = array<i32>} : memref<1x4x256xf32, #tpu.memory_space<vmem>>, vector<1x4x256xf32>,
    %c0_32 = arith.constant 0 : index
    %c0_33 = arith.constant 0 : index
    %c0_34 = arith.constant 0 : index
    %137 = vector.load %arg5[%c0_32, %c0_33, %c0_34] : memref<1x36x256xf32, #tpu.memory_space<vmem>>, vector<1x36x256xf32>
    %138 = vector.shape_cast %137 : vector<1x36x256xf32> to vector<36x256xf32>
    %c0_35 = arith.constant 0 : index
    %c0_36 = arith.constant 0 : index
    %139 = vector.load %arg14[%c0_35, %c0_36] : memref<64x4xf32, #tpu.memory_space<vmem>>, vector<64x4xf32>
    %140 = vector.extract_strided_slice %139 {offsets = [0, 0], sizes = [4, 4], strides = [1, 1]} : vector<64x4xf32> to vector<4x4xf32>
    %141 = vector.extract_strided_slice %138 {offsets = [16, 0], sizes = [4, 256], strides = [1, 1]} : vector<36x256xf32> to vector<4x256xf32>
    %142 = vector.extract_strided_slice %140 {offsets = [0, 0], sizes = [4, 1], strides = [1, 1]} : vector<4x4xf32> to vector<4x1xf32>
    %143 = vector.extract_strided_slice %141 {offsets = [0, 0], sizes = [1, 256], strides = [1, 1]} : vector<4x256xf32> to vector<1x256xf32>
    %144 = vector.broadcast %142 : vector<4x1xf32> to vector<4x256xf32>
    %145 = vector.broadcast %143 : vector<1x256xf32> to vector<4x256xf32>
    %146 = arith.mulf %144, %145 : vector<4x256xf32>
    %147 = vector.extract_strided_slice %140 {offsets = [0, 1], sizes = [4, 1], strides = [1, 1]} : vector<4x4xf32> to vector<4x1xf32>
    %148 = vector.extract_strided_slice %141 {offsets = [1, 0], sizes = [1, 256], strides = [1, 1]} : vector<4x256xf32> to vector<1x256xf32>
    %149 = vector.broadcast %147 : vector<4x1xf32> to vector<4x256xf32>
    %150 = vector.broadcast %148 : vector<1x256xf32> to vector<4x256xf32>
    %151 = arith.mulf %149, %150 : vector<4x256xf32>
    %152 = arith.addf %146, %151 : vector<4x256xf32>
    %153 = vector.extract_strided_slice %140 {offsets = [0, 2], sizes = [4, 1], strides = [1, 1]} : vector<4x4xf32> to vector<4x1xf32>
    %154 = vector.extract_strided_slice %141 {offsets = [2, 0], sizes = [1, 256], strides = [1, 1]} : vector<4x256xf32> to vector<1x256xf32>
    %155 = vector.broadcast %153 : vector<4x1xf32> to vector<4x256xf32>
    %156 = vector.broadcast %154 : vector<1x256xf32> to vector<4x256xf32>
    %157 = arith.mulf %155, %156 : vector<4x256xf32>
    %158 = arith.addf %152, %157 : vector<4x256xf32>
    %159 = vector.extract_strided_slice %140 {offsets = [0, 3], sizes = [4, 1], strides = [1, 1]} : vector<4x4xf32> to vector<4x1xf32>
    %160 = vector.extract_strided_slice %141 {offsets = [3, 0], sizes = [1, 256], strides = [1, 1]} : vector<4x256xf32> to vector<1x256xf32>
    %161 = vector.broadcast %159 : vector<4x1xf32> to vector<4x256xf32>
    %162 = vector.broadcast %160 : vector<1x256xf32> to vector<4x256xf32>
    %163 = arith.mulf %161, %162 : vector<4x256xf32>
    %164 = arith.addf %158, %163 : vector<4x256xf32>
    %165 = vector.extract_strided_slice %139 {offsets = [4, 0], sizes = [4, 4], strides = [1, 1]} : vector<64x4xf32> to vector<4x4xf32>
    %166 = vector.extract_strided_slice %138 {offsets = [12, 0], sizes = [4, 256], strides = [1, 1]} : vector<36x256xf32> to vector<4x256xf32>
    %167 = vector.extract_strided_slice %165 {offsets = [0, 0], sizes = [4, 1], strides = [1, 1]} : vector<4x4xf32> to vector<4x1xf32>
    %168 = vector.extract_strided_slice %166 {offsets = [0, 0], sizes = [1, 256], strides = [1, 1]} : vector<4x256xf32> to vector<1x256xf32>
    %169 = vector.broadcast %167 : vector<4x1xf32> to vector<4x256xf32>
    %170 = vector.broadcast %168 : vector<1x256xf32> to vector<4x256xf32>
    %171 = arith.mulf %169, %170 : vector<4x256xf32>
    %172 = vector.extract_strided_slice %165 {offsets = [0, 1], sizes = [4, 1], strides = [1, 1]} : vector<4x4xf32> to vector<4x1xf32>
    %173 = vector.extract_strided_slice %166 {offsets = [1, 0], sizes = [1, 256], strides = [1, 1]} : vector<4x256xf32> to vector<1x256xf32>
    %174 = vector.broadcast %172 : vector<4x1xf32> to vector<4x256xf32>
    %175 = vector.broadcast %173 : vector<1x256xf32> to vector<4x256xf32>
    %176 = arith.mulf %174, %175 : vector<4x256xf32>
    %177 = arith.addf %171, %176 : vector<4x256xf32>
    %178 = vector.extract_strided_slice %165 {offsets = [0, 2], sizes = [4, 1], strides = [1, 1]} : vector<4x4xf32> to vector<4x1xf32>
    %179 = vector.extract_strided_slice %166 {offsets = [2, 0], sizes = [1, 256], strides = [1, 1]} : vector<4x256xf32> to vector<1x256xf32>
    %180 = vector.broadcast %178 : vector<4x1xf32> to vector<4x256xf32>
    %181 = vector.broadcast %179 : vector<1x256xf32> to vector<4x256xf32>
    %182 = arith.mulf %180, %181 : vector<4x256xf32>
    %183 = arith.addf %177, %182 : vector<4x256xf32>
    %184 = vector.extract_strided_slice %165 {offsets = [0, 3], sizes = [4, 1], strides = [1, 1]} : vector<4x4xf32> to vector<4x1xf32>
    %185 = vector.extract_strided_slice %166 {offsets = [3, 0], sizes = [1, 256], strides = [1, 1]} : vector<4x256xf32> to vector<1x256xf32>
    %186 = vector.broadcast %184 : vector<4x1xf32> to vector<4x256xf32>
    %187 = vector.broadcast %185 : vector<1x256xf32> to vector<4x256xf32>
    %188 = arith.mulf %186, %187 : vector<4x256xf32>
    %189 = arith.addf %183, %188 : vector<4x256xf32>
    %190 = arith.addf %164, %189 : vector<4x256xf32>
    %191 = vector.extract_strided_slice %139 {offsets = [8, 0], sizes = [4, 4], strides = [1, 1]} : vector<64x4xf32> to vector<4x4xf32>
    %192 = vector.extract_strided_slice %138 {offsets = [4, 0], sizes = [4, 256], strides = [1, 1]} : vector<36x256xf32> to vector<4x256xf32>
    %193 = vector.extract_strided_slice %191 {offsets = [0, 0], sizes = [4, 1], strides = [1, 1]} : vector<4x4xf32> to vector<4x1xf32>
    %194 = vector.extract_strided_slice %192 {offsets = [0, 0], sizes = [1, 256], strides = [1, 1]} : vector<4x256xf32> to vector<1x256xf32>
    %195 = vector.broadcast %193 : vector<4x1xf32> to vector<4x256xf32>
    %196 = vector.broadcast %194 : vector<1x256xf32> to vector<4x256xf32>
    %197 = arith.mulf %195, %196 : vector<4x256xf32>
    %198 = vector.extract_strided_slice %191 {offsets = [0, 1], sizes = [4, 1], strides = [1, 1]} : vector<4x4xf32> to vector<4x1xf32>
    %199 = vector.extract_strided_slice %192 {offsets = [1, 0], sizes = [1, 256], strides = [1, 1]} : vector<4x256xf32> to vector<1x256xf32>
    %200 = vector.broadcast %198 : vector<4x1xf32> to vector<4x256xf32>
    %201 = vector.broadcast %199 : vector<1x256xf32> to vector<4x256xf32>
    %202 = arith.mulf %200, %201 : vector<4x256xf32>
    %203 = arith.addf %197, %202 : vector<4x256xf32>
    %204 = vector.extract_strided_slice %191 {offsets = [0, 2], sizes = [4, 1], strides = [1, 1]} : vector<4x4xf32> to vector<4x1xf32>
    %205 = vector.extract_strided_slice %192 {offsets = [2, 0], sizes = [1, 256], strides = [1, 1]} : vector<4x256xf32> to vector<1x256xf32>
    %206 = vector.broadcast %204 : vector<4x1xf32> to vector<4x256xf32>
    %207 = vector.broadcast %205 : vector<1x256xf32> to vector<4x256xf32>
    %208 = arith.mulf %206, %207 : vector<4x256xf32>
    %209 = arith.addf %203, %208 : vector<4x256xf32>
    %210 = vector.extract_strided_slice %191 {offsets = [0, 3], sizes = [4, 1], strides = [1, 1]} : vector<4x4xf32> to vector<4x1xf32>
    %211 = vector.extract_strided_slice %192 {offsets = [3, 0], sizes = [1, 256], strides = [1, 1]} : vector<4x256xf32> to vector<1x256xf32>
    %212 = vector.broadcast %210 : vector<4x1xf32> to vector<4x256xf32>
    %213 = vector.broadcast %211 : vector<1x256xf32> to vector<4x256xf32>
    %214 = arith.mulf %212, %213 : vector<4x256xf32>
    %215 = arith.addf %209, %214 : vector<4x256xf32>
    %216 = arith.addf %190, %215 : vector<4x256xf32>
    %217 = vector.extract_strided_slice %139 {offsets = [12, 0], sizes = [4, 4], strides = [1, 1]} : vector<64x4xf32> to vector<4x4xf32>
    %218 = vector.extract_strided_slice %138 {offsets = [0, 0], sizes = [4, 256], strides = [1, 1]} : vector<36x256xf32> to vector<4x256xf32>
    %219 = vector.extract_strided_slice %217 {offsets = [0, 0], sizes = [4, 1], strides = [1, 1]} : vector<4x4xf32> to vector<4x1xf32>
    %220 = vector.extract_strided_slice %218 {offsets = [0, 0], sizes = [1, 256], strides = [1, 1]} : vector<4x256xf32> to vector<1x256xf32>
    %221 = vector.broadcast %219 : vector<4x1xf32> to vector<4x256xf32>
    %222 = vector.broadcast %220 : vector<1x256xf32> to vector<4x256xf32>
    %223 = arith.mulf %221, %222 : vector<4x256xf32>
    %224 = vector.extract_strided_slice %217 {offsets = [0, 1], sizes = [4, 1], strides = [1, 1]} : vector<4x4xf32> to vector<4x1xf32>
    %225 = vector.extract_strided_slice %218 {offsets = [1, 0], sizes = [1, 256], strides = [1, 1]} : vector<4x256xf32> to vector<1x256xf32>
    %226 = vector.broadcast %224 : vector<4x1xf32> to vector<4x256xf32>
    %227 = vector.broadcast %225 : vector<1x256xf32> to vector<4x256xf32>
    %228 = arith.mulf %226, %227 : vector<4x256xf32>
    %229 = arith.addf %223, %228 : vector<4x256xf32>
    %230 = vector.extract_strided_slice %217 {offsets = [0, 2], sizes = [4, 1], strides = [1, 1]} : vector<4x4xf32> to vector<4x1xf32>
    %231 = vector.extract_strided_slice %218 {offsets = [2, 0], sizes = [1, 256], strides = [1, 1]} : vector<4x256xf32> to vector<1x256xf32>
    %232 = vector.broadcast %230 : vector<4x1xf32> to vector<4x256xf32>
    %233 = vector.broadcast %231 : vector<1x256xf32> to vector<4x256xf32>
    %234 = arith.mulf %232, %233 : vector<4x256xf32>
    %235 = arith.addf %229, %234 : vector<4x256xf32>
    %236 = vector.extract_strided_slice %217 {offsets = [0, 3], sizes = [4, 1], strides = [1, 1]} : vector<4x4xf32> to vector<4x1xf32>
    %237 = vector.extract_strided_slice %218 {offsets = [3, 0], sizes = [1, 256], strides = [1, 1]} : vector<4x256xf32> to vector<1x256xf32>
    %238 = vector.broadcast %236 : vector<4x1xf32> to vector<4x256xf32>
    %239 = vector.broadcast %237 : vector<1x256xf32> to vector<4x256xf32>
    %240 = arith.mulf %238, %239 : vector<4x256xf32>
    %241 = arith.addf %235, %240 : vector<4x256xf32>
    %242 = arith.addf %216, %241 : vector<4x256xf32>
    %c0_37 = arith.constant 0 : index
    %c0_38 = arith.constant 0 : index
    %c0_39 = arith.constant 0 : index
    %243 = vector.load %arg17[%c0_37, %c0_38, %c0_39] : memref<1x16x256xf32, #tpu.memory_space<vmem>>, vector<1x4x256xf32>
    %244 = vector.shape_cast %243 : vector<1x4x256xf32> to vector<4x256xf32>
    %245 = vector.shape_cast %242 : vector<4x256xf32> to vector<1x4x256xf32>
    tpu.vector_store %arg17[%c0_37, %c0_38, %c0_39], %245 {strides = array<i32>} : memref<1x16x256xf32, #tpu.memory_space<vmem>>, vector<1x4x256xf32>,
    %246 = vector.extract_strided_slice %139 {offsets = [16, 0], sizes = [4, 4], strides = [1, 1]} : vector<64x4xf32> to vector<4x4xf32>
    %247 = vector.extract_strided_slice %138 {offsets = [16, 0], sizes = [4, 256], strides = [1, 1]} : vector<36x256xf32> to vector<4x256xf32>
    %248 = vector.extract_strided_slice %246 {offsets = [0, 0], sizes = [4, 1], strides = [1, 1]} : vector<4x4xf32> to vector<4x1xf32>
    %249 = vector.extract_strided_slice %247 {offsets = [0, 0], sizes = [1, 256], strides = [1, 1]} : vector<4x256xf32> to vector<1x256xf32>
    %250 = vector.broadcast %248 : vector<4x1xf32> to vector<4x256xf32>
    %251 = vector.broadcast %249 : vector<1x256xf32> to vector<4x256xf32>
    %252 = arith.mulf %250, %251 : vector<4x256xf32>
    %253 = vector.extract_strided_slice %246 {offsets = [0, 1], sizes = [4, 1], strides = [1, 1]} : vector<4x4xf32> to vector<4x1xf32>
    %254 = vector.extract_strided_slice %247 {offsets = [1, 0], sizes = [1, 256], strides = [1, 1]} : vector<4x256xf32> to vector<1x256xf32>
    %255 = vector.broadcast %253 : vector<4x1xf32> to vector<4x256xf32>
    %256 = vector.broadcast %254 : vector<1x256xf32> to vector<4x256xf32>
    %257 = arith.mulf %255, %256 : vector<4x256xf32>
    %258 = arith.addf %252, %257 : vector<4x256xf32>
    %259 = vector.extract_strided_slice %246 {offsets = [0, 2], sizes = [4, 1], strides = [1, 1]} : vector<4x4xf32> to vector<4x1xf32>
    %260 = vector.extract_strided_slice %247 {offsets = [2, 0], sizes = [1, 256], strides = [1, 1]} : vector<4x256xf32> to vector<1x256xf32>
    %261 = vector.broadcast %259 : vector<4x1xf32> to vector<4x256xf32>
    %262 = vector.broadcast %260 : vector<1x256xf32> to vector<4x256xf32>
    %263 = arith.mulf %261, %262 : vector<4x256xf32>
    %264 = arith.addf %258, %263 : vector<4x256xf32>
    %265 = vector.extract_strided_slice %246 {offsets = [0, 3], sizes = [4, 1], strides = [1, 1]} : vector<4x4xf32> to vector<4x1xf32>
    %266 = vector.extract_strided_slice %247 {offsets = [3, 0], sizes = [1, 256], strides = [1, 1]} : vector<4x256xf32> to vector<1x256xf32>
    %267 = vector.broadcast %265 : vector<4x1xf32> to vector<4x256xf32>
    %268 = vector.broadcast %266 : vector<1x256xf32> to vector<4x256xf32>
    %269 = arith.mulf %267, %268 : vector<4x256xf32>
    %270 = arith.addf %264, %269 : vector<4x256xf32>
    %271 = vector.extract_strided_slice %139 {offsets = [20, 0], sizes = [4, 4], strides = [1, 1]} : vector<64x4xf32> to vector<4x4xf32>
    %272 = vector.extract_strided_slice %138 {offsets = [20, 0], sizes = [4, 256], strides = [1, 1]} : vector<36x256xf32> to vector<4x256xf32>
    %273 = vector.extract_strided_slice %271 {offsets = [0, 0], sizes = [4, 1], strides = [1, 1]} : vector<4x4xf32> to vector<4x1xf32>
    %274 = vector.extract_strided_slice %272 {offsets = [0, 0], sizes = [1, 256], strides = [1, 1]} : vector<4x256xf32> to vector<1x256xf32>
    %275 = vector.broadcast %273 : vector<4x1xf32> to vector<4x256xf32>
    %276 = vector.broadcast %274 : vector<1x256xf32> to vector<4x256xf32>
    %277 = arith.mulf %275, %276 : vector<4x256xf32>
    %278 = vector.extract_strided_slice %271 {offsets = [0, 1], sizes = [4, 1], strides = [1, 1]} : vector<4x4xf32> to vector<4x1xf32>
    %279 = vector.extract_strided_slice %272 {offsets = [1, 0], sizes = [1, 256], strides = [1, 1]} : vector<4x256xf32> to vector<1x256xf32>
    %280 = vector.broadcast %278 : vector<4x1xf32> to vector<4x256xf32>
    %281 = vector.broadcast %279 : vector<1x256xf32> to vector<4x256xf32>
    %282 = arith.mulf %280, %281 : vector<4x256xf32>
    %283 = arith.addf %277, %282 : vector<4x256xf32>
    %284 = vector.extract_strided_slice %271 {offsets = [0, 2], sizes = [4, 1], strides = [1, 1]} : vector<4x4xf32> to vector<4x1xf32>
    %285 = vector.extract_strided_slice %272 {offsets = [2, 0], sizes = [1, 256], strides = [1, 1]} : vector<4x256xf32> to vector<1x256xf32>
    %286 = vector.broadcast %284 : vector<4x1xf32> to vector<4x256xf32>
    %287 = vector.broadcast %285 : vector<1x256xf32> to vector<4x256xf32>
    %288 = arith.mulf %286, %287 : vector<4x256xf32>
    %289 = arith.addf %283, %288 : vector<4x256xf32>
    %290 = vector.extract_strided_slice %271 {offsets = [0, 3], sizes = [4, 1], strides = [1, 1]} : vector<4x4xf32> to vector<4x1xf32>
    %291 = vector.extract_strided_slice %272 {offsets = [3, 0], sizes = [1, 256], strides = [1, 1]} : vector<4x256xf32> to vector<1x256xf32>
    %292 = vector.broadcast %290 : vector<4x1xf32> to vector<4x256xf32>
    %293 = vector.broadcast %291 : vector<1x256xf32> to vector<4x256xf32>
    %294 = arith.mulf %292, %293 : vector<4x256xf32>
    %295 = arith.addf %289, %294 : vector<4x256xf32>
    %296 = arith.addf %270, %295 : vector<4x256xf32>
    %297 = vector.extract_strided_slice %139 {offsets = [24, 0], sizes = [4, 4], strides = [1, 1]} : vector<64x4xf32> to vector<4x4xf32>
    %298 = vector.extract_strided_slice %138 {offsets = [4, 0], sizes = [4, 256], strides = [1, 1]} : vector<36x256xf32> to vector<4x256xf32>
    %299 = vector.extract_strided_slice %297 {offsets = [0, 0], sizes = [4, 1], strides = [1, 1]} : vector<4x4xf32> to vector<4x1xf32>
    %300 = vector.extract_strided_slice %298 {offsets = [0, 0], sizes = [1, 256], strides = [1, 1]} : vector<4x256xf32> to vector<1x256xf32>
    %301 = vector.broadcast %299 : vector<4x1xf32> to vector<4x256xf32>
    %302 = vector.broadcast %300 : vector<1x256xf32> to vector<4x256xf32>
    %303 = arith.mulf %301, %302 : vector<4x256xf32>
    %304 = vector.extract_strided_slice %297 {offsets = [0, 1], sizes = [4, 1], strides = [1, 1]} : vector<4x4xf32> to vector<4x1xf32>
    %305 = vector.extract_strided_slice %298 {offsets = [1, 0], sizes = [1, 256], strides = [1, 1]} : vector<4x256xf32> to vector<1x256xf32>
    %306 = vector.broadcast %304 : vector<4x1xf32> to vector<4x256xf32>
    %307 = vector.broadcast %305 : vector<1x256xf32> to vector<4x256xf32>
    %308 = arith.mulf %306, %307 : vector<4x256xf32>
    %309 = arith.addf %303, %308 : vector<4x256xf32>
    %310 = vector.extract_strided_slice %297 {offsets = [0, 2], sizes = [4, 1], strides = [1, 1]} : vector<4x4xf32> to vector<4x1xf32>
    %311 = vector.extract_strided_slice %298 {offsets = [2, 0], sizes = [1, 256], strides = [1, 1]} : vector<4x256xf32> to vector<1x256xf32>
    %312 = vector.broadcast %310 : vector<4x1xf32> to vector<4x256xf32>
    %313 = vector.broadcast %311 : vector<1x256xf32> to vector<4x256xf32>
    %314 = arith.mulf %312, %313 : vector<4x256xf32>
    %315 = arith.addf %309, %314 : vector<4x256xf32>
    %316 = vector.extract_strided_slice %297 {offsets = [0, 3], sizes = [4, 1], strides = [1, 1]} : vector<4x4xf32> to vector<4x1xf32>
    %317 = vector.extract_strided_slice %298 {offsets = [3, 0], sizes = [1, 256], strides = [1, 1]} : vector<4x256xf32> to vector<1x256xf32>
    %318 = vector.broadcast %316 : vector<4x1xf32> to vector<4x256xf32>
    %319 = vector.broadcast %317 : vector<1x256xf32> to vector<4x256xf32>
    %320 = arith.mulf %318, %319 : vector<4x256xf32>
    %321 = arith.addf %315, %320 : vector<4x256xf32>
    %322 = arith.addf %296, %321 : vector<4x256xf32>
    %323 = vector.extract_strided_slice %139 {offsets = [28, 0], sizes = [4, 4], strides = [1, 1]} : vector<64x4xf32> to vector<4x4xf32>
    %324 = vector.extract_strided_slice %138 {offsets = [8, 0], sizes = [4, 256], strides = [1, 1]} : vector<36x256xf32> to vector<4x256xf32>
    %325 = vector.extract_strided_slice %323 {offsets = [0, 0], sizes = [4, 1], strides = [1, 1]} : vector<4x4xf32> to vector<4x1xf32>
    %326 = vector.extract_strided_slice %324 {offsets = [0, 0], sizes = [1, 256], strides = [1, 1]} : vector<4x256xf32> to vector<1x256xf32>
    %327 = vector.broadcast %325 : vector<4x1xf32> to vector<4x256xf32>
    %328 = vector.broadcast %326 : vector<1x256xf32> to vector<4x256xf32>
    %329 = arith.mulf %327, %328 : vector<4x256xf32>
    %330 = vector.extract_strided_slice %323 {offsets = [0, 1], sizes = [4, 1], strides = [1, 1]} : vector<4x4xf32> to vector<4x1xf32>
    %331 = vector.extract_strided_slice %324 {offsets = [1, 0], sizes = [1, 256], strides = [1, 1]} : vector<4x256xf32> to vector<1x256xf32>
    %332 = vector.broadcast %330 : vector<4x1xf32> to vector<4x256xf32>
    %333 = vector.broadcast %331 : vector<1x256xf32> to vector<4x256xf32>
    %334 = arith.mulf %332, %333 : vector<4x256xf32>
    %335 = arith.addf %329, %334 : vector<4x256xf32>
    %336 = vector.extract_strided_slice %323 {offsets = [0, 2], sizes = [4, 1], strides = [1, 1]} : vector<4x4xf32> to vector<4x1xf32>
    %337 = vector.extract_strided_slice %324 {offsets = [2, 0], sizes = [1, 256], strides = [1, 1]} : vector<4x256xf32> to vector<1x256xf32>
    %338 = vector.broadcast %336 : vector<4x1xf32> to vector<4x256xf32>
    %339 = vector.broadcast %337 : vector<1x256xf32> to vector<4x256xf32>
    %340 = arith.mulf %338, %339 : vector<4x256xf32>
    %341 = arith.addf %335, %340 : vector<4x256xf32>
    %342 = vector.extract_strided_slice %323 {offsets = [0, 3], sizes = [4, 1], strides = [1, 1]} : vector<4x4xf32> to vector<4x1xf32>
    %343 = vector.extract_strided_slice %324 {offsets = [3, 0], sizes = [1, 256], strides = [1, 1]} : vector<4x256xf32> to vector<1x256xf32>
    %344 = vector.broadcast %342 : vector<4x1xf32> to vector<4x256xf32>
    %345 = vector.broadcast %343 : vector<1x256xf32> to vector<4x256xf32>
    %346 = arith.mulf %344, %345 : vector<4x256xf32>
    %347 = arith.addf %341, %346 : vector<4x256xf32>
    %348 = arith.addf %322, %347 : vector<4x256xf32>
    %c0_40 = arith.constant 0 : index
    %c4 = arith.constant 4 : index
    %c0_41 = arith.constant 0 : index
    %349 = vector.load %arg17[%c0_40, %c4, %c0_41] : memref<1x16x256xf32, #tpu.memory_space<vmem>>, vector<1x4x256xf32>
    %350 = vector.shape_cast %349 : vector<1x4x256xf32> to vector<4x256xf32>
    %351 = vector.shape_cast %348 : vector<4x256xf32> to vector<1x4x256xf32>
    tpu.vector_store %arg17[%c0_40, %c4, %c0_41], %351 {strides = array<i32>} : memref<1x16x256xf32, #tpu.memory_space<vmem>>, vector<1x4x256xf32>,
    %352 = vector.extract_strided_slice %139 {offsets = [32, 0], sizes = [4, 4], strides = [1, 1]} : vector<64x4xf32> to vector<4x4xf32>
    %353 = vector.extract_strided_slice %138 {offsets = [16, 0], sizes = [4, 256], strides = [1, 1]} : vector<36x256xf32> to vector<4x256xf32>
    %354 = vector.extract_strided_slice %352 {offsets = [0, 0], sizes = [4, 1], strides = [1, 1]} : vector<4x4xf32> to vector<4x1xf32>
    %355 = vector.extract_strided_slice %353 {offsets = [0, 0], sizes = [1, 256], strides = [1, 1]} : vector<4x256xf32> to vector<1x256xf32>
    %356 = vector.broadcast %354 : vector<4x1xf32> to vector<4x256xf32>
    %357 = vector.broadcast %355 : vector<1x256xf32> to vector<4x256xf32>
    %358 = arith.mulf %356, %357 : vector<4x256xf32>
    %359 = vector.extract_strided_slice %352 {offsets = [0, 1], sizes = [4, 1], strides = [1, 1]} : vector<4x4xf32> to vector<4x1xf32>
    %360 = vector.extract_strided_slice %353 {offsets = [1, 0], sizes = [1, 256], strides = [1, 1]} : vector<4x256xf32> to vector<1x256xf32>
    %361 = vector.broadcast %359 : vector<4x1xf32> to vector<4x256xf32>
    %362 = vector.broadcast %360 : vector<1x256xf32> to vector<4x256xf32>
    %363 = arith.mulf %361, %362 : vector<4x256xf32>
    %364 = arith.addf %358, %363 : vector<4x256xf32>
    %365 = vector.extract_strided_slice %352 {offsets = [0, 2], sizes = [4, 1], strides = [1, 1]} : vector<4x4xf32> to vector<4x1xf32>
    %366 = vector.extract_strided_slice %353 {offsets = [2, 0], sizes = [1, 256], strides = [1, 1]} : vector<4x256xf32> to vector<1x256xf32>
    %367 = vector.broadcast %365 : vector<4x1xf32> to vector<4x256xf32>
    %368 = vector.broadcast %366 : vector<1x256xf32> to vector<4x256xf32>
    %369 = arith.mulf %367, %368 : vector<4x256xf32>
    %370 = arith.addf %364, %369 : vector<4x256xf32>
    %371 = vector.extract_strided_slice %352 {offsets = [0, 3], sizes = [4, 1], strides = [1, 1]} : vector<4x4xf32> to vector<4x1xf32>
    %372 = vector.extract_strided_slice %353 {offsets = [3, 0], sizes = [1, 256], strides = [1, 1]} : vector<4x256xf32> to vector<1x256xf32>
    %373 = vector.broadcast %371 : vector<4x1xf32> to vector<4x256xf32>
    %374 = vector.broadcast %372 : vector<1x256xf32> to vector<4x256xf32>
    %375 = arith.mulf %373, %374 : vector<4x256xf32>
    %376 = arith.addf %370, %375 : vector<4x256xf32>
    %377 = vector.extract_strided_slice %139 {offsets = [36, 0], sizes = [4, 4], strides = [1, 1]} : vector<64x4xf32> to vector<4x4xf32>
    %378 = vector.extract_strided_slice %138 {offsets = [12, 0], sizes = [4, 256], strides = [1, 1]} : vector<36x256xf32> to vector<4x256xf32>
    %379 = vector.extract_strided_slice %377 {offsets = [0, 0], sizes = [4, 1], strides = [1, 1]} : vector<4x4xf32> to vector<4x1xf32>
    %380 = vector.extract_strided_slice %378 {offsets = [0, 0], sizes = [1, 256], strides = [1, 1]} : vector<4x256xf32> to vector<1x256xf32>
    %381 = vector.broadcast %379 : vector<4x1xf32> to vector<4x256xf32>
    %382 = vector.broadcast %380 : vector<1x256xf32> to vector<4x256xf32>
    %383 = arith.mulf %381, %382 : vector<4x256xf32>
    %384 = vector.extract_strided_slice %377 {offsets = [0, 1], sizes = [4, 1], strides = [1, 1]} : vector<4x4xf32> to vector<4x1xf32>
    %385 = vector.extract_strided_slice %378 {offsets = [1, 0], sizes = [1, 256], strides = [1, 1]} : vector<4x256xf32> to vector<1x256xf32>
    %386 = vector.broadcast %384 : vector<4x1xf32> to vector<4x256xf32>
    %387 = vector.broadcast %385 : vector<1x256xf32> to vector<4x256xf32>
    %388 = arith.mulf %386, %387 : vector<4x256xf32>
    %389 = arith.addf %383, %388 : vector<4x256xf32>
    %390 = vector.extract_strided_slice %377 {offsets = [0, 2], sizes = [4, 1], strides = [1, 1]} : vector<4x4xf32> to vector<4x1xf32>
    %391 = vector.extract_strided_slice %378 {offsets = [2, 0], sizes = [1, 256], strides = [1, 1]} : vector<4x256xf32> to vector<1x256xf32>
    %392 = vector.broadcast %390 : vector<4x1xf32> to vector<4x256xf32>
    %393 = vector.broadcast %391 : vector<1x256xf32> to vector<4x256xf32>
    %394 = arith.mulf %392, %393 : vector<4x256xf32>
    %395 = arith.addf %389, %394 : vector<4x256xf32>
    %396 = vector.extract_strided_slice %377 {offsets = [0, 3], sizes = [4, 1], strides = [1, 1]} : vector<4x4xf32> to vector<4x1xf32>
    %397 = vector.extract_strided_slice %378 {offsets = [3, 0], sizes = [1, 256], strides = [1, 1]} : vector<4x256xf32> to vector<1x256xf32>
    %398 = vector.broadcast %396 : vector<4x1xf32> to vector<4x256xf32>
    %399 = vector.broadcast %397 : vector<1x256xf32> to vector<4x256xf32>
    %400 = arith.mulf %398, %399 : vector<4x256xf32>
    %401 = arith.addf %395, %400 : vector<4x256xf32>
    %402 = arith.addf %376, %401 : vector<4x256xf32>
    %403 = vector.extract_strided_slice %139 {offsets = [40, 0], sizes = [4, 4], strides = [1, 1]} : vector<64x4xf32> to vector<4x4xf32>
    %404 = vector.extract_strided_slice %138 {offsets = [28, 0], sizes = [4, 256], strides = [1, 1]} : vector<36x256xf32> to vector<4x256xf32>
    %405 = vector.extract_strided_slice %403 {offsets = [0, 0], sizes = [4, 1], strides = [1, 1]} : vector<4x4xf32> to vector<4x1xf32>
    %406 = vector.extract_strided_slice %404 {offsets = [0, 0], sizes = [1, 256], strides = [1, 1]} : vector<4x256xf32> to vector<1x256xf32>
    %407 = vector.broadcast %405 : vector<4x1xf32> to vector<4x256xf32>
    %408 = vector.broadcast %406 : vector<1x256xf32> to vector<4x256xf32>
    %409 = arith.mulf %407, %408 : vector<4x256xf32>
    %410 = vector.extract_strided_slice %403 {offsets = [0, 1], sizes = [4, 1], strides = [1, 1]} : vector<4x4xf32> to vector<4x1xf32>
    %411 = vector.extract_strided_slice %404 {offsets = [1, 0], sizes = [1, 256], strides = [1, 1]} : vector<4x256xf32> to vector<1x256xf32>
    %412 = vector.broadcast %410 : vector<4x1xf32> to vector<4x256xf32>
    %413 = vector.broadcast %411 : vector<1x256xf32> to vector<4x256xf32>
    %414 = arith.mulf %412, %413 : vector<4x256xf32>
    %415 = arith.addf %409, %414 : vector<4x256xf32>
    %416 = vector.extract_strided_slice %403 {offsets = [0, 2], sizes = [4, 1], strides = [1, 1]} : vector<4x4xf32> to vector<4x1xf32>
    %417 = vector.extract_strided_slice %404 {offsets = [2, 0], sizes = [1, 256], strides = [1, 1]} : vector<4x256xf32> to vector<1x256xf32>
    %418 = vector.broadcast %416 : vector<4x1xf32> to vector<4x256xf32>
    %419 = vector.broadcast %417 : vector<1x256xf32> to vector<4x256xf32>
    %420 = arith.mulf %418, %419 : vector<4x256xf32>
    %421 = arith.addf %415, %420 : vector<4x256xf32>
    %422 = vector.extract_strided_slice %403 {offsets = [0, 3], sizes = [4, 1], strides = [1, 1]} : vector<4x4xf32> to vector<4x1xf32>
    %423 = vector.extract_strided_slice %404 {offsets = [3, 0], sizes = [1, 256], strides = [1, 1]} : vector<4x256xf32> to vector<1x256xf32>
    %424 = vector.broadcast %422 : vector<4x1xf32> to vector<4x256xf32>
    %425 = vector.broadcast %423 : vector<1x256xf32> to vector<4x256xf32>
    %426 = arith.mulf %424, %425 : vector<4x256xf32>
    %427 = arith.addf %421, %426 : vector<4x256xf32>
    %428 = arith.addf %402, %427 : vector<4x256xf32>
    %429 = vector.extract_strided_slice %139 {offsets = [44, 0], sizes = [4, 4], strides = [1, 1]} : vector<64x4xf32> to vector<4x4xf32>
    %430 = vector.extract_strided_slice %138 {offsets = [24, 0], sizes = [4, 256], strides = [1, 1]} : vector<36x256xf32> to vector<4x256xf32>
    %431 = vector.extract_strided_slice %429 {offsets = [0, 0], sizes = [4, 1], strides = [1, 1]} : vector<4x4xf32> to vector<4x1xf32>
    %432 = vector.extract_strided_slice %430 {offsets = [0, 0], sizes = [1, 256], strides = [1, 1]} : vector<4x256xf32> to vector<1x256xf32>
    %433 = vector.broadcast %431 : vector<4x1xf32> to vector<4x256xf32>
    %434 = vector.broadcast %432 : vector<1x256xf32> to vector<4x256xf32>
    %435 = arith.mulf %433, %434 : vector<4x256xf32>
    %436 = vector.extract_strided_slice %429 {offsets = [0, 1], sizes = [4, 1], strides = [1, 1]} : vector<4x4xf32> to vector<4x1xf32>
    %437 = vector.extract_strided_slice %430 {offsets = [1, 0], sizes = [1, 256], strides = [1, 1]} : vector<4x256xf32> to vector<1x256xf32>
    %438 = vector.broadcast %436 : vector<4x1xf32> to vector<4x256xf32>
    %439 = vector.broadcast %437 : vector<1x256xf32> to vector<4x256xf32>
    %440 = arith.mulf %438, %439 : vector<4x256xf32>
    %441 = arith.addf %435, %440 : vector<4x256xf32>
    %442 = vector.extract_strided_slice %429 {offsets = [0, 2], sizes = [4, 1], strides = [1, 1]} : vector<4x4xf32> to vector<4x1xf32>
    %443 = vector.extract_strided_slice %430 {offsets = [2, 0], sizes = [1, 256], strides = [1, 1]} : vector<4x256xf32> to vector<1x256xf32>
    %444 = vector.broadcast %442 : vector<4x1xf32> to vector<4x256xf32>
    %445 = vector.broadcast %443 : vector<1x256xf32> to vector<4x256xf32>
    %446 = arith.mulf %444, %445 : vector<4x256xf32>
    %447 = arith.addf %441, %446 : vector<4x256xf32>
    %448 = vector.extract_strided_slice %429 {offsets = [0, 3], sizes = [4, 1], strides = [1, 1]} : vector<4x4xf32> to vector<4x1xf32>
    %449 = vector.extract_strided_slice %430 {offsets = [3, 0], sizes = [1, 256], strides = [1, 1]} : vector<4x256xf32> to vector<1x256xf32>
    %450 = vector.broadcast %448 : vector<4x1xf32> to vector<4x256xf32>
    %451 = vector.broadcast %449 : vector<1x256xf32> to vector<4x256xf32>
    %452 = arith.mulf %450, %451 : vector<4x256xf32>
    %453 = arith.addf %447, %452 : vector<4x256xf32>
    %454 = arith.addf %428, %453 : vector<4x256xf32>
    %c0_42 = arith.constant 0 : index
    %c8 = arith.constant 8 : index
    %c0_43 = arith.constant 0 : index
    %455 = vector.load %arg17[%c0_42, %c8, %c0_43] : memref<1x16x256xf32, #tpu.memory_space<vmem>>, vector<1x4x256xf32>
    %456 = vector.shape_cast %455 : vector<1x4x256xf32> to vector<4x256xf32>
    %457 = vector.shape_cast %454 : vector<4x256xf32> to vector<1x4x256xf32>
    tpu.vector_store %arg17[%c0_42, %c8, %c0_43], %457 {strides = array<i32>} : memref<1x16x256xf32, #tpu.memory_space<vmem>>, vector<1x4x256xf32>,
    %458 = vector.extract_strided_slice %139 {offsets = [48, 0], sizes = [4, 4], strides = [1, 1]} : vector<64x4xf32> to vector<4x4xf32>
    %459 = vector.extract_strided_slice %138 {offsets = [16, 0], sizes = [4, 256], strides = [1, 1]} : vector<36x256xf32> to vector<4x256xf32>
    %460 = vector.extract_strided_slice %458 {offsets = [0, 0], sizes = [4, 1], strides = [1, 1]} : vector<4x4xf32> to vector<4x1xf32>
    %461 = vector.extract_strided_slice %459 {offsets = [0, 0], sizes = [1, 256], strides = [1, 1]} : vector<4x256xf32> to vector<1x256xf32>
    %462 = vector.broadcast %460 : vector<4x1xf32> to vector<4x256xf32>
    %463 = vector.broadcast %461 : vector<1x256xf32> to vector<4x256xf32>
    %464 = arith.mulf %462, %463 : vector<4x256xf32>
    %465 = vector.extract_strided_slice %458 {offsets = [0, 1], sizes = [4, 1], strides = [1, 1]} : vector<4x4xf32> to vector<4x1xf32>
    %466 = vector.extract_strided_slice %459 {offsets = [1, 0], sizes = [1, 256], strides = [1, 1]} : vector<4x256xf32> to vector<1x256xf32>
    %467 = vector.broadcast %465 : vector<4x1xf32> to vector<4x256xf32>
    %468 = vector.broadcast %466 : vector<1x256xf32> to vector<4x256xf32>
    %469 = arith.mulf %467, %468 : vector<4x256xf32>
    %470 = arith.addf %464, %469 : vector<4x256xf32>
    %471 = vector.extract_strided_slice %458 {offsets = [0, 2], sizes = [4, 1], strides = [1, 1]} : vector<4x4xf32> to vector<4x1xf32>
    %472 = vector.extract_strided_slice %459 {offsets = [2, 0], sizes = [1, 256], strides = [1, 1]} : vector<4x256xf32> to vector<1x256xf32>
    %473 = vector.broadcast %471 : vector<4x1xf32> to vector<4x256xf32>
    %474 = vector.broadcast %472 : vector<1x256xf32> to vector<4x256xf32>
    %475 = arith.mulf %473, %474 : vector<4x256xf32>
    %476 = arith.addf %470, %475 : vector<4x256xf32>
    %477 = vector.extract_strided_slice %458 {offsets = [0, 3], sizes = [4, 1], strides = [1, 1]} : vector<4x4xf32> to vector<4x1xf32>
    %478 = vector.extract_strided_slice %459 {offsets = [3, 0], sizes = [1, 256], strides = [1, 1]} : vector<4x256xf32> to vector<1x256xf32>
    %479 = vector.broadcast %477 : vector<4x1xf32> to vector<4x256xf32>
    %480 = vector.broadcast %478 : vector<1x256xf32> to vector<4x256xf32>
    %481 = arith.mulf %479, %480 : vector<4x256xf32>
    %482 = arith.addf %476, %481 : vector<4x256xf32>
    %483 = vector.extract_strided_slice %139 {offsets = [52, 0], sizes = [4, 4], strides = [1, 1]} : vector<64x4xf32> to vector<4x4xf32>
    %484 = vector.extract_strided_slice %138 {offsets = [20, 0], sizes = [4, 256], strides = [1, 1]} : vector<36x256xf32> to vector<4x256xf32>
    %485 = vector.extract_strided_slice %483 {offsets = [0, 0], sizes = [4, 1], strides = [1, 1]} : vector<4x4xf32> to vector<4x1xf32>
    %486 = vector.extract_strided_slice %484 {offsets = [0, 0], sizes = [1, 256], strides = [1, 1]} : vector<4x256xf32> to vector<1x256xf32>
    %487 = vector.broadcast %485 : vector<4x1xf32> to vector<4x256xf32>
    %488 = vector.broadcast %486 : vector<1x256xf32> to vector<4x256xf32>
    %489 = arith.mulf %487, %488 : vector<4x256xf32>
    %490 = vector.extract_strided_slice %483 {offsets = [0, 1], sizes = [4, 1], strides = [1, 1]} : vector<4x4xf32> to vector<4x1xf32>
    %491 = vector.extract_strided_slice %484 {offsets = [1, 0], sizes = [1, 256], strides = [1, 1]} : vector<4x256xf32> to vector<1x256xf32>
    %492 = vector.broadcast %490 : vector<4x1xf32> to vector<4x256xf32>
    %493 = vector.broadcast %491 : vector<1x256xf32> to vector<4x256xf32>
    %494 = arith.mulf %492, %493 : vector<4x256xf32>
    %495 = arith.addf %489, %494 : vector<4x256xf32>
    %496 = vector.extract_strided_slice %483 {offsets = [0, 2], sizes = [4, 1], strides = [1, 1]} : vector<4x4xf32> to vector<4x1xf32>
    %497 = vector.extract_strided_slice %484 {offsets = [2, 0], sizes = [1, 256], strides = [1, 1]} : vector<4x256xf32> to vector<1x256xf32>
    %498 = vector.broadcast %496 : vector<4x1xf32> to vector<4x256xf32>
    %499 = vector.broadcast %497 : vector<1x256xf32> to vector<4x256xf32>
    %500 = arith.mulf %498, %499 : vector<4x256xf32>
    %501 = arith.addf %495, %500 : vector<4x256xf32>
    %502 = vector.extract_strided_slice %483 {offsets = [0, 3], sizes = [4, 1], strides = [1, 1]} : vector<4x4xf32> to vector<4x1xf32>
    %503 = vector.extract_strided_slice %484 {offsets = [3, 0], sizes = [1, 256], strides = [1, 1]} : vector<4x256xf32> to vector<1x256xf32>
    %504 = vector.broadcast %502 : vector<4x1xf32> to vector<4x256xf32>
    %505 = vector.broadcast %503 : vector<1x256xf32> to vector<4x256xf32>
    %506 = arith.mulf %504, %505 : vector<4x256xf32>
    %507 = arith.addf %501, %506 : vector<4x256xf32>
    %508 = arith.addf %482, %507 : vector<4x256xf32>
    %509 = vector.extract_strided_slice %139 {offsets = [56, 0], sizes = [4, 4], strides = [1, 1]} : vector<64x4xf32> to vector<4x4xf32>
    %510 = vector.extract_strided_slice %138 {offsets = [28, 0], sizes = [4, 256], strides = [1, 1]} : vector<36x256xf32> to vector<4x256xf32>
    %511 = vector.extract_strided_slice %509 {offsets = [0, 0], sizes = [4, 1], strides = [1, 1]} : vector<4x4xf32> to vector<4x1xf32>
    %512 = vector.extract_strided_slice %510 {offsets = [0, 0], sizes = [1, 256], strides = [1, 1]} : vector<4x256xf32> to vector<1x256xf32>
    %513 = vector.broadcast %511 : vector<4x1xf32> to vector<4x256xf32>
    %514 = vector.broadcast %512 : vector<1x256xf32> to vector<4x256xf32>
    %515 = arith.mulf %513, %514 : vector<4x256xf32>
    %516 = vector.extract_strided_slice %509 {offsets = [0, 1], sizes = [4, 1], strides = [1, 1]} : vector<4x4xf32> to vector<4x1xf32>
    %517 = vector.extract_strided_slice %510 {offsets = [1, 0], sizes = [1, 256], strides = [1, 1]} : vector<4x256xf32> to vector<1x256xf32>
    %518 = vector.broadcast %516 : vector<4x1xf32> to vector<4x256xf32>
    %519 = vector.broadcast %517 : vector<1x256xf32> to vector<4x256xf32>
    %520 = arith.mulf %518, %519 : vector<4x256xf32>
    %521 = arith.addf %515, %520 : vector<4x256xf32>
    %522 = vector.extract_strided_slice %509 {offsets = [0, 2], sizes = [4, 1], strides = [1, 1]} : vector<4x4xf32> to vector<4x1xf32>
    %523 = vector.extract_strided_slice %510 {offsets = [2, 0], sizes = [1, 256], strides = [1, 1]} : vector<4x256xf32> to vector<1x256xf32>
    %524 = vector.broadcast %522 : vector<4x1xf32> to vector<4x256xf32>
    %525 = vector.broadcast %523 : vector<1x256xf32> to vector<4x256xf32>
    %526 = arith.mulf %524, %525 : vector<4x256xf32>
    %527 = arith.addf %521, %526 : vector<4x256xf32>
    %528 = vector.extract_strided_slice %509 {offsets = [0, 3], sizes = [4, 1], strides = [1, 1]} : vector<4x4xf32> to vector<4x1xf32>
    %529 = vector.extract_strided_slice %510 {offsets = [3, 0], sizes = [1, 256], strides = [1, 1]} : vector<4x256xf32> to vector<1x256xf32>
    %530 = vector.broadcast %528 : vector<4x1xf32> to vector<4x256xf32>
    %531 = vector.broadcast %529 : vector<1x256xf32> to vector<4x256xf32>
    %532 = arith.mulf %530, %531 : vector<4x256xf32>
    %533 = arith.addf %527, %532 : vector<4x256xf32>
    %534 = arith.addf %508, %533 : vector<4x256xf32>
    %535 = vector.extract_strided_slice %139 {offsets = [60, 0], sizes = [4, 4], strides = [1, 1]} : vector<64x4xf32> to vector<4x4xf32>
    %536 = vector.extract_strided_slice %138 {offsets = [32, 0], sizes = [4, 256], strides = [1, 1]} : vector<36x256xf32> to vector<4x256xf32>
    %537 = vector.extract_strided_slice %535 {offsets = [0, 0], sizes = [4, 1], strides = [1, 1]} : vector<4x4xf32> to vector<4x1xf32>
    %538 = vector.extract_strided_slice %536 {offsets = [0, 0], sizes = [1, 256], strides = [1, 1]} : vector<4x256xf32> to vector<1x256xf32>
    %539 = vector.broadcast %537 : vector<4x1xf32> to vector<4x256xf32>
    %540 = vector.broadcast %538 : vector<1x256xf32> to vector<4x256xf32>
    %541 = arith.mulf %539, %540 : vector<4x256xf32>
    %542 = vector.extract_strided_slice %535 {offsets = [0, 1], sizes = [4, 1], strides = [1, 1]} : vector<4x4xf32> to vector<4x1xf32>
    %543 = vector.extract_strided_slice %536 {offsets = [1, 0], sizes = [1, 256], strides = [1, 1]} : vector<4x256xf32> to vector<1x256xf32>
    %544 = vector.broadcast %542 : vector<4x1xf32> to vector<4x256xf32>
    %545 = vector.broadcast %543 : vector<1x256xf32> to vector<4x256xf32>
    %546 = arith.mulf %544, %545 : vector<4x256xf32>
    %547 = arith.addf %541, %546 : vector<4x256xf32>
    %548 = vector.extract_strided_slice %535 {offsets = [0, 2], sizes = [4, 1], strides = [1, 1]} : vector<4x4xf32> to vector<4x1xf32>
    %549 = vector.extract_strided_slice %536 {offsets = [2, 0], sizes = [1, 256], strides = [1, 1]} : vector<4x256xf32> to vector<1x256xf32>
    %550 = vector.broadcast %548 : vector<4x1xf32> to vector<4x256xf32>
    %551 = vector.broadcast %549 : vector<1x256xf32> to vector<4x256xf32>
    %552 = arith.mulf %550, %551 : vector<4x256xf32>
    %553 = arith.addf %547, %552 : vector<4x256xf32>
    %554 = vector.extract_strided_slice %535 {offsets = [0, 3], sizes = [4, 1], strides = [1, 1]} : vector<4x4xf32> to vector<4x1xf32>
    %555 = vector.extract_strided_slice %536 {offsets = [3, 0], sizes = [1, 256], strides = [1, 1]} : vector<4x256xf32> to vector<1x256xf32>
    %556 = vector.broadcast %554 : vector<4x1xf32> to vector<4x256xf32>
    %557 = vector.broadcast %555 : vector<1x256xf32> to vector<4x256xf32>
    %558 = arith.mulf %556, %557 : vector<4x256xf32>
    %559 = arith.addf %553, %558 : vector<4x256xf32>
    %560 = arith.addf %534, %559 : vector<4x256xf32>
    %c0_44 = arith.constant 0 : index
    %c12 = arith.constant 12 : index
    %c0_45 = arith.constant 0 : index
    %561 = vector.load %arg17[%c0_44, %c12, %c0_45] : memref<1x16x256xf32, #tpu.memory_space<vmem>>, vector<1x4x256xf32>
    %562 = vector.shape_cast %561 : vector<1x4x256xf32> to vector<4x256xf32>
    %563 = vector.shape_cast %560 : vector<4x256xf32> to vector<1x4x256xf32>
    tpu.vector_store %arg17[%c0_44, %c12, %c0_45], %563 {strides = array<i32>} : memref<1x16x256xf32, #tpu.memory_space<vmem>>, vector<1x4x256xf32>,
    return
  }
  func.func @transform_0(%arg0: i32, %arg1: i32) -> (i32, i32, i32) {
    %c0_i32 = arith.constant 0 : i32
    %c0_i32_0 = arith.constant 0 : i32
    return %arg0, %c0_i32, %arg1 : i32, i32, i32
  }
  func.func @transform_1(%arg0: i32, %arg1: i32) -> (i32, i32, i32) {
    %c0_i32 = arith.constant 0 : i32
    %c0_i32_0 = arith.constant 0 : i32
    return %arg0, %c0_i32, %arg1 : i32, i32, i32
  }
  func.func @transform_2(%arg0: i32, %arg1: i32) -> (i32, i32) {
    %c0_i32 = arith.constant 0 : i32
    %c0_i32_0 = arith.constant 0 : i32
    return %c0_i32, %arg1 : i32, i32
  }
  func.func @transform_3(%arg0: i32, %arg1: i32) -> (i32, i32, i32) {
    %c0_i32 = arith.constant 0 : i32
    %c0_i32_0 = arith.constant 0 : i32
    return %arg0, %c0_i32, %arg1 : i32, i32, i32
  }
  func.func @transform_4(%arg0: i32, %arg1: i32) -> (i32, i32) {
    %c0_i32 = arith.constant 0 : i32
    %c0_i32_0 = arith.constant 0 : i32
    %c0_i32_1 = arith.constant 0 : i32
    return %c0_i32, %c0_i32_0 : i32, i32
  }
  func.func @transform_5(%arg0: i32, %arg1: i32) -> (i32, i32) {
    %c0_i32 = arith.constant 0 : i32
    %c0_i32_0 = arith.constant 0 : i32
    %c0_i32_1 = arith.constant 0 : i32
    return %c0_i32, %c0_i32_0 : i32, i32
  }
  func.func @transform_6(%arg0: i32, %arg1: i32) -> (i32, i32) {
    %c0_i32 = arith.constant 0 : i32
    %c0_i32_0 = arith.constant 0 : i32
    %c0_i32_1 = arith.constant 0 : i32
    return %c0_i32, %c0_i32_0 : i32, i32
  }
  func.func @transform_7(%arg0: i32, %arg1: i32) -> (i32, i32) {
    %c0_i32 = arith.constant 0 : i32
    %c0_i32_0 = arith.constant 0 : i32
    %c0_i32_1 = arith.constant 0 : i32
    return %c0_i32, %c0_i32_0 : i32, i32
  }
  func.func @transform_8(%arg0: i32, %arg1: i32) -> (i32, i32) {
    %c0_i32 = arith.constant 0 : i32
    %c0_i32_0 = arith.constant 0 : i32
    %c0_i32_1 = arith.constant 0 : i32
    return %c0_i32, %c0_i32_0 : i32, i32
  }
  func.func @transform_9(%arg0: i32, %arg1: i32) -> (i32, i32) {
    %c0_i32 = arith.constant 0 : i32
    %c0_i32_0 = arith.constant 0 : i32
    %c0_i32_1 = arith.constant 0 : i32
    return %c0_i32, %c0_i32_0 : i32, i32
  }
  func.func @transform_10(%arg0: i32, %arg1: i32) -> (i32, i32) {
    %c0_i32 = arith.constant 0 : i32
    %c0_i32_0 = arith.constant 0 : i32
    %c0_i32_1 = arith.constant 0 : i32
    return %c0_i32, %c0_i32_0 : i32, i32
  }
  func.func @transform_11(%arg0: i32, %arg1: i32) -> (i32, i32) {
    %c0_i32 = arith.constant 0 : i32
    %c0_i32_0 = arith.constant 0 : i32
    %c0_i32_1 = arith.constant 0 : i32
    return %c0_i32, %c0_i32_0 : i32, i32
  }
  func.func @transform_12(%arg0: i32, %arg1: i32) -> (i32, i32) {
    %c0_i32 = arith.constant 0 : i32
    %c0_i32_0 = arith.constant 0 : i32
    %c0_i32_1 = arith.constant 0 : i32
    return %c0_i32, %c0_i32_0 : i32, i32
  }
  func.func @transform_13(%arg0: i32, %arg1: i32) -> (i32, i32, i32) {
    %c0_i32 = arith.constant 0 : i32
    %c0_i32_0 = arith.constant 0 : i32
    return %arg0, %c0_i32, %arg1 : i32, i32, i32
  }
  func.func @transform_14(%arg0: i32, %arg1: i32) -> (i32, i32, i32) {
    %c0_i32 = arith.constant 0 : i32
    %c0_i32_0 = arith.constant 0 : i32
    return %arg0, %c0_i32, %arg1 : i32, i32, i32
  }
  func.func @transform_15(%arg0: i32, %arg1: i32) -> (i32, i32, i32) {
    %c0_i32 = arith.constant 0 : i32
    %c0_i32_0 = arith.constant 0 : i32
    return %arg0, %c0_i32, %arg1 : i32, i32, i32
  }
}

module attributes {stable_mosaic.version = 11 : i64} {
  func.func @_cat_fuse_kernel(%arg0: i32, %arg1: i32, %arg2: memref<1x4x1024xf32, #tpu.memory_space<vmem>>, %arg3: memref<1x4x1024xf32, #tpu.memory_space<vmem>>, %arg4: memref<1x4x1024xf32, #tpu.memory_space<vmem>>, %arg5: memref<4x4xf32, #tpu.memory_space<vmem>>, %arg6: memref<4x4xf32, #tpu.memory_space<vmem>>, %arg7: memref<4x1xf32, #tpu.memory_space<vmem>>, %arg8: memref<1x4x1024xf32, #tpu.memory_space<vmem>>) attributes {dimension_semantics = [#tpu.dimension_semantics<parallel>, #tpu.dimension_semantics<parallel>], iteration_bounds = array<i64: 2, 1>, scalar_prefetch = 0 : i64, scratch_operands = 0 : i64, tpu.core_type = #tpu.core_type<tc>, window_params = [{transform_indices = @transform_0, window_bounds = array<i64: 1, 4, 1024>}, {transform_indices = @transform_1, window_bounds = array<i64: 1, 4, 1024>}, {transform_indices = @transform_2, window_bounds = array<i64: 1, 4, 1024>}, {pipeline_mode = #tpu.pipeline_mode<synchronous>, transform_indices = @transform_3, window_bounds = array<i64: 4, 4>}, {pipeline_mode = #tpu.pipeline_mode<synchronous>, transform_indices = @transform_4, window_bounds = array<i64: 4, 4>}, {pipeline_mode = #tpu.pipeline_mode<synchronous>, transform_indices = @transform_5, window_bounds = array<i64: 4, 1>}, {transform_indices = @transform_6, window_bounds = array<i64: 1, 4, 1024>}]} {
    %c0 = arith.constant 0 : index
    %c0_0 = arith.constant 0 : index
    %c0_1 = arith.constant 0 : index
    %0 = vector.load %arg3[%c0, %c0_0, %c0_1] : memref<1x4x1024xf32, #tpu.memory_space<vmem>>, vector<1x4x1024xf32>
    %1 = vector.shape_cast %0 : vector<1x4x1024xf32> to vector<4x1024xf32>
    %c0_2 = arith.constant 0 : index
    %c0_3 = arith.constant 0 : index
    %c0_4 = arith.constant 0 : index
    %2 = vector.load %arg4[%c0_2, %c0_3, %c0_4] : memref<1x4x1024xf32, #tpu.memory_space<vmem>>, vector<1x4x1024xf32>
    %3 = vector.shape_cast %2 : vector<1x4x1024xf32> to vector<4x1024xf32>
    %4 = arith.mulf %1, %1 : vector<4x1024xf32>
    %5 = arith.mulf %3, %3 : vector<4x1024xf32>
    %6 = arith.addf %4, %5 : vector<4x1024xf32>
    %7 = math.sqrt %6 : vector<4x1024xf32>
    %c0_5 = arith.constant 0 : index
    %c0_6 = arith.constant 0 : index
    %c0_7 = arith.constant 0 : index
    %8 = vector.load %arg2[%c0_5, %c0_6, %c0_7] : memref<1x4x1024xf32, #tpu.memory_space<vmem>>, vector<1x4x1024xf32>
    %9 = vector.shape_cast %8 : vector<1x4x1024xf32> to vector<4x1024xf32>
    %c0_8 = arith.constant 0 : index
    %c0_9 = arith.constant 0 : index
    %10 = vector.load %arg5[%c0_8, %c0_9] : memref<4x4xf32, #tpu.memory_space<vmem>>, vector<4x4xf32>
    %11 = vector.extract_strided_slice %10 {offsets = [0, 0], sizes = [4, 1], strides = [1, 1]} : vector<4x4xf32> to vector<4x1xf32>
    %12 = vector.extract_strided_slice %9 {offsets = [0, 0], sizes = [1, 1024], strides = [1, 1]} : vector<4x1024xf32> to vector<1x1024xf32>
    %13 = vector.broadcast %11 : vector<4x1xf32> to vector<4x1024xf32>
    %14 = vector.broadcast %12 : vector<1x1024xf32> to vector<4x1024xf32>
    %15 = arith.mulf %13, %14 : vector<4x1024xf32>
    %16 = vector.extract_strided_slice %10 {offsets = [0, 1], sizes = [4, 1], strides = [1, 1]} : vector<4x4xf32> to vector<4x1xf32>
    %17 = vector.extract_strided_slice %9 {offsets = [1, 0], sizes = [1, 1024], strides = [1, 1]} : vector<4x1024xf32> to vector<1x1024xf32>
    %18 = vector.broadcast %16 : vector<4x1xf32> to vector<4x1024xf32>
    %19 = vector.broadcast %17 : vector<1x1024xf32> to vector<4x1024xf32>
    %20 = arith.mulf %18, %19 : vector<4x1024xf32>
    %21 = arith.addf %15, %20 : vector<4x1024xf32>
    %22 = vector.extract_strided_slice %10 {offsets = [0, 2], sizes = [4, 1], strides = [1, 1]} : vector<4x4xf32> to vector<4x1xf32>
    %23 = vector.extract_strided_slice %9 {offsets = [2, 0], sizes = [1, 1024], strides = [1, 1]} : vector<4x1024xf32> to vector<1x1024xf32>
    %24 = vector.broadcast %22 : vector<4x1xf32> to vector<4x1024xf32>
    %25 = vector.broadcast %23 : vector<1x1024xf32> to vector<4x1024xf32>
    %26 = arith.mulf %24, %25 : vector<4x1024xf32>
    %27 = arith.addf %21, %26 : vector<4x1024xf32>
    %28 = vector.extract_strided_slice %10 {offsets = [0, 3], sizes = [4, 1], strides = [1, 1]} : vector<4x4xf32> to vector<4x1xf32>
    %29 = vector.extract_strided_slice %9 {offsets = [3, 0], sizes = [1, 1024], strides = [1, 1]} : vector<4x1024xf32> to vector<1x1024xf32>
    %30 = vector.broadcast %28 : vector<4x1xf32> to vector<4x1024xf32>
    %31 = vector.broadcast %29 : vector<1x1024xf32> to vector<4x1024xf32>
    %32 = arith.mulf %30, %31 : vector<4x1024xf32>
    %33 = arith.addf %27, %32 : vector<4x1024xf32>
    %c0_10 = arith.constant 0 : index
    %c0_11 = arith.constant 0 : index
    %34 = vector.load %arg6[%c0_10, %c0_11] : memref<4x4xf32, #tpu.memory_space<vmem>>, vector<4x4xf32>
    %35 = vector.extract_strided_slice %34 {offsets = [0, 0], sizes = [4, 1], strides = [1, 1]} : vector<4x4xf32> to vector<4x1xf32>
    %36 = vector.extract_strided_slice %7 {offsets = [0, 0], sizes = [1, 1024], strides = [1, 1]} : vector<4x1024xf32> to vector<1x1024xf32>
    %37 = vector.broadcast %35 : vector<4x1xf32> to vector<4x1024xf32>
    %38 = vector.broadcast %36 : vector<1x1024xf32> to vector<4x1024xf32>
    %39 = arith.mulf %37, %38 : vector<4x1024xf32>
    %40 = vector.extract_strided_slice %34 {offsets = [0, 1], sizes = [4, 1], strides = [1, 1]} : vector<4x4xf32> to vector<4x1xf32>
    %41 = vector.extract_strided_slice %7 {offsets = [1, 0], sizes = [1, 1024], strides = [1, 1]} : vector<4x1024xf32> to vector<1x1024xf32>
    %42 = vector.broadcast %40 : vector<4x1xf32> to vector<4x1024xf32>
    %43 = vector.broadcast %41 : vector<1x1024xf32> to vector<4x1024xf32>
    %44 = arith.mulf %42, %43 : vector<4x1024xf32>
    %45 = arith.addf %39, %44 : vector<4x1024xf32>
    %46 = vector.extract_strided_slice %34 {offsets = [0, 2], sizes = [4, 1], strides = [1, 1]} : vector<4x4xf32> to vector<4x1xf32>
    %47 = vector.extract_strided_slice %7 {offsets = [2, 0], sizes = [1, 1024], strides = [1, 1]} : vector<4x1024xf32> to vector<1x1024xf32>
    %48 = vector.broadcast %46 : vector<4x1xf32> to vector<4x1024xf32>
    %49 = vector.broadcast %47 : vector<1x1024xf32> to vector<4x1024xf32>
    %50 = arith.mulf %48, %49 : vector<4x1024xf32>
    %51 = arith.addf %45, %50 : vector<4x1024xf32>
    %52 = vector.extract_strided_slice %34 {offsets = [0, 3], sizes = [4, 1], strides = [1, 1]} : vector<4x4xf32> to vector<4x1xf32>
    %53 = vector.extract_strided_slice %7 {offsets = [3, 0], sizes = [1, 1024], strides = [1, 1]} : vector<4x1024xf32> to vector<1x1024xf32>
    %54 = vector.broadcast %52 : vector<4x1xf32> to vector<4x1024xf32>
    %55 = vector.broadcast %53 : vector<1x1024xf32> to vector<4x1024xf32>
    %56 = arith.mulf %54, %55 : vector<4x1024xf32>
    %57 = arith.addf %51, %56 : vector<4x1024xf32>
    %58 = arith.addf %33, %57 : vector<4x1024xf32>
    %c0_12 = arith.constant 0 : index
    %c0_13 = arith.constant 0 : index
    %59 = vector.load %arg7[%c0_12, %c0_13] : memref<4x1xf32, #tpu.memory_space<vmem>>, vector<4x1xf32>
    %60 = vector.broadcast %59 : vector<4x1xf32> to vector<4x1024xf32>
    %61 = arith.addf %58, %60 : vector<4x1024xf32>
    %c0_14 = arith.constant 0 : index
    %c0_15 = arith.constant 0 : index
    %c0_16 = arith.constant 0 : index
    %62 = vector.load %arg8[%c0_14, %c0_15, %c0_16] : memref<1x4x1024xf32, #tpu.memory_space<vmem>>, vector<1x4x1024xf32>
    %63 = vector.shape_cast %62 : vector<1x4x1024xf32> to vector<4x1024xf32>
    %64 = vector.shape_cast %61 : vector<4x1024xf32> to vector<1x4x1024xf32>
    tpu.vector_store %arg8[%c0_14, %c0_15, %c0_16], %64 {strides = array<i32>} : memref<1x4x1024xf32, #tpu.memory_space<vmem>>, vector<1x4x1024xf32>,
    return
  }
  func.func @transform_0(%arg0: i32, %arg1: i32) -> (i32, i32, i32) {
    %c0_i32 = arith.constant 0 : i32
    %c0_i32_0 = arith.constant 0 : i32
    return %arg0, %c0_i32, %arg1 : i32, i32, i32
  }
  func.func @transform_1(%arg0: i32, %arg1: i32) -> (i32, i32, i32) {
    %c0_i32 = arith.constant 0 : i32
    %c0_i32_0 = arith.constant 0 : i32
    return %arg0, %c0_i32, %arg1 : i32, i32, i32
  }
  func.func @transform_2(%arg0: i32, %arg1: i32) -> (i32, i32, i32) {
    %c0_i32 = arith.constant 0 : i32
    %c0_i32_0 = arith.constant 0 : i32
    return %arg0, %c0_i32, %arg1 : i32, i32, i32
  }
  func.func @transform_3(%arg0: i32, %arg1: i32) -> (i32, i32) {
    %c0_i32 = arith.constant 0 : i32
    %c0_i32_0 = arith.constant 0 : i32
    %c0_i32_1 = arith.constant 0 : i32
    return %c0_i32, %c0_i32_0 : i32, i32
  }
  func.func @transform_4(%arg0: i32, %arg1: i32) -> (i32, i32) {
    %c0_i32 = arith.constant 0 : i32
    %c0_i32_0 = arith.constant 0 : i32
    %c0_i32_1 = arith.constant 0 : i32
    return %c0_i32, %c0_i32_0 : i32, i32
  }
  func.func @transform_5(%arg0: i32, %arg1: i32) -> (i32, i32) {
    %c0_i32 = arith.constant 0 : i32
    %c0_i32_0 = arith.constant 0 : i32
    %c0_i32_1 = arith.constant 0 : i32
    return %c0_i32, %c0_i32_0 : i32, i32
  }
  func.func @transform_6(%arg0: i32, %arg1: i32) -> (i32, i32, i32) {
    %c0_i32 = arith.constant 0 : i32
    %c0_i32_0 = arith.constant 0 : i32
    return %arg0, %c0_i32, %arg1 : i32, i32, i32
  }
}

</mosaic_0001>

<llo_original>
// kernel: frescat_corner_forward.2
$region0: #{frescat_corner_forward.2}
  #allocation0 [shape = 'u32[]', space=smem, size = 0x4, offset = 0x4, fixed_abs, tag = 'smem constant byte address 0x4 - core index']
  #allocation1 [shape = 'u32[144,128]{1,0:T(1,128)}', space=vmem, size = 0x12000, scoped, tag = 'internal scratch']
  %s0 = inlined_call_operand.vmem [shape: f32[2,4,256], index: 0, kind: input, shape index: {}]
  %s1 = inlined_call_operand.vmem [shape: f32[2,4,256], index: 1, kind: input, shape index: {}]
  %s2 = inlined_call_operand.vmem [shape: f32[1,256], index: 2, kind: input, shape index: {}]
  %s3 = inlined_call_operand.vmem [shape: f32[2,36,256], index: 3, kind: input, shape index: {}]
  %s4 = inlined_call_operand.vmem [shape: f32[4,4], index: 4, kind: input, shape index: {}]
  %s5 = inlined_call_operand.vmem [shape: f32[4,1], index: 5, kind: input, shape index: {}]
  %s6 = inlined_call_operand.vmem [shape: f32[4,4], index: 6, kind: input, shape index: {}]
  %s7 = inlined_call_operand.vmem [shape: f32[4,1], index: 7, kind: input, shape index: {}]
  %s8 = inlined_call_operand.vmem [shape: f32[4,4], index: 8, kind: input, shape index: {}]
  %s9 = inlined_call_operand.vmem [shape: f32[4,1], index: 9, kind: input, shape index: {}]
  %s10 = inlined_call_operand.vmem [shape: f32[4,4], index: 10, kind: input, shape index: {}]
  %s11 = inlined_call_operand.vmem [shape: f32[4,1], index: 11, kind: input, shape index: {}]
  %s12 = inlined_call_operand.vmem [shape: f32[64,4], index: 12, kind: input, shape index: {}]
  %s13 = inlined_call_operand.vmem [shape: f32[2,4,256], index: 13, kind: output, shape index: {0}]
  %s14 = inlined_call_operand.vmem [shape: f32[2,4,256], index: 14, kind: output, shape index: {1}]
  %s15 = inlined_call_operand.vmem [shape: f32[2,16,256], index: 15, kind: output, shape index: {2}]
  %16 = xla_tuple %s13, %s14, %s15
  %s17 = sld [smem:[#allocation0]]
  $region101: #{frescat_corner_forward.2} parent=0
    _
  %s19 = ssub.s32 1, %s17
  %s20 = scalar_select 0, %s19, %s17
  loop: start=0, step=1, limit=4
  $region2: #{frescat_corner_forward.2} parent=0 // loop_pre_header
    _
  $region3: #{frescat_corner_forward.2} parent=0 // loop_header
    %s22 = sphi 0, %s26
    %p23 = scmp.ge.s32.totalorder %s22, 4
    %s29 = sphi 0, %s41
    %s30 = sphi 0, %s37
    %s31 = sphi 0, %s29
    %s32 = sphi 0, %s30
    %s33 = sphi 0, %s31
    %s34 = sphi 0, %s32
    %s46 = sphi 0, %s48
    %s49 = sphi 0, %s46
    %s50 = sphi 0, %s49
    %s66 = sphi 0, %s50
    %s74 = sphi 0, %s76
    %s77 = sphi 0, %s74
    %s78 = sphi 0, %s77
    %s94 = sphi 0, %s78
    %s100 = sphi 0, %s102
    %s103 = sphi 0, %s100
    %s104 = sphi 0, %s103
    %s120 = sphi 0, %s104
    %s128 = sphi 0, %s130
    %s131 = sphi 0, %s128
    %s132 = sphi 0, %s131
    %s148 = sphi 0, %s132
    %s152 = sphi 0, %s152
    %s154 = sphi 0, %s152
    %s155 = sphi 0, %s154
    %s169 = sphi 0, %s155
    %s173 = sphi 0, %s173
    %s175 = sphi 0, %s173
    %s176 = sphi 0, %s175
    %s190 = sphi 0, %s176
    %s194 = sphi 0, %s194
    %s196 = sphi 0, %s194
    %s197 = sphi 0, %s196
    %s211 = sphi 0, %s197
    %s215 = sphi 0, %s215
    %s217 = sphi 0, %s215
    %s218 = sphi 0, %s217
    %s232 = sphi 0, %s218
    %s236 = sphi 0, %s236
    %s238 = sphi 0, %s236
    %s239 = sphi 0, %s238
    %s253 = sphi 0, %s239
    %s257 = sphi 0, %s257
    %s259 = sphi 0, %s257
    %s260 = sphi 0, %s259
    %s274 = sphi 0, %s260
    %s278 = sphi 0, %s278
    %s280 = sphi 0, %s278
    %s281 = sphi 0, %s280
    %s295 = sphi 0, %s281
    %s299 = sphi 0, %s299
    %s301 = sphi 0, %s299
    %s302 = sphi 0, %s301
    %s316 = sphi 0, %s302
    %s320 = sphi 0, %s320
    %s322 = sphi 0, %s320
    %s323 = sphi 0, %s322
    %s337 = sphi 0, %s323
    %s345 = sphi 0, %s347
    %s348 = sphi 0, %s345
    %s349 = sphi 0, %s348
    %s365 = sphi 0, %s349
    %s373 = sphi 0, %s375
    %s376 = sphi 0, %s373
    %s377 = sphi 0, %s376
    %s393 = sphi 0, %s377
    %s401 = sphi 0, %s403
    %s404 = sphi 0, %s401
    %s405 = sphi 0, %s404
    %s421 = sphi 0, %s405
  $region4: #{frescat_corner_forward.2} parent=0 // loop_header_branch
    %25 = sbr.rel (%p23) target = $region8
  $region5: #{frescat_corner_forward.2} parent=0 // loop_body
    %s27 = ssub.s32 %s22, 1
    %s28 = ssub.s32 %s22, 2
    %s35 = sadd.s32 1, %s30
    %p36 = scmp.ge.s32.totalorder %s35, 1
    %s37 = scalar_select %p36, 0, %s35
    %s38 = sadd.s32 1, %s29
    %s39 = scalar_select %p36, %s38, %s29
    %p40 = scmp.ge.s32.totalorder %s39, 2
    %s41 = scalar_select %p40, 0, %s39
    %s42 = ssub.s32 %s29, %s41
    %s43 = ssub.s32 %s30, %s37
    %s44 = sor.u32 %s42, %s43
    %p45 = scmp.eq.s32.totalorder %s44, 0
    %s47 = sadd.s32 %s46, 1
    %s48 = scalar_select %p45, %s46, %s47
    %p51 = pneg %p45
    %p52 = scmp.eq.s32.totalorder %s22, 1
    %p53 = por %p51, %p52
    %p54 = scmp.ne.s32.totalorder %s46, %s49
    %p55 = scmp.eq.s32.totalorder %s22, 0
    %p56 = por %p54, %p55
    %p57 = scmp.ne.s32.totalorder %s46, %s49
    %p58 = scmp.eq.s32.totalorder %s27, 1
    %p59 = por %p57, %p58
    %p60 = scmp.ne.s32.totalorder %s49, %s50
    %p61 = scmp.eq.s32.totalorder %s27, 0
    %p62 = por %p60, %p61
    %p63 = scmp.ne.s32.totalorder %s49, %s50
    %p64 = scmp.eq.s32.totalorder %s28, 1
    %p65 = por %p63, %p64
    %p67 = scmp.ne.s32.totalorder %s50, %s66
    %p68 = scmp.eq.s32.totalorder %s28, 0
    %p69 = por %p67, %p68
    %s70 = ssub.s32 %s29, %s41
    %s71 = ssub.s32 %s30, %s37
    %s72 = sor.u32 %s70, %s71
    %p73 = scmp.eq.s32.totalorder %s72, 0
    %s75 = sadd.s32 %s74, 1
    %s76 = scalar_select %p73, %s74, %s75
    %p79 = pneg %p73
    %p80 = scmp.eq.s32.totalorder %s22, 1
    %p81 = por %p79, %p80
    %p82 = scmp.ne.s32.totalorder %s74, %s77
    %p83 = scmp.eq.s32.totalorder %s22, 0
    %p84 = por %p82, %p83
    %p85 = scmp.ne.s32.totalorder %s74, %s77
    %p86 = scmp.eq.s32.totalorder %s27, 1
    %p87 = por %p85, %p86
    %p88 = scmp.ne.s32.totalorder %s77, %s78
    %p89 = scmp.eq.s32.totalorder %s27, 0
    %p90 = por %p88, %p89
    %p91 = scmp.ne.s32.totalorder %s77, %s78
    %p92 = scmp.eq.s32.totalorder %s28, 1
    %p93 = por %p91, %p92
    %p95 = scmp.ne.s32.totalorder %s78, %s94
    %p96 = scmp.eq.s32.totalorder %s28, 0
    %p97 = por %p95, %p96
    %s98 = ssub.s32 %s30, %s37
    %p99 = scmp.eq.s32.totalorder %s98, 0
    %s101 = sadd.s32 %s100, 1
    %s102 = scalar_select %p99, %s100, %s101
    %p105 = pneg %p99
    %p106 = scmp.eq.s32.totalorder %s22, 1
    %p107 = por %p105, %p106
    %p108 = scmp.ne.s32.totalorder %s100, %s103
    %p109 = scmp.eq.s32.totalorder %s22, 0
    %p110 = por %p108, %p109
    %p111 = scmp.ne.s32.totalorder %s100, %s103
    %p112 = scmp.eq.s32.totalorder %s27, 1
    %p113 = por %p111, %p112
    %p114 = scmp.ne.s32.totalorder %s103, %s104
    %p115 = scmp.eq.s32.totalorder %s27, 0
    %p116 = por %p114, %p115
    %p117 = scmp.ne.s32.totalorder %s103, %s104
    %p118 = scmp.eq.s32.totalorder %s28, 1
    %p119 = por %p117, %p118
    %p121 = scmp.ne.s32.totalorder %s104, %s120
    %p122 = scmp.eq.s32.totalorder %s28, 0
    %p123 = por %p121, %p122
    %s124 = ssub.s32 %s29, %s41
    %s125 = ssub.s32 %s30, %s37
    %s126 = sor.u32 %s124, %s125
    %p127 = scmp.eq.s32.totalorder %s126, 0
    %s129 = sadd.s32 %s128, 1
    %s130 = scalar_select %p127, %s128, %s129
    %p133 = pneg %p127
    %p134 = scmp.eq.s32.totalorder %s22, 1
    %p135 = por %p133, %p134
    %p136 = scmp.ne.s32.totalorder %s128, %s131
    %p137 = scmp.eq.s32.totalorder %s22, 0
    %p138 = por %p136, %p137
    %p139 = scmp.ne.s32.totalorder %s128, %s131
    %p140 = scmp.eq.s32.totalorder %s27, 1
    %p141 = por %p139, %p140
    %p142 = scmp.ne.s32.totalorder %s131, %s132
    %p143 = scmp.eq.s32.totalorder %s27, 0
    %p144 = por %p142, %p143
    %p145 = scmp.ne.s32.totalorder %s131, %s132
    %p146 = scmp.eq.s32.totalorder %s28, 1
    %p147 = por %p145, %p146
    %p149 = scmp.ne.s32.totalorder %s132, %s148
    %p150 = scmp.eq.s32.totalorder %s28, 0
    %p151 = por %p149, %p150
    %s153 = sadd.s32 %s152, 1
    %p156 = scmp.eq.s32.totalorder %s22, 1
    %p157 = scmp.ne.s32.totalorder %s152, %s154
    %p158 = scmp.eq.s32.totalorder %s22, 0
    %p159 = por %p157, %p158
    %p160 = scmp.ne.s32.totalorder %s152, %s154
    %p161 = scmp.eq.s32.totalorder %s27, 1
    %p162 = por %p160, %p161
    %p163 = scmp.ne.s32.totalorder %s154, %s155
    %p164 = scmp.eq.s32.totalorder %s27, 0
    %p165 = por %p163, %p164
    %p166 = scmp.ne.s32.totalorder %s154, %s155
    %p167 = scmp.eq.s32.totalorder %s28, 1
    %p168 = por %p166, %p167
    %p170 = scmp.ne.s32.totalorder %s155, %s169
    %p171 = scmp.eq.s32.totalorder %s28, 0
    %p172 = por %p170, %p171
    %s174 = sadd.s32 %s173, 1
    %p177 = scmp.eq.s32.totalorder %s22, 1
    %p178 = scmp.ne.s32.totalorder %s173, %s175
    %p179 = scmp.eq.s32.totalorder %s22, 0
    %p180 = por %p178, %p179
    %p181 = scmp.ne.s32.totalorder %s173, %s175
    %p182 = scmp.eq.s32.totalorder %s27, 1
    %p183 = por %p181, %p182
    %p184 = scmp.ne.s32.totalorder %s175, %s176
    %p185 = scmp.eq.s32.totalorder %s27, 0
    %p186 = por %p184, %p185
    %p187 = scmp.ne.s32.totalorder %s175, %s176
    %p188 = scmp.eq.s32.totalorder %s28, 1
    %p189 = por %p187, %p188
    %p191 = scmp.ne.s32.totalorder %s176, %s190
    %p192 = scmp.eq.s32.totalorder %s28, 0
    %p193 = por %p191, %p192
    %s195 = sadd.s32 %s194, 1
    %p198 = scmp.eq.s32.totalorder %s22, 1
    %p199 = scmp.ne.s32.totalorder %s194, %s196
    %p200 = scmp.eq.s32.totalorder %s22, 0
    %p201 = por %p199, %p200
    %p202 = scmp.ne.s32.totalorder %s194, %s196
    %p203 = scmp.eq.s32.totalorder %s27, 1
    %p204 = por %p202, %p203
    %p205 = scmp.ne.s32.totalorder %s196, %s197
    %p206 = scmp.eq.s32.totalorder %s27, 0
    %p207 = por %p205, %p206
    %p208 = scmp.ne.s32.totalorder %s196, %s197
    %p209 = scmp.eq.s32.totalorder %s28, 1
    %p210 = por %p208, %p209
    %p212 = scmp.ne.s32.totalorder %s197, %s211
    %p213 = scmp.eq.s32.totalorder %s28, 0
    %p214 = por %p212, %p213
    %s216 = sadd.s32 %s215, 1
    %p219 = scmp.eq.s32.totalorder %s22, 1
    %p220 = scmp.ne.s32.totalorder %s215, %s217
    %p221 = scmp.eq.s32.totalorder %s22, 0
    %p222 = por %p220, %p221
    %p223 = scmp.ne.s32.totalorder %s215, %s217
    %p224 = scmp.eq.s32.totalorder %s27, 1
    %p225 = por %p223, %p224
    %p226 = scmp.ne.s32.totalorder %s217, %s218
    %p227 = scmp.eq.s32.totalorder %s27, 0
    %p228 = por %p226, %p227
    %p229 = scmp.ne.s32.totalorder %s217, %s218
    %p230 = scmp.eq.s32.totalorder %s28, 1
    %p231 = por %p229, %p230
    %p233 = scmp.ne.s32.totalorder %s218, %s232
    %p234 = scmp.eq.s32.totalorder %s28, 0
    %p235 = por %p233, %p234
    %s237 = sadd.s32 %s236, 1
    %p240 = scmp.eq.s32.totalorder %s22, 1
    %p241 = scmp.ne.s32.totalorder %s236, %s238
    %p242 = scmp.eq.s32.totalorder %s22, 0
    %p243 = por %p241, %p242
    %p244 = scmp.ne.s32.totalorder %s236, %s238
    %p245 = scmp.eq.s32.totalorder %s27, 1
    %p246 = por %p244, %p245
    %p247 = scmp.ne.s32.totalorder %s238, %s239
    %p248 = scmp.eq.s32.totalorder %s27, 0
    %p249 = por %p247, %p248
    %p250 = scmp.ne.s32.totalorder %s238, %s239
    %p251 = scmp.eq.s32.totalorder %s28, 1
    %p252 = por %p250, %p251
    %p254 = scmp.ne.s32.totalorder %s239, %s253
    %p255 = scmp.eq.s32.totalorder %s28, 0
    %p256 = por %p254, %p255
    %s258 = sadd.s32 %s257, 1
    %p261 = scmp.eq.s32.totalorder %s22, 1
    %p262 = scmp.ne.s32.totalorder %s257, %s259
    %p263 = scmp.eq.s32.totalorder %s22, 0
    %p264 = por %p262, %p263
    %p265 = scmp.ne.s32.totalorder %s257, %s259
    %p266 = scmp.eq.s32.totalorder %s27, 1
    %p267 = por %p265, %p266
    %p268 = scmp.ne.s32.totalorder %s259, %s260
    %p269 = scmp.eq.s32.totalorder %s27, 0
    %p270 = por %p268, %p269
    %p271 = scmp.ne.s32.totalorder %s259, %s260
    %p272 = scmp.eq.s32.totalorder %s28, 1
    %p273 = por %p271, %p272
    %p275 = scmp.ne.s32.totalorder %s260, %s274
    %p276 = scmp.eq.s32.totalorder %s28, 0
    %p277 = por %p275, %p276
    %s279 = sadd.s32 %s278, 1
    %p282 = scmp.eq.s32.totalorder %s22, 1
    %p283 = scmp.ne.s32.totalorder %s278, %s280
    %p284 = scmp.eq.s32.totalorder %s22, 0
    %p285 = por %p283, %p284
    %p286 = scmp.ne.s32.totalorder %s278, %s280
    %p287 = scmp.eq.s32.totalorder %s27, 1
    %p288 = por %p286, %p287
    %p289 = scmp.ne.s32.totalorder %s280, %s281
    %p290 = scmp.eq.s32.totalorder %s27, 0
    %p291 = por %p289, %p290
    %p292 = scmp.ne.s32.totalorder %s280, %s281
    %p293 = scmp.eq.s32.totalorder %s28, 1
    %p294 = por %p292, %p293
    %p296 = scmp.ne.s32.totalorder %s281, %s295
    %p297 = scmp.eq.s32.totalorder %s28, 0
    %p298 = por %p296, %p297
    %s300 = sadd.s32 %s299, 1
    %p303 = scmp.eq.s32.totalorder %s22, 1
    %p304 = scmp.ne.s32.totalorder %s299, %s301
    %p305 = scmp.eq.s32.totalorder %s22, 0
    %p306 = por %p304, %p305
    %p307 = scmp.ne.s32.totalorder %s299, %s301
    %p308 = scmp.eq.s32.totalorder %s27, 1
    %p309 = por %p307, %p308
    %p310 = scmp.ne.s32.totalorder %s301, %s302
    %p311 = scmp.eq.s32.totalorder %s27, 0
    %p312 = por %p310, %p311
    %p313 = scmp.ne.s32.totalorder %s301, %s302
    %p314 = scmp.eq.s32.totalorder %s28, 1
    %p315 = por %p313, %p314
    %p317 = scmp.ne.s32.totalorder %s302, %s316
    %p318 = scmp.eq.s32.totalorder %s28, 0
    %p319 = por %p317, %p318
    %s321 = sadd.s32 %s320, 1
    %p324 = scmp.eq.s32.totalorder %s22, 1
    %p325 = scmp.ne.s32.totalorder %s320, %s322
    %p326 = scmp.eq.s32.totalorder %s22, 0
    %p327 = por %p325, %p326
    %p328 = scmp.ne.s32.totalorder %s320, %s322
    %p329 = scmp.eq.s32.totalorder %s27, 1
    %p330 = por %p328, %p329
    %p331 = scmp.ne.s32.totalorder %s322, %s323
    %p332 = scmp.eq.s32.totalorder %s27, 0
    %p333 = por %p331, %p332
    %p334 = scmp.ne.s32.totalorder %s322, %s323
    %p335 = scmp.eq.s32.totalorder %s28, 1
    %p336 = por %p334, %p335
    %p338 = scmp.ne.s32.totalorder %s323, %s337
    %p339 = scmp.eq.s32.totalorder %s28, 0
    %p340 = por %p338, %p339
    %s341 = ssub.s32 %s29, %s41
    %s342 = ssub.s32 %s30, %s37
    %s343 = sor.u32 %s341, %s342
    %p344 = scmp.eq.s32.totalorder %s343, 0
    %s346 = sadd.s32 %s345, 1
    %s347 = scalar_select %p344, %s345, %s346
    %p350 = pneg %p344
    %p351 = scmp.eq.s32.totalorder %s22, 1
    %p352 = por %p350, %p351
    %p353 = scmp.ne.s32.totalorder %s345, %s348
    %p354 = scmp.eq.s32.totalorder %s22, 0
    %p355 = por %p353, %p354
    %p356 = scmp.ne.s32.totalorder %s345, %s348
    %p357 = scmp.eq.s32.totalorder %s27, 1
    %p358 = por %p356, %p357
    %p359 = scmp.ne.s32.totalorder %s348, %s349
    %p360 = scmp.eq.s32.totalorder %s27, 0
    %p361 = por %p359, %p360
    %p362 = scmp.ne.s32.totalorder %s348, %s349
    %p363 = scmp.eq.s32.totalorder %s28, 1
    %p364 = por %p362, %p363
    %p366 = scmp.ne.s32.totalorder %s349, %s365
    %p367 = scmp.eq.s32.totalorder %s28, 0
    %p368 = por %p366, %p367
    %s369 = ssub.s32 %s29, %s41
    %s370 = ssub.s32 %s30, %s37
    %s371 = sor.u32 %s369, %s370
    %p372 = scmp.eq.s32.totalorder %s371, 0
    %s374 = sadd.s32 %s373, 1
    %s375 = scalar_select %p372, %s373, %s374
    %p378 = pneg %p372
    %p379 = scmp.eq.s32.totalorder %s22, 1
    %p380 = por %p378, %p379
    %p381 = scmp.ne.s32.totalorder %s373, %s376
    %p382 = scmp.eq.s32.totalorder %s22, 0
    %p383 = por %p381, %p382
    %p384 = scmp.ne.s32.totalorder %s373, %s376
    %p385 = scmp.eq.s32.totalorder %s27, 1
    %p386 = por %p384, %p385
    %p387 = scmp.ne.s32.totalorder %s376, %s377
    %p388 = scmp.eq.s32.totalorder %s27, 0
    %p389 = por %p387, %p388
    %p390 = scmp.ne.s32.totalorder %s376, %s377
    %p391 = scmp.eq.s32.totalorder %s28, 1
    %p392 = por %p390, %p391
    %p394 = scmp.ne.s32.totalorder %s377, %s393
    %p395 = scmp.eq.s32.totalorder %s28, 0
    %p396 = por %p394, %p395
    %s397 = ssub.s32 %s29, %s41
    %s398 = ssub.s32 %s30, %s37
    %s399 = sor.u32 %s397, %s398
    %p400 = scmp.eq.s32.totalorder %s399, 0
    %s402 = sadd.s32 %s401, 1
    %s403 = scalar_select %p400, %s401, %s402
    %p406 = pneg %p400
    %p407 = scmp.eq.s32.totalorder %s22, 1
    %p408 = por %p406, %p407
    %p409 = scmp.ne.s32.totalorder %s401, %s404
    %p410 = scmp.eq.s32.totalorder %s22, 0
    %p411 = por %p409, %p410
    %p412 = scmp.ne.s32.totalorder %s401, %s404
    %p413 = scmp.eq.s32.totalorder %s27, 1
    %p414 = por %p412, %p413
    %p415 = scmp.ne.s32.totalorder %s404, %s405
    %p416 = scmp.eq.s32.totalorder %s27, 0
    %p417 = por %p415, %p416
    %p418 = scmp.ne.s32.totalorder %s404, %s405
    %p419 = scmp.eq.s32.totalorder %s28, 1
    %p420 = por %p418, %p419
    %p422 = scmp.ne.s32.totalorder %s405, %s421
    %p423 = scmp.eq.s32.totalorder %s28, 0
    %p424 = por %p422, %p423
    %p425 = scmp.le.s32.totalorder 1, %s22
    %p426 = scmp.lt.s32.totalorder %s22, 3
    %p427 = pnand %p425, %p426
    %p428 = pneg %p427
    // Predicated region
    $region9: #{frescat_corner_forward.2} parent=5 // pred_check
      _
    $region10: #{frescat_corner_forward.2} parent=5 // pred_check_branch
      %430 = sbr.rel (%p427) target = $region12
    $region11: #{frescat_corner_forward.2} parent=5 // pred_region
      %s431 = ssub.s32 %s22, 1
      // Predicated region
      $region13: #{frescat_corner_forward.2} parent=11 // pred_check
        %p432 = pneg %p116
      $region14: #{frescat_corner_forward.2} parent=11 // pred_check_branch
        %434 = sbr.rel (%p432) target = $region16
      $region15: #{frescat_corner_forward.2} parent=11 // pred_region
        %s435 = smul.u32 2, %s32
        %p436 = scmp.lt.s32.totalorder %s435, 1
        %s437 = scalar_select %p436, %s435, 1
        %s438 = scalar_lea.vmem %s2, %s437
        %s439 = smul.u32 2, %s32
      $region16: #{frescat_corner_forward.2} parent=11 // pred_fallthru
        _
      // Predicated region
      $region17: #{frescat_corner_forward.2} parent=11 // pred_check
        %p440 = pneg %p165
      $region18: #{frescat_corner_forward.2} parent=11 // pred_check_branch
        %442 = sbr.rel (%p440) target = $region20
      $region19: #{frescat_corner_forward.2} parent=11 // pred_region
        _
      $region20: #{frescat_corner_forward.2} parent=11 // pred_fallthru
        _
      // Predicated region
      $region21: #{frescat_corner_forward.2} parent=11 // pred_check
        %p443 = pneg %p186
      $region22: #{frescat_corner_forward.2} parent=11 // pred_check_branch
        %445 = sbr.rel (%p443) target = $region24
      $region23: #{frescat_corner_forward.2} parent=11 // pred_region
        _
      $region24: #{frescat_corner_forward.2} parent=11 // pred_fallthru
        _
      // Predicated region
      $region25: #{frescat_corner_forward.2} parent=11 // pred_check
        %p446 = pneg %p207
      $region26: #{frescat_corner_forward.2} parent=11 // pred_check_branch
        %448 = sbr.rel (%p446) target = $region28
      $region27: #{frescat_corner_forward.2} parent=11 // pred_region
        _
      $region28: #{frescat_corner_forward.2} parent=11 // pred_fallthru
        _
      // Predicated region
      $region29: #{frescat_corner_forward.2} parent=11 // pred_check
        %p449 = pneg %p228
      $region30: #{frescat_corner_forward.2} parent=11 // pred_check_branch
        %451 = sbr.rel (%p449) target = $region32
      $region31: #{frescat_corner_forward.2} parent=11 // pred_region
        _
      $region32: #{frescat_corner_forward.2} parent=11 // pred_fallthru
        _
      // Predicated region
      $region33: #{frescat_corner_forward.2} parent=11 // pred_check
        %p452 = pneg %p249
      $region34: #{frescat_corner_forward.2} parent=11 // pred_check_branch
        %454 = sbr.rel (%p452) target = $region36
      $region35: #{frescat_corner_forward.2} parent=11 // pred_region
        _
      $region36: #{frescat_corner_forward.2} parent=11 // pred_fallthru
        _
      // Predicated region
      $region37: #{frescat_corner_forward.2} parent=11 // pred_check
        %p455 = pneg %p270
      $region38: #{frescat_corner_forward.2} parent=11 // pred_check_branch
        %457 = sbr.rel (%p455) target = $region40
      $region39: #{frescat_corner_forward.2} parent=11 // pred_region
        _
      $region40: #{frescat_corner_forward.2} parent=11 // pred_fallthru
        _
      // Predicated region
      $region41: #{frescat_corner_forward.2} parent=11 // pred_check
        %p458 = pneg %p291
      $region42: #{frescat_corner_forward.2} parent=11 // pred_check_branch
        %460 = sbr.rel (%p458) target = $region44
      $region43: #{frescat_corner_forward.2} parent=11 // pred_region
        _
      $region44: #{frescat_corner_forward.2} parent=11 // pred_fallthru
        _
      // Predicated region
      $region45: #{frescat_corner_forward.2} parent=11 // pred_check
        %p461 = pneg %p312
      $region46: #{frescat_corner_forward.2} parent=11 // pred_check_branch
        %463 = sbr.rel (%p461) target = $region48
      $region47: #{frescat_corner_forward.2} parent=11 // pred_region
        _
      $region48: #{frescat_corner_forward.2} parent=11 // pred_fallthru
        _
      // Predicated region
      $region49: #{frescat_corner_forward.2} parent=11 // pred_check
        %p464 = pneg %p333
      $region50: #{frescat_corner_forward.2} parent=11 // pred_check_branch
        %466 = sbr.rel (%p464) target = $region52
      $region51: #{frescat_corner_forward.2} parent=11 // pred_region
        _
      $region52: #{frescat_corner_forward.2} parent=11 // pred_fallthru
        _
    $region12: #{frescat_corner_forward.2} parent=5 // pred_fallthru
      _
    %p467 = scmp.lt.s32.totalorder %s22, 2
    // Predicated region
    $region53: #{frescat_corner_forward.2} parent=5 // pred_check
      %p468 = pneg %p467
    $region54: #{frescat_corner_forward.2} parent=5 // pred_check_branch
      %470 = sbr.rel (%p468) target = $region56
    $region55: #{frescat_corner_forward.2} parent=5 // pred_region
      // Predicated region
      $region57: #{frescat_corner_forward.2} parent=55 // pred_check
        %p471 = pneg %p56
      $region58: #{frescat_corner_forward.2} parent=55 // pred_check_branch
        %473 = sbr.rel (%p471) target = $region60
      $region59: #{frescat_corner_forward.2} parent=55 // pred_region
        %s474 = smul.u32 2, %s30
        %p475 = scmp.lt.s32.totalorder %s29, 1
        %s476 = scalar_select %p475, %s29, 1
        %p477 = scmp.lt.s32.totalorder %s474, 1
        %s478 = scalar_select %p477, %s474, 1
        %s479 = smul.addr %s476, 2
        %s480 = sadd.s32 %s478, %s479
        %s481 = smul.addr %s480, 4
        %s482 = scalar_lea.vmem %s0, %s481
        %s483 = smul.u32 2, %s30
      $region60: #{frescat_corner_forward.2} parent=55 // pred_fallthru
        _
      // Predicated region
      $region61: #{frescat_corner_forward.2} parent=55 // pred_check
        %p484 = pneg %p84
      $region62: #{frescat_corner_forward.2} parent=55 // pred_check_branch
        %486 = sbr.rel (%p484) target = $region64
      $region63: #{frescat_corner_forward.2} parent=55 // pred_region
        %s487 = smul.u32 2, %s30
        %p488 = scmp.lt.s32.totalorder %s29, 1
        %s489 = scalar_select %p488, %s29, 1
        %p490 = scmp.lt.s32.totalorder %s487, 1
        %s491 = scalar_select %p490, %s487, 1
        %s492 = smul.addr %s489, 2
        %s493 = sadd.s32 %s491, %s492
        %s494 = smul.addr %s493, 4
        %s495 = scalar_lea.vmem %s1, %s494
        %s496 = smul.u32 2, %s30
      $region64: #{frescat_corner_forward.2} parent=55 // pred_fallthru
        _
      // Predicated region
      $region65: #{frescat_corner_forward.2} parent=55 // pred_check
        %p497 = pneg %p138
      $region66: #{frescat_corner_forward.2} parent=55 // pred_check_branch
        %499 = sbr.rel (%p497) target = $region68
      $region67: #{frescat_corner_forward.2} parent=55 // pred_region
        %s500 = smul.u32 2, %s30
        %p501 = scmp.lt.s32.totalorder %s29, 1
        %s502 = scalar_select %p501, %s29, 1
        %p503 = scmp.lt.s32.totalorder %s500, 1
        %s504 = scalar_select %p503, %s500, 1
        %s505 = smul.addr %s502, 10
        %s506 = sadd.s32 %s504, %s505
        %s507 = smul.addr %s506, 8
        %s508 = scalar_lea.vmem %s3, %s507
        %s509 = smul.u32 2, %s30
      $region68: #{frescat_corner_forward.2} parent=55 // pred_fallthru
        _
    $region56: #{frescat_corner_forward.2} parent=5 // pred_fallthru
      _
    %p510 = scmp.le.s32.totalorder 1, %s22
    %p511 = scmp.lt.s32.totalorder %s22, 3
    %p512 = pnand %p510, %p511
    %p513 = pneg %p512
    // Predicated region
    $region69: #{frescat_corner_forward.2} parent=5 // pred_check
      _
    $region70: #{frescat_corner_forward.2} parent=5 // pred_check_branch
      %515 = sbr.rel (%p512) target = $region72
    $region71: #{frescat_corner_forward.2} parent=5 // pred_region
      %s516 = ssub.s32 %s22, 1
      %s517 = smul.u32 2, %s32
      %p518 = scmp.lt.s32.totalorder %s31, 1
      %s519 = scalar_select %p518, %s31, 1
      %p520 = scmp.lt.s32.totalorder %s517, 1
      %s521 = scalar_select %p520, %s517, 1
      %s522 = smul.addr %s519, 2
      %s523 = sadd.s32 %s521, %s522
      %s524 = smul.addr %s523, 4
      %s525 = scalar_lea.vmem %s0, %s524
      %p526 = pneg %p62
      %p527 = pneg %p59
      %s528 = smul.u32 2, %s32
      %p529 = scmp.lt.s32.totalorder %s31, 1
      %s530 = scalar_select %p529, %s31, 1
      %p531 = scmp.lt.s32.totalorder %s528, 1
      %s532 = scalar_select %p531, %s528, 1
      %s533 = smul.addr %s530, 2
      %s534 = sadd.s32 %s532, %s533
      %s535 = smul.addr %s534, 4
      %s536 = scalar_lea.vmem %s1, %s535
      %p537 = pneg %p90
      %p538 = pneg %p87
      %s539 = smul.u32 2, %s32
      %p540 = scmp.lt.s32.totalorder %s539, 1
      %s541 = scalar_select %p540, %s539, 1
      %s542 = scalar_lea.vmem %s2, %s541
      %p543 = pneg %p116
      %p544 = pneg %p113
      %s545 = smul.u32 2, %s32
      %p546 = scmp.lt.s32.totalorder %s31, 1
      %s547 = scalar_select %p546, %s31, 1
      %p548 = scmp.lt.s32.totalorder %s545, 1
      %s549 = scalar_select %p548, %s545, 1
      %s550 = smul.addr %s547, 10
      %s551 = sadd.s32 %s549, %s550
      %s552 = smul.addr %s551, 8
      %s553 = scalar_lea.vmem %s3, %s552
      %p554 = pneg %p144
      %p555 = pneg %p141
      %p556 = pneg %p165
      %p557 = pneg %p162
      %p558 = pneg %p186
      %p559 = pneg %p183
      %p560 = pneg %p207
      %p561 = pneg %p204
      %p562 = pneg %p228
      %p563 = pneg %p225
      %p564 = pneg %p249
      %p565 = pneg %p246
      %p566 = pneg %p270
      %p567 = pneg %p267
      %p568 = pneg %p291
      %p569 = pneg %p288
      %p570 = pneg %p312
      %p571 = pneg %p309
      %p572 = pneg %p333
      %p573 = pneg %p330
      %p574 = pneg %p361
      %p575 = pneg %p358
      %s576 = smul.u32 2, %s32
      %p577 = scmp.lt.s32.totalorder %s31, 1
      %s578 = scalar_select %p577, %s31, 1
      %p579 = scmp.lt.s32.totalorder %s576, 1
      %s580 = scalar_select %p579, %s576, 1
      %s581 = smul.addr %s578, 2
      %s582 = sadd.s32 %s580, %s581
      %s583 = smul.addr %s582, 4
      %s584 = scalar_lea.vmem %s13, %s583
      %p585 = pneg %p389
      %p586 = pneg %p386
      %s587 = smul.u32 2, %s32
      %p588 = scmp.lt.s32.totalorder %s31, 1
      %s589 = scalar_select %p588, %s31, 1
      %p590 = scmp.lt.s32.totalorder %s587, 1
      %s591 = scalar_select %p590, %s587, 1
      %s592 = smul.addr %s589, 2
      %s593 = sadd.s32 %s591, %s592
      %s594 = smul.addr %s593, 4
      %s595 = scalar_lea.vmem %s14, %s594
      %p596 = pneg %p417
      %p597 = pneg %p414
      %s598 = smul.u32 2, %s32
      %p599 = scmp.lt.s32.totalorder %s31, 1
      %s600 = scalar_select %p599, %s31, 1
      %p601 = scmp.lt.s32.totalorder %s598, 1
      %s602 = scalar_select %p601, %s598, 1
      %s603 = smul.addr %s600, 4
      %s604 = sadd.s32 %s602, %s603
      %s605 = smul.addr %s604, 8
      %s606 = scalar_lea.vmem %s15, %s605
      %s607 = smul.u32 2, %s32
      %p608 = scmp.lt.s32.totalorder %s31, 1
      %s609 = scalar_select %p608, %s31, 1
      %p610 = scmp.lt.s32.totalorder %s607, 1
      %s611 = scalar_select %p610, %s607, 1
      %s612 = smul.addr %s609, 2
      %s613 = sadd.s32 %s611, %s612
      %s614 = smul.addr %s613, 4
      %s615 = scalar_lea.vmem %s0, %s614
      %s616 = smul.u32 2, %s32
      %s617 = smul.u32 2, %s32
      %p618 = scmp.lt.s32.totalorder %s31, 1
      %s619 = scalar_select %p618, %s31, 1
      %p620 = scmp.lt.s32.totalorder %s617, 1
      %s621 = scalar_select %p620, %s617, 1
      %s622 = smul.addr %s619, 2
      %s623 = sadd.s32 %s621, %s622
      %s624 = smul.addr %s623, 4
      %s625 = scalar_lea.vmem %s1, %s624
      %s626 = smul.u32 2, %s32
      %s627 = smul.u32 2, %s32
      %p628 = scmp.lt.s32.totalorder %s627, 1
      %s629 = scalar_select %p628, %s627, 1
      %s630 = scalar_lea.vmem %s2, %s629
      %s631 = smul.u32 2, %s32
      %s632 = smul.u32 2, %s32
      %p633 = scmp.lt.s32.totalorder %s31, 1
      %s634 = scalar_select %p633, %s31, 1
      %p635 = scmp.lt.s32.totalorder %s632, 1
      %s636 = scalar_select %p635, %s632, 1
      %s637 = smul.addr %s634, 10
      %s638 = sadd.s32 %s636, %s637
      %s639 = smul.addr %s638, 8
      %s640 = scalar_lea.vmem %s3, %s639
      %s641 = smul.u32 2, %s32
      %s642 = smul.u32 2, %s32
      %p643 = scmp.lt.s32.totalorder %s31, 1
      %s644 = scalar_select %p643, %s31, 1
      %p645 = scmp.lt.s32.totalorder %s642, 1
      %s646 = scalar_select %p645, %s642, 1
      %s647 = smul.addr %s644, 2
      %s648 = sadd.s32 %s646, %s647
      %s649 = smul.addr %s648, 4
      %s650 = scalar_lea.vmem %s13, %s649
      %s651 = smul.u32 2, %s32
      %s652 = smul.u32 2, %s32
      %p653 = scmp.lt.s32.totalorder %s31, 1
      %s654 = scalar_select %p653, %s31, 1
      %p655 = scmp.lt.s32.totalorder %s652, 1
      %s656 = scalar_select %p655, %s652, 1
      %s657 = smul.addr %s654, 2
      %s658 = sadd.s32 %s656, %s657
      %s659 = smul.addr %s658, 4
      %s660 = scalar_lea.vmem %s14, %s659
      %s661 = smul.u32 2, %s32
      %s662 = smul.u32 2, %s32
      %p663 = scmp.lt.s32.totalorder %s31, 1
      %s664 = scalar_select %p663, %s31, 1
      %p665 = scmp.lt.s32.totalorder %s662, 1
      %s666 = scalar_select %p665, %s662, 1
      %s667 = smul.addr %s664, 4
      %s668 = sadd.s32 %s666, %s667
      %s669 = smul.addr %s668, 8
      %s670 = scalar_lea.vmem %s15, %s669
      %s671 = smul.u32 2, %s32
      %v672 = vld [vmem:[%s615] sm:$0xff]
      %v673 = vld [vmem:[%s625] sm:$0xff]
      %v674 = vld [vmem:[%s630] sm:$0x3]
      %v675 = vld [vmem:[%s4] sm:$0xf]
      %v676 = vld [vmem:[%s5] sm:$0xf]
      %678 = vset.pattern.permute.xlu0 0
      %679 = vperm.xlu0 %678, %v675
      %v680 = vpop.permute.xlu0 %679
      %v683 = vlaneseq
      %v684 = vshrl.u32 %v683, 7
      %v685 = vsub.s32 0, %v684
      %v686 = vrot.slane %v672, %v685
      %v687 = vlaneseq
      %v688 = vshrl.u32 %v687, 7
      %v689 = vsub.s32 4, %v688
      %v690 = vrot.slane %v672, %v689
      %v693 = vlaneseq
      %v694 = vshrl.u32 %v693, 7
      %v695 = vsub.s32 0, %v694
      %v696 = vrot.slane %v686, %v695
      %v697 = vlaneseq
      %v698 = vshrl.u32 %v697, 7
      %v699 = vsub.s32 0, %v698
      %v700 = vrot.slane %v690, %v699
      %v701 = vmul.f32 %v680, %v696
      %v702 = vmul.f32 %v680, %v700
      %703 = vset.pattern.permute.xlu0 1
      %704 = vperm.xlu0 %703, %v675
      %v705 = vpop.permute.xlu0 %704
      %v707 = vlaneseq
      %v708 = vshrl.u32 %v707, 7
      %v709 = vsub.s32 1, %v708
      %v710 = vrot.slane %v672, %v709
      %v711 = vlaneseq
      %v712 = vshrl.u32 %v711, 7
      %v713 = vsub.s32 5, %v712
      %v714 = vrot.slane %v672, %v713
      %v717 = vlaneseq
      %v718 = vshrl.u32 %v717, 7
      %v719 = vsub.s32 1, %v718
      %v720 = vrot.slane %v710, %v719
      %v721 = vlaneseq
      %v722 = vshrl.u32 %v721, 7
      %v723 = vsub.s32 1, %v722
      %v724 = vrot.slane %v714, %v723
      %v725 = vmul.f32 %v705, %v720
      %v726 = vmul.f32 %v705, %v724
      %v727 = vadd.f32 %v701, %v725
      %v728 = vadd.f32 %v702, %v726
      %729 = vset.pattern.permute.xlu0 2
      %730 = vperm.xlu0 %729, %v675
      %v731 = vpop.permute.xlu0 %730
      %v733 = vlaneseq
      %v734 = vshrl.u32 %v733, 7
      %v735 = vsub.s32 2, %v734
      %v736 = vrot.slane %v672, %v735
      %v737 = vlaneseq
      %v738 = vshrl.u32 %v737, 7
      %v739 = vsub.s32 6, %v738
      %v740 = vrot.slane %v672, %v739
      %v743 = vlaneseq
      %v744 = vshrl.u32 %v743, 7
      %v745 = vsub.s32 2, %v744
      %v746 = vrot.slane %v736, %v745
      %v747 = vlaneseq
      %v748 = vshrl.u32 %v747, 7
      %v749 = vsub.s32 2, %v748
      %v750 = vrot.slane %v740, %v749
      %v751 = vmul.f32 %v731, %v746
      %v752 = vmul.f32 %v731, %v750
      %v753 = vadd.f32 %v727, %v751
      %v754 = vadd.f32 %v728, %v752
      %755 = vset.pattern.permute.xlu0 3
      %756 = vperm.xlu0 %755, %v675
      %v757 = vpop.permute.xlu0 %756
      %v759 = vlaneseq
      %v760 = vshrl.u32 %v759, 7
      %v761 = vsub.s32 3, %v760
      %v762 = vrot.slane %v672, %v761
      %v763 = vlaneseq
      %v764 = vshrl.u32 %v763, 7
      %v765 = vsub.s32 7, %v764
      %v766 = vrot.slane %v672, %v765
      %v769 = vlaneseq
      %v770 = vshrl.u32 %v769, 7
      %v771 = vsub.s32 3, %v770
      %v772 = vrot.slane %v762, %v771
      %v773 = vlaneseq
      %v774 = vshrl.u32 %v773, 7
      %v775 = vsub.s32 3, %v774
      %v776 = vrot.slane %v766, %v775
      %v777 = vmul.f32 %v757, %v772
      %v778 = vmul.f32 %v757, %v776
      %v779 = vadd.f32 %v753, %v777
      %v780 = vadd.f32 %v754, %v778
      %782 = vset.pattern.permute.xlu0 0
      %783 = vperm.xlu0 %782, %v676
      %v784 = vpop.permute.xlu0 %783
      %v786 = vadd.f32 %v779, %v784
      %v787 = vadd.f32 %v780, %v784
      %vm788 = vcmp.gt.f32.partialorder %v786, 0.0
      %vm789 = vcmp.gt.f32.partialorder %v787, 0.0
      %v790 = vmul.f32 %v786, 0.1
      %v791 = vmul.f32 %v787, 0.1
      %v792 = vsel %vm788, %v786, %v790
      %v793 = vsel %vm789, %v787, %v791
      %v794 = vld [vmem:[%s6] sm:$0xf]
      %v795 = vld [vmem:[%s7] sm:$0xf]
      %797 = vset.pattern.permute.xlu0 0
      %798 = vperm.xlu0 %797, %v794
      %v799 = vpop.permute.xlu0 %798
      %v801 = vlaneseq
      %v802 = vshrl.u32 %v801, 7
      %v803 = vsub.s32 0, %v802
      %v804 = vrot.slane %v792, %v803
      %v805 = vlaneseq
      %v806 = vshrl.u32 %v805, 7
      %v807 = vsub.s32 0, %v806
      %v808 = vrot.slane %v793, %v807
      %v809 = vmul.f32 %v799, %v804
      %v810 = vmul.f32 %v799, %v808
      %811 = vset.pattern.permute.xlu0 1
      %812 = vperm.xlu0 %811, %v794
      %v813 = vpop.permute.xlu0 %812
      %v815 = vlaneseq
      %v816 = vshrl.u32 %v815, 7
      %v817 = vsub.s32 1, %v816
      %v818 = vrot.slane %v792, %v817
      %v819 = vlaneseq
      %v820 = vshrl.u32 %v819, 7
      %v821 = vsub.s32 1, %v820
      %v822 = vrot.slane %v793, %v821
      %v823 = vmul.f32 %v813, %v818
      %v824 = vmul.f32 %v813, %v822
      %v825 = vadd.f32 %v809, %v823
      %v826 = vadd.f32 %v810, %v824
      %827 = vset.pattern.permute.xlu0 2
      %828 = vperm.xlu0 %827, %v794
      %v829 = vpop.permute.xlu0 %828
      %v831 = vlaneseq
      %v832 = vshrl.u32 %v831, 7
      %v833 = vsub.s32 2, %v832
      %v834 = vrot.slane %v792, %v833
      %v835 = vlaneseq
      %v836 = vshrl.u32 %v835, 7
      %v837 = vsub.s32 2, %v836
      %v838 = vrot.slane %v793, %v837
      %v839 = vmul.f32 %v829, %v834
      %v840 = vmul.f32 %v829, %v838
      %v841 = vadd.f32 %v825, %v839
      %v842 = vadd.f32 %v826, %v840
      %843 = vset.pattern.permute.xlu0 3
      %844 = vperm.xlu0 %843, %v794
      %v845 = vpop.permute.xlu0 %844
      %v847 = vlaneseq
      %v848 = vshrl.u32 %v847, 7
      %v849 = vsub.s32 3, %v848
      %v850 = vrot.slane %v792, %v849
      %v851 = vlaneseq
      %v852 = vshrl.u32 %v851, 7
      %v853 = vsub.s32 3, %v852
      %v854 = vrot.slane %v793, %v853
      %v855 = vmul.f32 %v845, %v850
      %v856 = vmul.f32 %v845, %v854
      %v857 = vadd.f32 %v841, %v855
      %v858 = vadd.f32 %v842, %v856
      %860 = vset.pattern.permute.xlu0 0
      %861 = vperm.xlu0 %860, %v795
      %v862 = vpop.permute.xlu0 %861
      %v864 = vadd.f32 %v857, %v862
      %v865 = vadd.f32 %v858, %v862
      %v867 = vlaneseq
      %v868 = vshrl.u32 %v867, 7
      %v869 = vsub.s32 0, %v868
      %v870 = vrot.slane %v674, %v869
      %v871 = vlaneseq
      %v872 = vshrl.u32 %v871, 7
      %v873 = vsub.s32 1, %v872
      %v874 = vrot.slane %v674, %v873
      %v877 = vmul.f32 %v864, %v870
      %v878 = vmul.f32 %v865, %v874
      %v879 = vld [vmem:[%s8] sm:$0xf]
      %v880 = vld [vmem:[%s9] sm:$0xf]
      %882 = vset.pattern.permute.xlu0 0
      %883 = vperm.xlu0 %882, %v879
      %v884 = vpop.permute.xlu0 %883
      %v887 = vlaneseq
      %v888 = vshrl.u32 %v887, 7
      %v889 = vsub.s32 0, %v888
      %v890 = vrot.slane %v673, %v889
      %v891 = vlaneseq
      %v892 = vshrl.u32 %v891, 7
      %v893 = vsub.s32 4, %v892
      %v894 = vrot.slane %v673, %v893
      %v897 = vlaneseq
      %v898 = vshrl.u32 %v897, 7
      %v899 = vsub.s32 0, %v898
      %v900 = vrot.slane %v890, %v899
      %v901 = vlaneseq
      %v902 = vshrl.u32 %v901, 7
      %v903 = vsub.s32 0, %v902
      %v904 = vrot.slane %v894, %v903
      %v905 = vmul.f32 %v884, %v900
      %v906 = vmul.f32 %v884, %v904
      %907 = vset.pattern.permute.xlu0 1
      %908 = vperm.xlu0 %907, %v879
      %v909 = vpop.permute.xlu0 %908
      %v911 = vlaneseq
      %v912 = vshrl.u32 %v911, 7
      %v913 = vsub.s32 1, %v912
      %v914 = vrot.slane %v673, %v913
      %v915 = vlaneseq
      %v916 = vshrl.u32 %v915, 7
      %v917 = vsub.s32 5, %v916
      %v918 = vrot.slane %v673, %v917
      %v921 = vlaneseq
      %v922 = vshrl.u32 %v921, 7
      %v923 = vsub.s32 1, %v922
      %v924 = vrot.slane %v914, %v923
      %v925 = vlaneseq
      %v926 = vshrl.u32 %v925, 7
      %v927 = vsub.s32 1, %v926
      %v928 = vrot.slane %v918, %v927
      %v929 = vmul.f32 %v909, %v924
      %v930 = vmul.f32 %v909, %v928
      %v931 = vadd.f32 %v905, %v929
      %v932 = vadd.f32 %v906, %v930
      %933 = vset.pattern.permute.xlu0 2
      %934 = vperm.xlu0 %933, %v879
      %v935 = vpop.permute.xlu0 %934
      %v937 = vlaneseq
      %v938 = vshrl.u32 %v937, 7
      %v939 = vsub.s32 2, %v938
      %v940 = vrot.slane %v673, %v939
      %v941 = vlaneseq
      %v942 = vshrl.u32 %v941, 7
      %v943 = vsub.s32 6, %v942
      %v944 = vrot.slane %v673, %v943
      %v947 = vlaneseq
      %v948 = vshrl.u32 %v947, 7
      %v949 = vsub.s32 2, %v948
      %v950 = vrot.slane %v940, %v949
      %v951 = vlaneseq
      %v952 = vshrl.u32 %v951, 7
      %v953 = vsub.s32 2, %v952
      %v954 = vrot.slane %v944, %v953
      %v955 = vmul.f32 %v935, %v950
      %v956 = vmul.f32 %v935, %v954
      %v957 = vadd.f32 %v931, %v955
      %v958 = vadd.f32 %v932, %v956
      %959 = vset.pattern.permute.xlu0 3
      %960 = vperm.xlu0 %959, %v879
      %v961 = vpop.permute.xlu0 %960
      %v963 = vlaneseq
      %v964 = vshrl.u32 %v963, 7
      %v965 = vsub.s32 3, %v964
      %v966 = vrot.slane %v673, %v965
      %v967 = vlaneseq
      %v968 = vshrl.u32 %v967, 7
      %v969 = vsub.s32 7, %v968
      %v970 = vrot.slane %v673, %v969
      %v973 = vlaneseq
      %v974 = vshrl.u32 %v973, 7
      %v975 = vsub.s32 3, %v974
      %v976 = vrot.slane %v966, %v975
      %v977 = vlaneseq
      %v978 = vshrl.u32 %v977, 7
      %v979 = vsub.s32 3, %v978
      %v980 = vrot.slane %v970, %v979
      %v981 = vmul.f32 %v961, %v976
      %v982 = vmul.f32 %v961, %v980
      %v983 = vadd.f32 %v957, %v981
      %v984 = vadd.f32 %v958, %v982
      %986 = vset.pattern.permute.xlu0 0
      %987 = vperm.xlu0 %986, %v880
      %v988 = vpop.permute.xlu0 %987
      %v990 = vadd.f32 %v983, %v988
      %v991 = vadd.f32 %v984, %v988
      %vm992 = vcmp.gt.f32.partialorder %v990, 0.0
      %vm993 = vcmp.gt.f32.partialorder %v991, 0.0
      %v994 = vmul.f32 %v990, 0.1
      %v995 = vmul.f32 %v991, 0.1
      %v996 = vsel %vm992, %v990, %v994
      %v997 = vsel %vm993, %v991, %v995
      %v998 = vld [vmem:[%s10] sm:$0xf]
      %v999 = vld [vmem:[%s11] sm:$0xf]
      %1001 = vset.pattern.permute.xlu0 0
      %1002 = vperm.xlu0 %1001, %v998
      %v1003 = vpop.permute.xlu0 %1002
      %v1005 = vlaneseq
      %v1006 = vshrl.u32 %v1005, 7
      %v1007 = vsub.s32 0, %v1006
      %v1008 = vrot.slane %v996, %v1007
      %v1009 = vlaneseq
      %v1010 = vshrl.u32 %v1009, 7
      %v1011 = vsub.s32 0, %v1010
      %v1012 = vrot.slane %v997, %v1011
      %v1013 = vmul.f32 %v1003, %v1008
      %v1014 = vmul.f32 %v1003, %v1012
      %1015 = vset.pattern.permute.xlu0 1
      %1016 = vperm.xlu0 %1015, %v998
      %v1017 = vpop.permute.xlu0 %1016
      %v1019 = vlaneseq
      %v1020 = vshrl.u32 %v1019, 7
      %v1021 = vsub.s32 1, %v1020
      %v1022 = vrot.slane %v996, %v1021
      %v1023 = vlaneseq
      %v1024 = vshrl.u32 %v1023, 7
      %v1025 = vsub.s32 1, %v1024
      %v1026 = vrot.slane %v997, %v1025
      %v1027 = vmul.f32 %v1017, %v1022
      %v1028 = vmul.f32 %v1017, %v1026
      %v1029 = vadd.f32 %v1013, %v1027
      %v1030 = vadd.f32 %v1014, %v1028
      %1031 = vset.pattern.permute.xlu0 2
      %1032 = vperm.xlu0 %1031, %v998
      %v1033 = vpop.permute.xlu0 %1032
      %v1035 = vlaneseq
      %v1036 = vshrl.u32 %v1035, 7
      %v1037 = vsub.s32 2, %v1036
      %v1038 = vrot.slane %v996, %v1037
      %v1039 = vlaneseq
      %v1040 = vshrl.u32 %v1039, 7
      %v1041 = vsub.s32 2, %v1040
      %v1042 = vrot.slane %v997, %v1041
      %v1043 = vmul.f32 %v1033, %v1038
      %v1044 = vmul.f32 %v1033, %v1042
      %v1045 = vadd.f32 %v1029, %v1043
      %v1046 = vadd.f32 %v1030, %v1044
      %1047 = vset.pattern.permute.xlu0 3
      %1048 = vperm.xlu0 %1047, %v998
      %v1049 = vpop.permute.xlu0 %1048
      %v1051 = vlaneseq
      %v1052 = vshrl.u32 %v1051, 7
      %v1053 = vsub.s32 3, %v1052
      %v1054 = vrot.slane %v996, %v1053
      %v1055 = vlaneseq
      %v1056 = vshrl.u32 %v1055, 7
      %v1057 = vsub.s32 3, %v1056
      %v1058 = vrot.slane %v997, %v1057
      %v1059 = vmul.f32 %v1049, %v1054
      %v1060 = vmul.f32 %v1049, %v1058
      %v1061 = vadd.f32 %v1045, %v1059
      %v1062 = vadd.f32 %v1046, %v1060
      %1064 = vset.pattern.permute.xlu0 0
      %1065 = vperm.xlu0 %1064, %v999
      %v1066 = vpop.permute.xlu0 %1065
      %v1068 = vadd.f32 %v1061, %v1066
      %v1069 = vadd.f32 %v1062, %v1066
      %v1070 = vmul.f32 %v1068, %v870
      %v1071 = vmul.f32 %v1069, %v874
      %v1072 = vand.u32 2147483647, %v1070
      %vm1073 = vcmp.le.f32.partialorder %v1072, 0.7853982
      %vm1074 = vcmp.lt.s32.totalorder %v1070, 0
      %v1075 = vand.u32 %v1070, 2139095040
      %v1076 = vshrl.u32 %v1075, 23
      %v1077 = vsub.s32 %v1076, 127
      %v1078 = vand.u32 2147483647, %v1070
      %v1079 = vand.u32 %v1078, 8388607
      %v1080 = vor.u32 %v1079, 8388608
      %v1081 = vsub.s32 0, %v1080
      %v1082 = vadd.s32 %v1077, 1
      %vm1083 = vcmp.gt.s32.totalorder %v1082, 0
      %v1084 = vsel %vm1083, %v1082, 0
      %v1085 = vshrl.u32 %v1084, 5
      %v1086 = vand.u32 %v1084, 31
      %v1087 = vsub.s32 32, %v1086
      %v1088 = vshrl.u32 683565275, %v1087
      %v1089 = vshll.u32 683565275, %v1086
      %v1090 = vshrl.u32 2475754826, %v1087
      %v1091 = vor.u32 %v1089, %v1090
      %v1092 = vshll.u32 2475754826, %v1086
      %v1093 = vshrl.u32 2131351028, %v1087
      %v1094 = vor.u32 %v1092, %v1093
      %v1095 = vshll.u32 2131351028, %v1086
      %v1096 = vshrl.u32 2102212464, %v1087
      %v1097 = vor.u32 %v1095, %v1096
      %v1098 = vshll.u32 2102212464, %v1086
      %v1099 = vshrl.u32 920167782, %v1087
      %v1100 = vor.u32 %v1098, %v1099
      %v1101 = vshll.u32 920167782, %v1086
      %v1102 = vshrl.u32 1326507024, %v1087
      %v1103 = vor.u32 %v1101, %v1102
      %vm1104 = vcmp.lt.s32.totalorder %v1085, 1
      %vm1105 = vcmp.lt.s32.totalorder %v1085, 2
      %vm1106 = vcmp.lt.s32.totalorder %v1085, 3
      %vm1107 = vcmp.lt.s32.totalorder %v1085, 4
      %v1108 = vsel %vm1104, %v1088, %v1091
      %v1109 = vsel %vm1107, %v1097, 2102212464
      %v1110 = vsel %vm1106, %v1094, %v1109
      %v1111 = vsel %vm1105, %v1108, %v1110
      %v1112 = vsel %vm1104, %v1091, %v1094
      %v1113 = vsel %vm1107, %v1100, 920167782
      %v1114 = vsel %vm1106, %v1097, %v1113
      %v1115 = vsel %vm1105, %v1112, %v1114
      %v1116 = vsel %vm1104, %v1094, %v1097
      %v1117 = vsel %vm1107, %v1103, 1326507024
      %v1118 = vsel %vm1106, %v1100, %v1117
      %v1119 = vsel %vm1105, %v1116, %v1118
      %v1120 = vshll.u32 %v1080, 8
      %v1121 = vmul.u32.u64.compose %v1120, %v1119
      %v1122 = vextract.low.u32 %v1121
      %v1123 = vextract.high.u32 %v1121
      %v1124 = vmul.u32.u64.compose %v1120, %v1115
      %v1125 = vextract.low.u32 %v1124
      %v1126 = vextract.high.u32 %v1124
      %v1127 = vmul.u32 %v1120, %v1111
      %v1128 = vadd.s32 %v1123, %v1125
      %vm1129 = vc.u32 %v1123, %v1125
      %v1130 = vadd.s32 %v1126, 1
      %v1131 = vsel %vm1129, %v1130, %v1126
      %v1132 = vadd.s32 %v1127, %v1131
      %v1133 = vadd.s32 %v1132, 536870912
      %v1134 = vshrl.u32 %v1133, 30
      %v1135 = vshll.u32 %v1134, 30
      %v1136 = vsub.s32 %v1132, %v1135
      %vm1137 = vcmp.lt.s32.totalorder %v1136, 0
      %v1138 = vsub.s32 0, %v1136
      %v1139 = vsel %vm1137, %v1138, %v1136
      %v1140 = vclz %v1139
      %v1141 = vsub.s32 %v1140, 2
      %vm1142 = vcmp.gt.s32.totalorder 0, %v1141
      %v1143 = vsel %vm1142, 0, %v1141
      %v1144 = vsub.s32 32, %v1143
      %v1145 = vshll.u32 %v1136, %v1143
      %v1146 = vshrl.u32 %v1128, %v1144
      %v1147 = vor.u32 %v1145, %v1146
      %v1148 = vsub.s32 4294967266, %v1143
      %v1149 = vadd.s32 %v1148, 127
      %v1150 = vshll.u32 %v1149, 23
      %v1151 = vor.u32 4788187, %v1150
      %v1152 = vand.u32 2147483647, %v1151
      %v1154 = vcvt.s32.f32 %v1147
      %v1155 = vmul.f32 %v1154, %v1152
      %v1156 = vxor.u32 %v1155, 2147483648
      %v1157 = vsel %vm1074, %v1156, %v1155
      %v1158 = vsub.s32 4, %v1134
      %v1159 = vsel %vm1074, %v1158, %v1134
      %v1160 = vsel %vm1073, %v1070, %v1157
      %v1161 = vsel %vm1073, 0, %v1159
      %v1162 = vcosq.f32.pop %v1160
      %v1163 = vsinq.f32.pop %v1160
      %vm1164 = vweird.f32 %v1070
      %v1165 = vand.u32 %v1161, 3
      %vm1166 = vcmp.lt.s32.totalorder %v1165, 2
      %vm1167 = vcmp.eq.s32.totalorder %v1165, 0
      %v1168 = vxor.u32 %v1163, 2147483648
      %v1169 = vsel %vm1167, %v1162, %v1168
      %vm1170 = vcmp.eq.s32.totalorder %v1165, 2
      %v1171 = vxor.u32 %v1162, 2147483648
      %v1172 = vsel %vm1170, %v1171, %v1163
      %v1173 = vsel %vm1166, %v1169, %v1172
      %v1174 = vsel %vm1164, nan, %v1173
      %v1175 = vand.u32 2147483647, %v1071
      %vm1176 = vcmp.le.f32.partialorder %v1175, 0.7853982
      %vm1177 = vcmp.lt.s32.totalorder %v1071, 0
      %v1178 = vand.u32 %v1071, 2139095040
      %v1179 = vshrl.u32 %v1178, 23
      %v1180 = vsub.s32 %v1179, 127
      %v1181 = vand.u32 2147483647, %v1071
      %v1182 = vand.u32 %v1181, 8388607
      %v1183 = vor.u32 %v1182, 8388608
      %v1184 = vsub.s32 0, %v1183
      %v1185 = vadd.s32 %v1180, 1
      %vm1186 = vcmp.gt.s32.totalorder %v1185, 0
      %v1187 = vsel %vm1186, %v1185, 0
      %v1188 = vshrl.u32 %v1187, 5
      %v1189 = vand.u32 %v1187, 31
      %v1190 = vsub.s32 32, %v1189
      %v1191 = vshrl.u32 683565275, %v1190
      %v1192 = vshll.u32 683565275, %v1189
      %v1193 = vshrl.u32 2475754826, %v1190
      %v1194 = vor.u32 %v1192, %v1193
      %v1195 = vshll.u32 2475754826, %v1189
      %v1196 = vshrl.u32 2131351028, %v1190
      %v1197 = vor.u32 %v1195, %v1196
      %v1198 = vshll.u32 2131351028, %v1189
      %v1199 = vshrl.u32 2102212464, %v1190
      %v1200 = vor.u32 %v1198, %v1199
      %v1201 = vshll.u32 2102212464, %v1189
      %v1202 = vshrl.u32 920167782, %v1190
      %v1203 = vor.u32 %v1201, %v1202
      %v1204 = vshll.u32 920167782, %v1189
      %v1205 = vshrl.u32 1326507024, %v1190
      %v1206 = vor.u32 %v1204, %v1205
      %vm1207 = vcmp.lt.s32.totalorder %v1188, 1
      %vm1208 = vcmp.lt.s32.totalorder %v1188, 2
      %vm1209 = vcmp.lt.s32.totalorder %v1188, 3
      %vm1210 = vcmp.lt.s32.totalorder %v1188, 4
      %v1211 = vsel %vm1207, %v1191, %v1194
      %v1212 = vsel %vm1210, %v1200, 2102212464
      %v1213 = vsel %vm1209, %v1197, %v1212
      %v1214 = vsel %vm1208, %v1211, %v1213
      %v1215 = vsel %vm1207, %v1194, %v1197
      %v1216 = vsel %vm1210, %v1203, 920167782
      %v1217 = vsel %vm1209, %v1200, %v1216
      %v1218 = vsel %vm1208, %v1215, %v1217
      %v1219 = vsel %vm1207, %v1197, %v1200
      %v1220 = vsel %vm1210, %v1206, 1326507024
      %v1221 = vsel %vm1209, %v1203, %v1220
      %v1222 = vsel %vm1208, %v1219, %v1221
      %v1223 = vshll.u32 %v1183, 8
      %v1224 = vmul.u32.u64.compose %v1223, %v1222
      %v1225 = vextract.low.u32 %v1224
      %v1226 = vextract.high.u32 %v1224
      %v1227 = vmul.u32.u64.compose %v1223, %v1218
      %v1228 = vextract.low.u32 %v1227
      %v1229 = vextract.high.u32 %v1227
      %v1230 = vmul.u32 %v1223, %v1214
      %v1231 = vadd.s32 %v1226, %v1228
      %vm1232 = vc.u32 %v1226, %v1228
      %v1233 = vadd.s32 %v1229, 1
      %v1234 = vsel %vm1232, %v1233, %v1229
      %v1235 = vadd.s32 %v1230, %v1234
      %v1236 = vadd.s32 %v1235, 536870912
      %v1237 = vshrl.u32 %v1236, 30
      %v1238 = vshll.u32 %v1237, 30
      %v1239 = vsub.s32 %v1235, %v1238
      %vm1240 = vcmp.lt.s32.totalorder %v1239, 0
      %v1241 = vsub.s32 0, %v1239
      %v1242 = vsel %vm1240, %v1241, %v1239
      %v1243 = vclz %v1242
      %v1244 = vsub.s32 %v1243, 2
      %vm1245 = vcmp.gt.s32.totalorder 0, %v1244
      %v1246 = vsel %vm1245, 0, %v1244
      %v1247 = vsub.s32 32, %v1246
      %v1248 = vshll.u32 %v1239, %v1246
      %v1249 = vshrl.u32 %v1231, %v1247
      %v1250 = vor.u32 %v1248, %v1249
      %v1251 = vsub.s32 4294967266, %v1246
      %v1252 = vadd.s32 %v1251, 127
      %v1253 = vshll.u32 %v1252, 23
      %v1254 = vor.u32 4788187, %v1253
      %v1255 = vand.u32 2147483647, %v1254
      %v1257 = vcvt.s32.f32 %v1250
      %v1258 = vmul.f32 %v1257, %v1255
      %v1259 = vxor.u32 %v1258, 2147483648
      %v1260 = vsel %vm1177, %v1259, %v1258
      %v1261 = vsub.s32 4, %v1237
      %v1262 = vsel %vm1177, %v1261, %v1237
      %v1263 = vsel %vm1176, %v1071, %v1260
      %v1264 = vsel %vm1176, 0, %v1262
      %v1265 = vcosq.f32.pop %v1263
      %v1266 = vsinq.f32.pop %v1263
      %vm1267 = vweird.f32 %v1071
      %v1268 = vand.u32 %v1264, 3
      %vm1269 = vcmp.lt.s32.totalorder %v1268, 2
      %vm1270 = vcmp.eq.s32.totalorder %v1268, 0
      %v1271 = vxor.u32 %v1266, 2147483648
      %v1272 = vsel %vm1270, %v1265, %v1271
      %vm1273 = vcmp.eq.s32.totalorder %v1268, 2
      %v1274 = vxor.u32 %v1265, 2147483648
      %v1275 = vsel %vm1273, %v1274, %v1266
      %v1276 = vsel %vm1269, %v1272, %v1275
      %v1277 = vsel %vm1267, nan, %v1276
      %v1278 = vmul.f32 %v877, %v1174
      %v1279 = vmul.f32 %v878, %v1277
      %v1282 = vcombine.low %v1278, %v1279
      %1284 = vst [vmem:[%s650] sm:$0xff] %v1282
      %v1285 = vand.u32 2147483647, %v1070
      %vm1286 = vcmp.le.f32.partialorder %v1285, 0.7853982
      %vm1287 = vcmp.lt.s32.totalorder %v1070, 0
      %v1288 = vand.u32 %v1070, 2139095040
      %v1289 = vshrl.u32 %v1288, 23
      %v1290 = vsub.s32 %v1289, 127
      %v1291 = vand.u32 2147483647, %v1070
      %v1292 = vand.u32 %v1291, 8388607
      %v1293 = vor.u32 %v1292, 8388608
      %v1294 = vsub.s32 0, %v1293
      %v1295 = vadd.s32 %v1290, 1
      %vm1296 = vcmp.gt.s32.totalorder %v1295, 0
      %v1297 = vsel %vm1296, %v1295, 0
      %v1298 = vshrl.u32 %v1297, 5
      %v1299 = vand.u32 %v1297, 31
      %v1300 = vsub.s32 32, %v1299
      %v1301 = vshrl.u32 683565275, %v1300
      %v1302 = vshll.u32 683565275, %v1299
      %v1303 = vshrl.u32 2475754826, %v1300
      %v1304 = vor.u32 %v1302, %v1303
      %v1305 = vshll.u32 2475754826, %v1299
      %v1306 = vshrl.u32 2131351028, %v1300
      %v1307 = vor.u32 %v1305, %v1306
      %v1308 = vshll.u32 2131351028, %v1299
      %v1309 = vshrl.u32 2102212464, %v1300
      %v1310 = vor.u32 %v1308, %v1309
      %v1311 = vshll.u32 2102212464, %v1299
      %v1312 = vshrl.u32 920167782, %v1300
      %v1313 = vor.u32 %v1311, %v1312
      %v1314 = vshll.u32 920167782, %v1299
      %v1315 = vshrl.u32 1326507024, %v1300
      %v1316 = vor.u32 %v1314, %v1315
      %vm1317 = vcmp.lt.s32.totalorder %v1298, 1
      %vm1318 = vcmp.lt.s32.totalorder %v1298, 2
      %vm1319 = vcmp.lt.s32.totalorder %v1298, 3
      %vm1320 = vcmp.lt.s32.totalorder %v1298, 4
      %v1321 = vsel %vm1317, %v1301, %v1304
      %v1322 = vsel %vm1320, %v1310, 2102212464
      %v1323 = vsel %vm1319, %v1307, %v1322
      %v1324 = vsel %vm1318, %v1321, %v1323
      %v1325 = vsel %vm1317, %v1304, %v1307
      %v1326 = vsel %vm1320, %v1313, 920167782
      %v1327 = vsel %vm1319, %v1310, %v1326
      %v1328 = vsel %vm1318, %v1325, %v1327
      %v1329 = vsel %vm1317, %v1307, %v1310
      %v1330 = vsel %vm1320, %v1316, 1326507024
      %v1331 = vsel %vm1319, %v1313, %v1330
      %v1332 = vsel %vm1318, %v1329, %v1331
      %v1333 = vshll.u32 %v1293, 8
      %v1334 = vmul.u32.u64.compose %v1333, %v1332
      %v1335 = vextract.low.u32 %v1334
      %v1336 = vextract.high.u32 %v1334
      %v1337 = vmul.u32.u64.compose %v1333, %v1328
      %v1338 = vextract.low.u32 %v1337
      %v1339 = vextract.high.u32 %v1337
      %v1340 = vmul.u32 %v1333, %v1324
      %v1341 = vadd.s32 %v1336, %v1338
      %vm1342 = vc.u32 %v1336, %v1338
      %v1343 = vadd.s32 %v1339, 1
      %v1344 = vsel %vm1342, %v1343, %v1339
      %v1345 = vadd.s32 %v1340, %v1344
      %v1346 = vadd.s32 %v1345, 536870912
      %v1347 = vshrl.u32 %v1346, 30
      %v1348 = vshll.u32 %v1347, 30
      %v1349 = vsub.s32 %v1345, %v1348
      %vm1350 = vcmp.lt.s32.totalorder %v1349, 0
      %v1351 = vsub.s32 0, %v1349
      %v1352 = vsel %vm1350, %v1351, %v1349
      %v1353 = vclz %v1352
      %v1354 = vsub.s32 %v1353, 2
      %vm1355 = vcmp.gt.s32.totalorder 0, %v1354
      %v1356 = vsel %vm1355, 0, %v1354
      %v1357 = vsub.s32 32, %v1356
      %v1358 = vshll.u32 %v1349, %v1356
      %v1359 = vshrl.u32 %v1341, %v1357
      %v1360 = vor.u32 %v1358, %v1359
      %v1361 = vsub.s32 4294967266, %v1356
      %v1362 = vadd.s32 %v1361, 127
      %v1363 = vshll.u32 %v1362, 23
      %v1364 = vor.u32 4788187, %v1363
      %v1365 = vand.u32 2147483647, %v1364
      %v1367 = vcvt.s32.f32 %v1360
      %v1368 = vmul.f32 %v1367, %v1365
      %v1369 = vxor.u32 %v1368, 2147483648
      %v1370 = vsel %vm1287, %v1369, %v1368
      %v1371 = vsub.s32 4, %v1347
      %v1372 = vsel %vm1287, %v1371, %v1347
      %v1373 = vsel %vm1286, %v1070, %v1370
      %v1374 = vsel %vm1286, 0, %v1372
      %v1375 = vcosq.f32.pop %v1373
      %v1376 = vsinq.f32.pop %v1373
      %vm1377 = vweird.f32 %v1070
      %v1378 = vadd.s32 %v1374, 3
      %v1379 = vand.u32 %v1378, 3
      %vm1380 = vcmp.lt.s32.totalorder %v1379, 2
      %vm1381 = vcmp.eq.s32.totalorder %v1379, 0
      %v1382 = vxor.u32 %v1376, 2147483648
      %v1383 = vsel %vm1381, %v1375, %v1382
      %vm1384 = vcmp.eq.s32.totalorder %v1379, 2
      %v1385 = vxor.u32 %v1375, 2147483648
      %v1386 = vsel %vm1384, %v1385, %v1376
      %v1387 = vsel %vm1380, %v1383, %v1386
      %v1388 = vsel %vm1377, nan, %v1387
      %v1389 = vand.u32 2147483647, %v1071
      %vm1390 = vcmp.le.f32.partialorder %v1389, 0.7853982
      %vm1391 = vcmp.lt.s32.totalorder %v1071, 0
      %v1392 = vand.u32 %v1071, 2139095040
      %v1393 = vshrl.u32 %v1392, 23
      %v1394 = vsub.s32 %v1393, 127
      %v1395 = vand.u32 2147483647, %v1071
      %v1396 = vand.u32 %v1395, 8388607
      %v1397 = vor.u32 %v1396, 8388608
      %v1398 = vsub.s32 0, %v1397
      %v1399 = vadd.s32 %v1394, 1
      %vm1400 = vcmp.gt.s32.totalorder %v1399, 0
      %v1401 = vsel %vm1400, %v1399, 0
      %v1402 = vshrl.u32 %v1401, 5
      %v1403 = vand.u32 %v1401, 31
      %v1404 = vsub.s32 32, %v1403
      %v1405 = vshrl.u32 683565275, %v1404
      %v1406 = vshll.u32 683565275, %v1403
      %v1407 = vshrl.u32 2475754826, %v1404
      %v1408 = vor.u32 %v1406, %v1407
      %v1409 = vshll.u32 2475754826, %v1403
      %v1410 = vshrl.u32 2131351028, %v1404
      %v1411 = vor.u32 %v1409, %v1410
      %v1412 = vshll.u32 2131351028, %v1403
      %v1413 = vshrl.u32 2102212464, %v1404
      %v1414 = vor.u32 %v1412, %v1413
      %v1415 = vshll.u32 2102212464, %v1403
      %v1416 = vshrl.u32 920167782, %v1404
      %v1417 = vor.u32 %v1415, %v1416
      %v1418 = vshll.u32 920167782, %v1403
      %v1419 = vshrl.u32 1326507024, %v1404
      %v1420 = vor.u32 %v1418, %v1419
      %vm1421 = vcmp.lt.s32.totalorder %v1402, 1
      %vm1422 = vcmp.lt.s32.totalorder %v1402, 2
      %vm1423 = vcmp.lt.s32.totalorder %v1402, 3
      %vm1424 = vcmp.lt.s32.totalorder %v1402, 4
      %v1425 = vsel %vm1421, %v1405, %v1408
      %v1426 = vsel %vm1424, %v1414, 2102212464
      %v1427 = vsel %vm1423, %v1411, %v1426
      %v1428 = vsel %vm1422, %v1425, %v1427
      %v1429 = vsel %vm1421, %v1408, %v1411
      %v1430 = vsel %vm1424, %v1417, 920167782
      %v1431 = vsel %vm1423, %v1414, %v1430
      %v1432 = vsel %vm1422, %v1429, %v1431
      %v1433 = vsel %vm1421, %v1411, %v1414
      %v1434 = vsel %vm1424, %v1420, 1326507024
      %v1435 = vsel %vm1423, %v1417, %v1434
      %v1436 = vsel %vm1422, %v1433, %v1435
      %v1437 = vshll.u32 %v1397, 8
      %v1438 = vmul.u32.u64.compose %v1437, %v1436
      %v1439 = vextract.low.u32 %v1438
      %v1440 = vextract.high.u32 %v1438
      %v1441 = vmul.u32.u64.compose %v1437, %v1432
      %v1442 = vextract.low.u32 %v1441
      %v1443 = vextract.high.u32 %v1441
      %v1444 = vmul.u32 %v1437, %v1428
      %v1445 = vadd.s32 %v1440, %v1442
      %vm1446 = vc.u32 %v1440, %v1442
      %v1447 = vadd.s32 %v1443, 1
      %v1448 = vsel %vm1446, %v1447, %v1443
      %v1449 = vadd.s32 %v1444, %v1448
      %v1450 = vadd.s32 %v1449, 536870912
      %v1451 = vshrl.u32 %v1450, 30
      %v1452 = vshll.u32 %v1451, 30
      %v1453 = vsub.s32 %v1449, %v1452
      %vm1454 = vcmp.lt.s32.totalorder %v1453, 0
      %v1455 = vsub.s32 0, %v1453
      %v1456 = vsel %vm1454, %v1455, %v1453
      %v1457 = vclz %v1456
      %v1458 = vsub.s32 %v1457, 2
      %vm1459 = vcmp.gt.s32.totalorder 0, %v1458
      %v1460 = vsel %vm1459, 0, %v1458
      %v1461 = vsub.s32 32, %v1460
      %v1462 = vshll.u32 %v1453, %v1460
      %v1463 = vshrl.u32 %v1445, %v1461
      %v1464 = vor.u32 %v1462, %v1463
      %v1465 = vsub.s32 4294967266, %v1460
      %v1466 = vadd.s32 %v1465, 127
      %v1467 = vshll.u32 %v1466, 23
      %v1468 = vor.u32 4788187, %v1467
      %v1469 = vand.u32 2147483647, %v1468
      %v1471 = vcvt.s32.f32 %v1464
      %v1472 = vmul.f32 %v1471, %v1469
      %v1473 = vxor.u32 %v1472, 2147483648
      %v1474 = vsel %vm1391, %v1473, %v1472
      %v1475 = vsub.s32 4, %v1451
      %v1476 = vsel %vm1391, %v1475, %v1451
      %v1477 = vsel %vm1390, %v1071, %v1474
      %v1478 = vsel %vm1390, 0, %v1476
      %v1479 = vcosq.f32.pop %v1477
      %v1480 = vsinq.f32.pop %v1477
      %vm1481 = vweird.f32 %v1071
      %v1482 = vadd.s32 %v1478, 3
      %v1483 = vand.u32 %v1482, 3
      %vm1484 = vcmp.lt.s32.totalorder %v1483, 2
      %vm1485 = vcmp.eq.s32.totalorder %v1483, 0
      %v1486 = vxor.u32 %v1480, 2147483648
      %v1487 = vsel %vm1485, %v1479, %v1486
      %vm1488 = vcmp.eq.s32.totalorder %v1483, 2
      %v1489 = vxor.u32 %v1479, 2147483648
      %v1490 = vsel %vm1488, %v1489, %v1480
      %v1491 = vsel %vm1484, %v1487, %v1490
      %v1492 = vsel %vm1481, nan, %v1491
      %v1493 = vmul.f32 %v877, %v1388
      %v1494 = vmul.f32 %v878, %v1492
      %v1497 = vcombine.low %v1493, %v1494
      %1499 = vst [vmem:[%s660] sm:$0xff] %v1497
      %v1500 = vld [vmem:[%s640] sm:$0xff]
      %v1501 = vld [vmem:[%s640 + $0x8] sm:$0xff]
      %v1502 = vld [vmem:[%s640 + $0x10] sm:$0xff]
      %v1503 = vld [vmem:[%s640 + $0x18] sm:$0xff]
      %v1504 = vld [vmem:[%s640 + $0x20] sm:$0xff]
      %v1505 = vld [vmem:[%s640 + $0x28] sm:$0xff]
      %v1506 = vld [vmem:[%s640 + $0x30] sm:$0xff]
      %v1507 = vld [vmem:[%s640 + $0x38] sm:$0xff]
      %v1508 = vld [vmem:[%s640 + $0x40] sm:$0xf]
      %v1509 = vld [vmem:[%s640 + $0x48] sm:$0xf]
      %v1510 = vld [vmem:[%s12] sm:$0xff]
      %v1511 = vld [vmem:[%s12 + $0x8] sm:$0xff]
      %v1512 = vld [vmem:[%s12 + $0x10] sm:$0xff]
      %v1513 = vld [vmem:[%s12 + $0x18] sm:$0xff]
      %v1514 = vld [vmem:[%s12 + $0x20] sm:$0xff]
      %v1515 = vld [vmem:[%s12 + $0x28] sm:$0xff]
      %v1516 = vld [vmem:[%s12 + $0x30] sm:$0xff]
      %v1517 = vld [vmem:[%s12 + $0x38] sm:$0xff]
      %1519 = vset.pattern.permute.xlu0 0
      %1520 = vperm.xlu0 %1519, %v1510
      %v1521 = vpop.permute.xlu0 %1520
      %v1523 = vlaneseq
      %v1524 = vshrl.u32 %v1523, 7
      %v1525 = vsub.s32 0, %v1524
      %v1526 = vrot.slane %v1504, %v1525
      %v1527 = vlaneseq
      %v1528 = vshrl.u32 %v1527, 7
      %v1529 = vsub.s32 0, %v1528
      %v1530 = vrot.slane %v1505, %v1529
      %v1531 = vmul.f32 %v1521, %v1526
      %v1532 = vmul.f32 %v1521, %v1530
      %1533 = vset.pattern.permute.xlu0 1
      %1534 = vperm.xlu0 %1533, %v1510
      %v1535 = vpop.permute.xlu0 %1534
      %v1537 = vlaneseq
      %v1538 = vshrl.u32 %v1537, 7
      %v1539 = vsub.s32 1, %v1538
      %v1540 = vrot.slane %v1504, %v1539
      %v1541 = vlaneseq
      %v1542 = vshrl.u32 %v1541, 7
      %v1543 = vsub.s32 1, %v1542
      %v1544 = vrot.slane %v1505, %v1543
      %v1545 = vmul.f32 %v1535, %v1540
      %v1546 = vmul.f32 %v1535, %v1544
      %v1547 = vadd.f32 %v1531, %v1545
      %v1548 = vadd.f32 %v1532, %v1546
      %1549 = vset.pattern.permute.xlu0 2
      %1550 = vperm.xlu0 %1549, %v1510
      %v1551 = vpop.permute.xlu0 %1550
      %v1553 = vlaneseq
      %v1554 = vshrl.u32 %v1553, 7
      %v1555 = vsub.s32 2, %v1554
      %v1556 = vrot.slane %v1504, %v1555
      %v1557 = vlaneseq
      %v1558 = vshrl.u32 %v1557, 7
      %v1559 = vsub.s32 2, %v1558
      %v1560 = vrot.slane %v1505, %v1559
      %v1561 = vmul.f32 %v1551, %v1556
      %v1562 = vmul.f32 %v1551, %v1560
      %v1563 = vadd.f32 %v1547, %v1561
      %v1564 = vadd.f32 %v1548, %v1562
      %1565 = vset.pattern.permute.xlu0 3
      %1566 = vperm.xlu0 %1565, %v1510
      %v1567 = vpop.permute.xlu0 %1566
      %v1569 = vlaneseq
      %v1570 = vshrl.u32 %v1569, 7
      %v1571 = vsub.s32 3, %v1570
      %v1572 = vrot.slane %v1504, %v1571
      %v1573 = vlaneseq
      %v1574 = vshrl.u32 %v1573, 7
      %v1575 = vsub.s32 3, %v1574
      %v1576 = vrot.slane %v1505, %v1575
      %v1577 = vmul.f32 %v1567, %v1572
      %v1578 = vmul.f32 %v1567, %v1576
      %v1579 = vadd.f32 %v1563, %v1577
      %v1580 = vadd.f32 %v1564, %v1578
      %v1581 = vlaneseq
      %v1582 = vshrl.u32 %v1581, 7
      %v1583 = vsub.s32 4, %v1582
      %v1584 = vrot.slane %v1502, %v1583
      %v1585 = vlaneseq
      %v1586 = vshrl.u32 %v1585, 7
      %v1587 = vsub.s32 4, %v1586
      %v1588 = vrot.slane %v1503, %v1587
      %v1589 = vmul.f32 %v1521, %v1584
      %v1590 = vmul.f32 %v1521, %v1588
      %v1591 = vlaneseq
      %v1592 = vshrl.u32 %v1591, 7
      %v1593 = vsub.s32 5, %v1592
      %v1594 = vrot.slane %v1502, %v1593
      %v1595 = vlaneseq
      %v1596 = vshrl.u32 %v1595, 7
      %v1597 = vsub.s32 5, %v1596
      %v1598 = vrot.slane %v1503, %v1597
      %v1599 = vmul.f32 %v1535, %v1594
      %v1600 = vmul.f32 %v1535, %v1598
      %v1601 = vadd.f32 %v1589, %v1599
      %v1602 = vadd.f32 %v1590, %v1600
      %v1603 = vlaneseq
      %v1604 = vshrl.u32 %v1603, 7
      %v1605 = vsub.s32 6, %v1604
      %v1606 = vrot.slane %v1502, %v1605
      %v1607 = vlaneseq
      %v1608 = vshrl.u32 %v1607, 7
      %v1609 = vsub.s32 6, %v1608
      %v1610 = vrot.slane %v1503, %v1609
      %v1611 = vmul.f32 %v1551, %v1606
      %v1612 = vmul.f32 %v1551, %v1610
      %v1613 = vadd.f32 %v1601, %v1611
      %v1614 = vadd.f32 %v1602, %v1612
      %v1615 = vlaneseq
      %v1616 = vshrl.u32 %v1615, 7
      %v1617 = vsub.s32 7, %v1616
      %v1618 = vrot.slane %v1502, %v1617
      %v1619 = vlaneseq
      %v1620 = vshrl.u32 %v1619, 7
      %v1621 = vsub.s32 7, %v1620
      %v1622 = vrot.slane %v1503, %v1621
      %v1623 = vmul.f32 %v1567, %v1618
      %v1624 = vmul.f32 %v1567, %v1622
      %v1625 = vadd.f32 %v1613, %v1623
      %v1626 = vadd.f32 %v1614, %v1624
      %v1629 = vrot.slane %v1625, 4
      %v1630 = vrot.slane %v1626, 4
      %v1633 = vadd.f32 %v1579, %v1629
      %v1634 = vadd.f32 %v1580, %v1630
      %1636 = vset.pattern.permute.xlu0 0
      %1637 = vperm.xlu0 %1636, %v1511
      %v1638 = vpop.permute.xlu0 %1637
      %v1640 = vlaneseq
      %v1641 = vshrl.u32 %v1640, 7
      %v1642 = vsub.s32 4, %v1641
      %v1643 = vrot.slane %v1500, %v1642
      %v1644 = vlaneseq
      %v1645 = vshrl.u32 %v1644, 7
      %v1646 = vsub.s32 4, %v1645
      %v1647 = vrot.slane %v1501, %v1646
      %v1648 = vmul.f32 %v1638, %v1643
      %v1649 = vmul.f32 %v1638, %v1647
      %1650 = vset.pattern.permute.xlu0 1
      %1651 = vperm.xlu0 %1650, %v1511
      %v1652 = vpop.permute.xlu0 %1651
      %v1654 = vlaneseq
      %v1655 = vshrl.u32 %v1654, 7
      %v1656 = vsub.s32 5, %v1655
      %v1657 = vrot.slane %v1500, %v1656
      %v1658 = vlaneseq
      %v1659 = vshrl.u32 %v1658, 7
      %v1660 = vsub.s32 5, %v1659
      %v1661 = vrot.slane %v1501, %v1660
      %v1662 = vmul.f32 %v1652, %v1657
      %v1663 = vmul.f32 %v1652, %v1661
      %v1664 = vadd.f32 %v1648, %v1662
      %v1665 = vadd.f32 %v1649, %v1663
      %1666 = vset.pattern.permute.xlu0 2
      %1667 = vperm.xlu0 %1666, %v1511
      %v1668 = vpop.permute.xlu0 %1667
      %v1670 = vlaneseq
      %v1671 = vshrl.u32 %v1670, 7
      %v1672 = vsub.s32 6, %v1671
      %v1673 = vrot.slane %v1500, %v1672
      %v1674 = vlaneseq
      %v1675 = vshrl.u32 %v1674, 7
      %v1676 = vsub.s32 6, %v1675
      %v1677 = vrot.slane %v1501, %v1676
      %v1678 = vmul.f32 %v1668, %v1673
      %v1679 = vmul.f32 %v1668, %v1677
      %v1680 = vadd.f32 %v1664, %v1678
      %v1681 = vadd.f32 %v1665, %v1679
      %1682 = vset.pattern.permute.xlu0 3
      %1683 = vperm.xlu0 %1682, %v1511
      %v1684 = vpop.permute.xlu0 %1683
      %v1686 = vlaneseq
      %v1687 = vshrl.u32 %v1686, 7
      %v1688 = vsub.s32 7, %v1687
      %v1689 = vrot.slane %v1500, %v1688
      %v1690 = vlaneseq
      %v1691 = vshrl.u32 %v1690, 7
      %v1692 = vsub.s32 7, %v1691
      %v1693 = vrot.slane %v1501, %v1692
      %v1694 = vmul.f32 %v1684, %v1689
      %v1695 = vmul.f32 %v1684, %v1693
      %v1696 = vadd.f32 %v1680, %v1694
      %v1697 = vadd.f32 %v1681, %v1695
      %v1698 = vadd.f32 %v1633, %v1696
      %v1699 = vadd.f32 %v1634, %v1697
      %v1700 = vlaneseq
      %v1701 = vshrl.u32 %v1700, 7
      %v1702 = vsub.s32 0, %v1701
      %v1703 = vrot.slane %v1500, %v1702
      %v1704 = vlaneseq
      %v1705 = vshrl.u32 %v1704, 7
      %v1706 = vsub.s32 0, %v1705
      %v1707 = vrot.slane %v1501, %v1706
      %v1708 = vmul.f32 %v1638, %v1703
      %v1709 = vmul.f32 %v1638, %v1707
      %v1710 = vlaneseq
      %v1711 = vshrl.u32 %v1710, 7
      %v1712 = vsub.s32 1, %v1711
      %v1713 = vrot.slane %v1500, %v1712
      %v1714 = vlaneseq
      %v1715 = vshrl.u32 %v1714, 7
      %v1716 = vsub.s32 1, %v1715
      %v1717 = vrot.slane %v1501, %v1716
      %v1718 = vmul.f32 %v1652, %v1713
      %v1719 = vmul.f32 %v1652, %v1717
      %v1720 = vadd.f32 %v1708, %v1718
      %v1721 = vadd.f32 %v1709, %v1719
      %v1722 = vlaneseq
      %v1723 = vshrl.u32 %v1722, 7
      %v1724 = vsub.s32 2, %v1723
      %v1725 = vrot.slane %v1500, %v1724
      %v1726 = vlaneseq
      %v1727 = vshrl.u32 %v1726, 7
      %v1728 = vsub.s32 2, %v1727
      %v1729 = vrot.slane %v1501, %v1728
      %v1730 = vmul.f32 %v1668, %v1725
      %v1731 = vmul.f32 %v1668, %v1729
      %v1732 = vadd.f32 %v1720, %v1730
      %v1733 = vadd.f32 %v1721, %v1731
      %v1734 = vlaneseq
      %v1735 = vshrl.u32 %v1734, 7
      %v1736 = vsub.s32 3, %v1735
      %v1737 = vrot.slane %v1500, %v1736
      %v1738 = vlaneseq
      %v1739 = vshrl.u32 %v1738, 7
      %v1740 = vsub.s32 3, %v1739
      %v1741 = vrot.slane %v1501, %v1740
      %v1742 = vmul.f32 %v1684, %v1737
      %v1743 = vmul.f32 %v1684, %v1741
      %v1744 = vadd.f32 %v1732, %v1742
      %v1745 = vadd.f32 %v1733, %v1743
      %v1748 = vrot.slane %v1744, 4
      %v1749 = vrot.slane %v1745, 4
      %v1752 = vadd.f32 %v1698, %v1748
      %v1753 = vadd.f32 %v1699, %v1749
      %1754 = vst [vmem:[%s670] sm:$0xf] %v1752
      %1755 = vst [vmem:[%s670 + $0x8] sm:$0xf] %v1753
      %1757 = vset.pattern.permute.xlu0 0
      %1758 = vperm.xlu0 %1757, %v1512
      %v1759 = vpop.permute.xlu0 %1758
      %v1761 = vmul.f32 %v1759, %v1526
      %v1762 = vmul.f32 %v1759, %v1530
      %1763 = vset.pattern.permute.xlu0 1
      %1764 = vperm.xlu0 %1763, %v1512
      %v1765 = vpop.permute.xlu0 %1764
      %v1767 = vmul.f32 %v1765, %v1540
      %v1768 = vmul.f32 %v1765, %v1544
      %v1769 = vadd.f32 %v1761, %v1767
      %v1770 = vadd.f32 %v1762, %v1768
      %1771 = vset.pattern.permute.xlu0 2
      %1772 = vperm.xlu0 %1771, %v1512
      %v1773 = vpop.permute.xlu0 %1772
      %v1775 = vmul.f32 %v1773, %v1556
      %v1776 = vmul.f32 %v1773, %v1560
      %v1777 = vadd.f32 %v1769, %v1775
      %v1778 = vadd.f32 %v1770, %v1776
      %1779 = vset.pattern.permute.xlu0 3
      %1780 = vperm.xlu0 %1779, %v1512
      %v1781 = vpop.permute.xlu0 %1780
      %v1783 = vmul.f32 %v1781, %v1572
      %v1784 = vmul.f32 %v1781, %v1576
      %v1785 = vadd.f32 %v1777, %v1783
      %v1786 = vadd.f32 %v1778, %v1784
      %v1787 = vlaneseq
      %v1788 = vshrl.u32 %v1787, 7
      %v1789 = vsub.s32 4, %v1788
      %v1790 = vrot.slane %v1504, %v1789
      %v1791 = vlaneseq
      %v1792 = vshrl.u32 %v1791, 7
      %v1793 = vsub.s32 4, %v1792
      %v1794 = vrot.slane %v1505, %v1793
      %v1795 = vmul.f32 %v1759, %v1790
      %v1796 = vmul.f32 %v1759, %v1794
      %v1797 = vlaneseq
      %v1798 = vshrl.u32 %v1797, 7
      %v1799 = vsub.s32 5, %v1798
      %v1800 = vrot.slane %v1504, %v1799
      %v1801 = vlaneseq
      %v1802 = vshrl.u32 %v1801, 7
      %v1803 = vsub.s32 5, %v1802
      %v1804 = vrot.slane %v1505, %v1803
      %v1805 = vmul.f32 %v1765, %v1800
      %v1806 = vmul.f32 %v1765, %v1804
      %v1807 = vadd.f32 %v1795, %v1805
      %v1808 = vadd.f32 %v1796, %v1806
      %v1809 = vlaneseq
      %v1810 = vshrl.u32 %v1809, 7
      %v1811 = vsub.s32 6, %v1810
      %v1812 = vrot.slane %v1504, %v1811
      %v1813 = vlaneseq
      %v1814 = vshrl.u32 %v1813, 7
      %v1815 = vsub.s32 6, %v1814
      %v1816 = vrot.slane %v1505, %v1815
      %v1817 = vmul.f32 %v1773, %v1812
      %v1818 = vmul.f32 %v1773, %v1816
      %v1819 = vadd.f32 %v1807, %v1817
      %v1820 = vadd.f32 %v1808, %v1818
      %v1821 = vlaneseq
      %v1822 = vshrl.u32 %v1821, 7
      %v1823 = vsub.s32 7, %v1822
      %v1824 = vrot.slane %v1504, %v1823
      %v1825 = vlaneseq
      %v1826 = vshrl.u32 %v1825, 7
      %v1827 = vsub.s32 7, %v1826
      %v1828 = vrot.slane %v1505, %v1827
      %v1829 = vmul.f32 %v1781, %v1824
      %v1830 = vmul.f32 %v1781, %v1828
      %v1831 = vadd.f32 %v1819, %v1829
      %v1832 = vadd.f32 %v1820, %v1830
      %v1835 = vrot.slane %v1831, 4
      %v1836 = vrot.slane %v1832, 4
      %v1839 = vadd.f32 %v1785, %v1835
      %v1840 = vadd.f32 %v1786, %v1836
      %1842 = vset.pattern.permute.xlu0 0
      %1843 = vperm.xlu0 %1842, %v1513
      %v1844 = vpop.permute.xlu0 %1843
      %v1846 = vmul.f32 %v1844, %v1643
      %v1847 = vmul.f32 %v1844, %v1647
      %1848 = vset.pattern.permute.xlu0 1
      %1849 = vperm.xlu0 %1848, %v1513
      %v1850 = vpop.permute.xlu0 %1849
      %v1852 = vmul.f32 %v1850, %v1657
      %v1853 = vmul.f32 %v1850, %v1661
      %v1854 = vadd.f32 %v1846, %v1852
      %v1855 = vadd.f32 %v1847, %v1853
      %1856 = vset.pattern.permute.xlu0 2
      %1857 = vperm.xlu0 %1856, %v1513
      %v1858 = vpop.permute.xlu0 %1857
      %v1860 = vmul.f32 %v1858, %v1673
      %v1861 = vmul.f32 %v1858, %v1677
      %v1862 = vadd.f32 %v1854, %v1860
      %v1863 = vadd.f32 %v1855, %v1861
      %1864 = vset.pattern.permute.xlu0 3
      %1865 = vperm.xlu0 %1864, %v1513
      %v1866 = vpop.permute.xlu0 %1865
      %v1868 = vmul.f32 %v1866, %v1689
      %v1869 = vmul.f32 %v1866, %v1693
      %v1870 = vadd.f32 %v1862, %v1868
      %v1871 = vadd.f32 %v1863, %v1869
      %v1872 = vadd.f32 %v1839, %v1870
      %v1873 = vadd.f32 %v1840, %v1871
      %v1874 = vlaneseq
      %v1875 = vshrl.u32 %v1874, 7
      %v1876 = vsub.s32 0, %v1875
      %v1877 = vrot.slane %v1502, %v1876
      %v1878 = vlaneseq
      %v1879 = vshrl.u32 %v1878, 7
      %v1880 = vsub.s32 0, %v1879
      %v1881 = vrot.slane %v1503, %v1880
      %v1882 = vmul.f32 %v1844, %v1877
      %v1883 = vmul.f32 %v1844, %v1881
      %v1884 = vlaneseq
      %v1885 = vshrl.u32 %v1884, 7
      %v1886 = vsub.s32 1, %v1885
      %v1887 = vrot.slane %v1502, %v1886
      %v1888 = vlaneseq
      %v1889 = vshrl.u32 %v1888, 7
      %v1890 = vsub.s32 1, %v1889
      %v1891 = vrot.slane %v1503, %v1890
      %v1892 = vmul.f32 %v1850, %v1887
      %v1893 = vmul.f32 %v1850, %v1891
      %v1894 = vadd.f32 %v1882, %v1892
      %v1895 = vadd.f32 %v1883, %v1893
      %v1896 = vlaneseq
      %v1897 = vshrl.u32 %v1896, 7
      %v1898 = vsub.s32 2, %v1897
      %v1899 = vrot.slane %v1502, %v1898
      %v1900 = vlaneseq
      %v1901 = vshrl.u32 %v1900, 7
      %v1902 = vsub.s32 2, %v1901
      %v1903 = vrot.slane %v1503, %v1902
      %v1904 = vmul.f32 %v1858, %v1899
      %v1905 = vmul.f32 %v1858, %v1903
      %v1906 = vadd.f32 %v1894, %v1904
      %v1907 = vadd.f32 %v1895, %v1905
      %v1908 = vlaneseq
      %v1909 = vshrl.u32 %v1908, 7
      %v1910 = vsub.s32 3, %v1909
      %v1911 = vrot.slane %v1502, %v1910
      %v1912 = vlaneseq
      %v1913 = vshrl.u32 %v1912, 7
      %v1914 = vsub.s32 3, %v1913
      %v1915 = vrot.slane %v1503, %v1914
      %v1916 = vmul.f32 %v1866, %v1911
      %v1917 = vmul.f32 %v1866, %v1915
      %v1918 = vadd.f32 %v1906, %v1916
      %v1919 = vadd.f32 %v1907, %v1917
      %v1922 = vrot.slane %v1918, 4
      %v1923 = vrot.slane %v1919, 4
      %v1926 = vadd.f32 %v1872, %v1922
      %v1927 = vadd.f32 %v1873, %v1923
      %v1930 = vrot.slane %v1926, 4
      %v1931 = vrot.slane %v1927, 4
      %1934 = vst [vmem:[%s670] sm:$0xf0] %v1930
      %1935 = vst [vmem:[%s670 + $0x8] sm:$0xf0] %v1931
      %1937 = vset.pattern.permute.xlu0 0
      %1938 = vperm.xlu0 %1937, %v1514
      %v1939 = vpop.permute.xlu0 %1938
      %v1941 = vmul.f32 %v1939, %v1526
      %v1942 = vmul.f32 %v1939, %v1530
      %1943 = vset.pattern.permute.xlu0 1
      %1944 = vperm.xlu0 %1943, %v1514
      %v1945 = vpop.permute.xlu0 %1944
      %v1947 = vmul.f32 %v1945, %v1540
      %v1948 = vmul.f32 %v1945, %v1544
      %v1949 = vadd.f32 %v1941, %v1947
      %v1950 = vadd.f32 %v1942, %v1948
      %1951 = vset.pattern.permute.xlu0 2
      %1952 = vperm.xlu0 %1951, %v1514
      %v1953 = vpop.permute.xlu0 %1952
      %v1955 = vmul.f32 %v1953, %v1556
      %v1956 = vmul.f32 %v1953, %v1560
      %v1957 = vadd.f32 %v1949, %v1955
      %v1958 = vadd.f32 %v1950, %v1956
      %1959 = vset.pattern.permute.xlu0 3
      %1960 = vperm.xlu0 %1959, %v1514
      %v1961 = vpop.permute.xlu0 %1960
      %v1963 = vmul.f32 %v1961, %v1572
      %v1964 = vmul.f32 %v1961, %v1576
      %v1965 = vadd.f32 %v1957, %v1963
      %v1966 = vadd.f32 %v1958, %v1964
      %v1967 = vmul.f32 %v1939, %v1584
      %v1968 = vmul.f32 %v1939, %v1588
      %v1969 = vmul.f32 %v1945, %v1594
      %v1970 = vmul.f32 %v1945, %v1598
      %v1971 = vadd.f32 %v1967, %v1969
      %v1972 = vadd.f32 %v1968, %v1970
      %v1973 = vmul.f32 %v1953, %v1606
      %v1974 = vmul.f32 %v1953, %v1610
      %v1975 = vadd.f32 %v1971, %v1973
      %v1976 = vadd.f32 %v1972, %v1974
      %v1977 = vmul.f32 %v1961, %v1618
      %v1978 = vmul.f32 %v1961, %v1622
      %v1979 = vadd.f32 %v1975, %v1977
      %v1980 = vadd.f32 %v1976, %v1978
      %v1983 = vrot.slane %v1979, 4
      %v1984 = vrot.slane %v1980, 4
      %v1987 = vadd.f32 %v1965, %v1983
      %v1988 = vadd.f32 %v1966, %v1984
      %1990 = vset.pattern.permute.xlu0 0
      %1991 = vperm.xlu0 %1990, %v1515
      %v1992 = vpop.permute.xlu0 %1991
      %v1994 = vlaneseq
      %v1995 = vshrl.u32 %v1994, 7
      %v1996 = vsub.s32 4, %v1995
      %v1997 = vrot.slane %v1506, %v1996
      %v1998 = vlaneseq
      %v1999 = vshrl.u32 %v1998, 7
      %v2000 = vsub.s32 4, %v1999
      %v2001 = vrot.slane %v1507, %v2000
      %v2002 = vmul.f32 %v1992, %v1997
      %v2003 = vmul.f32 %v1992, %v2001
      %2004 = vset.pattern.permute.xlu0 1
      %2005 = vperm.xlu0 %2004, %v1515
      %v2006 = vpop.permute.xlu0 %2005
      %v2008 = vlaneseq
      %v2009 = vshrl.u32 %v2008, 7
      %v2010 = vsub.s32 5, %v2009
      %v2011 = vrot.slane %v1506, %v2010
      %v2012 = vlaneseq
      %v2013 = vshrl.u32 %v2012, 7
      %v2014 = vsub.s32 5, %v2013
      %v2015 = vrot.slane %v1507, %v2014
      %v2016 = vmul.f32 %v2006, %v2011
      %v2017 = vmul.f32 %v2006, %v2015
      %v2018 = vadd.f32 %v2002, %v2016
      %v2019 = vadd.f32 %v2003, %v2017
      %2020 = vset.pattern.permute.xlu0 2
      %2021 = vperm.xlu0 %2020, %v1515
      %v2022 = vpop.permute.xlu0 %2021
      %v2024 = vlaneseq
      %v2025 = vshrl.u32 %v2024, 7
      %v2026 = vsub.s32 6, %v2025
      %v2027 = vrot.slane %v1506, %v2026
      %v2028 = vlaneseq
      %v2029 = vshrl.u32 %v2028, 7
      %v2030 = vsub.s32 6, %v2029
      %v2031 = vrot.slane %v1507, %v2030
      %v2032 = vmul.f32 %v2022, %v2027
      %v2033 = vmul.f32 %v2022, %v2031
      %v2034 = vadd.f32 %v2018, %v2032
      %v2035 = vadd.f32 %v2019, %v2033
      %2036 = vset.pattern.permute.xlu0 3
      %2037 = vperm.xlu0 %2036, %v1515
      %v2038 = vpop.permute.xlu0 %2037
      %v2040 = vlaneseq
      %v2041 = vshrl.u32 %v2040, 7
      %v2042 = vsub.s32 7, %v2041
      %v2043 = vrot.slane %v1506, %v2042
      %v2044 = vlaneseq
      %v2045 = vshrl.u32 %v2044, 7
      %v2046 = vsub.s32 7, %v2045
      %v2047 = vrot.slane %v1507, %v2046
      %v2048 = vmul.f32 %v2038, %v2043
      %v2049 = vmul.f32 %v2038, %v2047
      %v2050 = vadd.f32 %v2034, %v2048
      %v2051 = vadd.f32 %v2035, %v2049
      %v2052 = vadd.f32 %v1987, %v2050
      %v2053 = vadd.f32 %v1988, %v2051
      %v2054 = vlaneseq
      %v2055 = vshrl.u32 %v2054, 7
      %v2056 = vsub.s32 0, %v2055
      %v2057 = vrot.slane %v1506, %v2056
      %v2058 = vlaneseq
      %v2059 = vshrl.u32 %v2058, 7
      %v2060 = vsub.s32 0, %v2059
      %v2061 = vrot.slane %v1507, %v2060
      %v2062 = vmul.f32 %v1992, %v2057
      %v2063 = vmul.f32 %v1992, %v2061
      %v2064 = vlaneseq
      %v2065 = vshrl.u32 %v2064, 7
      %v2066 = vsub.s32 1, %v2065
      %v2067 = vrot.slane %v1506, %v2066
      %v2068 = vlaneseq
      %v2069 = vshrl.u32 %v2068, 7
      %v2070 = vsub.s32 1, %v2069
      %v2071 = vrot.slane %v1507, %v2070
      %v2072 = vmul.f32 %v2006, %v2067
      %v2073 = vmul.f32 %v2006, %v2071
      %v2074 = vadd.f32 %v2062, %v2072
      %v2075 = vadd.f32 %v2063, %v2073
      %v2076 = vlaneseq
      %v2077 = vshrl.u32 %v2076, 7
      %v2078 = vsub.s32 2, %v2077
      %v2079 = vrot.slane %v1506, %v2078
      %v2080 = vlaneseq
      %v2081 = vshrl.u32 %v2080, 7
      %v2082 = vsub.s32 2, %v2081
      %v2083 = vrot.slane %v1507, %v2082
      %v2084 = vmul.f32 %v2022, %v2079
      %v2085 = vmul.f32 %v2022, %v2083
      %v2086 = vadd.f32 %v2074, %v2084
      %v2087 = vadd.f32 %v2075, %v2085
      %v2088 = vlaneseq
      %v2089 = vshrl.u32 %v2088, 7
      %v2090 = vsub.s32 3, %v2089
      %v2091 = vrot.slane %v1506, %v2090
      %v2092 = vlaneseq
      %v2093 = vshrl.u32 %v2092, 7
      %v2094 = vsub.s32 3, %v2093
      %v2095 = vrot.slane %v1507, %v2094
      %v2096 = vmul.f32 %v2038, %v2091
      %v2097 = vmul.f32 %v2038, %v2095
      %v2098 = vadd.f32 %v2086, %v2096
      %v2099 = vadd.f32 %v2087, %v2097
      %v2102 = vrot.slane %v2098, 4
      %v2103 = vrot.slane %v2099, 4
      %v2106 = vadd.f32 %v2052, %v2102
      %v2107 = vadd.f32 %v2053, %v2103
      %2108 = vst [vmem:[%s670 + $0x10] sm:$0xf] %v2106
      %2109 = vst [vmem:[%s670 + $0x18] sm:$0xf] %v2107
      %2111 = vset.pattern.permute.xlu0 0
      %2112 = vperm.xlu0 %2111, %v1516
      %v2113 = vpop.permute.xlu0 %2112
      %v2115 = vmul.f32 %v2113, %v1526
      %v2116 = vmul.f32 %v2113, %v1530
      %2117 = vset.pattern.permute.xlu0 1
      %2118 = vperm.xlu0 %2117, %v1516
      %v2119 = vpop.permute.xlu0 %2118
      %v2121 = vmul.f32 %v2119, %v1540
      %v2122 = vmul.f32 %v2119, %v1544
      %v2123 = vadd.f32 %v2115, %v2121
      %v2124 = vadd.f32 %v2116, %v2122
      %2125 = vset.pattern.permute.xlu0 2
      %2126 = vperm.xlu0 %2125, %v1516
      %v2127 = vpop.permute.xlu0 %2126
      %v2129 = vmul.f32 %v2127, %v1556
      %v2130 = vmul.f32 %v2127, %v1560
      %v2131 = vadd.f32 %v2123, %v2129
      %v2132 = vadd.f32 %v2124, %v2130
      %2133 = vset.pattern.permute.xlu0 3
      %2134 = vperm.xlu0 %2133, %v1516
      %v2135 = vpop.permute.xlu0 %2134
      %v2137 = vmul.f32 %v2135, %v1572
      %v2138 = vmul.f32 %v2135, %v1576
      %v2139 = vadd.f32 %v2131, %v2137
      %v2140 = vadd.f32 %v2132, %v2138
      %v2141 = vmul.f32 %v2113, %v1790
      %v2142 = vmul.f32 %v2113, %v1794
      %v2143 = vmul.f32 %v2119, %v1800
      %v2144 = vmul.f32 %v2119, %v1804
      %v2145 = vadd.f32 %v2141, %v2143
      %v2146 = vadd.f32 %v2142, %v2144
      %v2147 = vmul.f32 %v2127, %v1812
      %v2148 = vmul.f32 %v2127, %v1816
      %v2149 = vadd.f32 %v2145, %v2147
      %v2150 = vadd.f32 %v2146, %v2148
      %v2151 = vmul.f32 %v2135, %v1824
      %v2152 = vmul.f32 %v2135, %v1828
      %v2153 = vadd.f32 %v2149, %v2151
      %v2154 = vadd.f32 %v2150, %v2152
      %v2157 = vrot.slane %v2153, 4
      %v2158 = vrot.slane %v2154, 4
      %v2161 = vadd.f32 %v2139, %v2157
      %v2162 = vadd.f32 %v2140, %v2158
      %2164 = vset.pattern.permute.xlu0 0
      %2165 = vperm.xlu0 %2164, %v1517
      %v2166 = vpop.permute.xlu0 %2165
      %v2168 = vmul.f32 %v2166, %v1997
      %v2169 = vmul.f32 %v2166, %v2001
      %2170 = vset.pattern.permute.xlu0 1
      %2171 = vperm.xlu0 %2170, %v1517
      %v2172 = vpop.permute.xlu0 %2171
      %v2174 = vmul.f32 %v2172, %v2011
      %v2175 = vmul.f32 %v2172, %v2015
      %v2176 = vadd.f32 %v2168, %v2174
      %v2177 = vadd.f32 %v2169, %v2175
      %2178 = vset.pattern.permute.xlu0 2
      %2179 = vperm.xlu0 %2178, %v1517
      %v2180 = vpop.permute.xlu0 %2179
      %v2182 = vmul.f32 %v2180, %v2027
      %v2183 = vmul.f32 %v2180, %v2031
      %v2184 = vadd.f32 %v2176, %v2182
      %v2185 = vadd.f32 %v2177, %v2183
      %2186 = vset.pattern.permute.xlu0 3
      %2187 = vperm.xlu0 %2186, %v1517
      %v2188 = vpop.permute.xlu0 %2187
      %v2190 = vmul.f32 %v2188, %v2043
      %v2191 = vmul.f32 %v2188, %v2047
      %v2192 = vadd.f32 %v2184, %v2190
      %v2193 = vadd.f32 %v2185, %v2191
      %v2194 = vadd.f32 %v2161, %v2192
      %v2195 = vadd.f32 %v2162, %v2193
      %v2196 = vlaneseq
      %v2197 = vshrl.u32 %v2196, 7
      %v2198 = vsub.s32 0, %v2197
      %v2199 = vrot.slane %v1508, %v2198
      %v2200 = vlaneseq
      %v2201 = vshrl.u32 %v2200, 7
      %v2202 = vsub.s32 0, %v2201
      %v2203 = vrot.slane %v1509, %v2202
      %v2204 = vmul.f32 %v2166, %v2199
      %v2205 = vmul.f32 %v2166, %v2203
      %v2206 = vlaneseq
      %v2207 = vshrl.u32 %v2206, 7
      %v2208 = vsub.s32 1, %v2207
      %v2209 = vrot.slane %v1508, %v2208
      %v2210 = vlaneseq
      %v2211 = vshrl.u32 %v2210, 7
      %v2212 = vsub.s32 1, %v2211
      %v2213 = vrot.slane %v1509, %v2212
      %v2214 = vmul.f32 %v2172, %v2209
      %v2215 = vmul.f32 %v2172, %v2213
      %v2216 = vadd.f32 %v2204, %v2214
      %v2217 = vadd.f32 %v2205, %v2215
      %v2218 = vlaneseq
      %v2219 = vshrl.u32 %v2218, 7
      %v2220 = vsub.s32 2, %v2219
      %v2221 = vrot.slane %v1508, %v2220
      %v2222 = vlaneseq
      %v2223 = vshrl.u32 %v2222, 7
      %v2224 = vsub.s32 2, %v2223
      %v2225 = vrot.slane %v1509, %v2224
      %v2226 = vmul.f32 %v2180, %v2221
      %v2227 = vmul.f32 %v2180, %v2225
      %v2228 = vadd.f32 %v2216, %v2226
      %v2229 = vadd.f32 %v2217, %v2227
      %v2230 = vlaneseq
      %v2231 = vshrl.u32 %v2230, 7
      %v2232 = vsub.s32 3, %v2231
      %v2233 = vrot.slane %v1508, %v2232
      %v2234 = vlaneseq
      %v2235 = vshrl.u32 %v2234, 7
      %v2236 = vsub.s32 3, %v2235
      %v2237 = vrot.slane %v1509, %v2236
      %v2238 = vmul.f32 %v2188, %v2233
      %v2239 = vmul.f32 %v2188, %v2237
      %v2240 = vadd.f32 %v2228, %v2238
      %v2241 = vadd.f32 %v2229, %v2239
      %v2244 = vrot.slane %v2240, 4
      %v2245 = vrot.slane %v2241, 4
      %v2248 = vadd.f32 %v2194, %v2244
      %v2249 = vadd.f32 %v2195, %v2245
      %v2252 = vrot.slane %v2248, 4
      %v2253 = vrot.slane %v2249, 4
      %2256 = vst [vmem:[%s670 + $0x10] sm:$0xf0] %v2252
      %2257 = vst [vmem:[%s670 + $0x18] sm:$0xf0] %v2253
      %s2258 = smul.u32 2, %s32
      %p2259 = scmp.lt.s32.totalorder %s31, 1
      %s2260 = scalar_select %p2259, %s31, 1
      %p2261 = scmp.lt.s32.totalorder %s2258, 1
      %s2262 = scalar_select %p2261, %s2258, 1
      %s2263 = smul.addr %s2260, 2
      %s2264 = sadd.s32 %s2262, %s2263
      %s2265 = smul.addr %s2264, 4
      %s2266 = scalar_lea.vmem %s13, %s2265
      %s2267 = smul.u32 2, %s32
      %p2268 = scmp.lt.s32.totalorder %s31, 1
      %s2269 = scalar_select %p2268, %s31, 1
      %p2270 = scmp.lt.s32.totalorder %s2267, 1
      %s2271 = scalar_select %p2270, %s2267, 1
      %s2272 = smul.addr %s2269, 2
      %s2273 = sadd.s32 %s2271, %s2272
      %s2274 = smul.addr %s2273, 4
      %s2275 = scalar_lea.vmem %s14, %s2274
      %s2276 = smul.u32 2, %s32
      %p2277 = scmp.lt.s32.totalorder %s31, 1
      %s2278 = scalar_select %p2277, %s31, 1
      %p2279 = scmp.lt.s32.totalorder %s2276, 1
      %s2280 = scalar_select %p2279, %s2276, 1
      %s2281 = smul.addr %s2278, 4
      %s2282 = sadd.s32 %s2280, %s2281
      %s2283 = smul.addr %s2282, 8
      %s2284 = scalar_lea.vmem %s15, %s2283
      // Predicated region
      $region73: #{frescat_corner_forward.2} parent=71 // pred_check
        %p2285 = pneg %p358
      $region74: #{frescat_corner_forward.2} parent=71 // pred_check_branch
        %2287 = sbr.rel (%p2285) target = $region76
      $region75: #{frescat_corner_forward.2} parent=71 // pred_region
        %s2288 = smul.u32 2, %s32
      $region76: #{frescat_corner_forward.2} parent=71 // pred_fallthru
        _
      // Predicated region
      $region77: #{frescat_corner_forward.2} parent=71 // pred_check
        %p2289 = pneg %p386
      $region78: #{frescat_corner_forward.2} parent=71 // pred_check_branch
        %2291 = sbr.rel (%p2289) target = $region80
      $region79: #{frescat_corner_forward.2} parent=71 // pred_region
        %s2292 = smul.u32 2, %s32
      $region80: #{frescat_corner_forward.2} parent=71 // pred_fallthru
        _
      // Predicated region
      $region81: #{frescat_corner_forward.2} parent=71 // pred_check
        %p2293 = pneg %p414
      $region82: #{frescat_corner_forward.2} parent=71 // pred_check_branch
        %2295 = sbr.rel (%p2293) target = $region84
      $region83: #{frescat_corner_forward.2} parent=71 // pred_region
        %s2296 = smul.u32 2, %s32
      $region84: #{frescat_corner_forward.2} parent=71 // pred_fallthru
        _
    $region72: #{frescat_corner_forward.2} parent=5 // pred_fallthru
      _
    %p2297 = scmp.le.s32.totalorder 2, %s22
    // Predicated region
    $region85: #{frescat_corner_forward.2} parent=5 // pred_check
      %p2298 = pneg %p2297
    $region86: #{frescat_corner_forward.2} parent=5 // pred_check_branch
      %2300 = sbr.rel (%p2298) target = $region88
    $region87: #{frescat_corner_forward.2} parent=5 // pred_region
      %s2301 = ssub.s32 %s22, 2
      // Predicated region
      $region89: #{frescat_corner_forward.2} parent=87 // pred_check
        %p2302 = pneg %p364
      $region90: #{frescat_corner_forward.2} parent=87 // pred_check_branch
        %2304 = sbr.rel (%p2302) target = $region92
      $region91: #{frescat_corner_forward.2} parent=87 // pred_region
        %s2305 = smul.u32 2, %s34
        %p2306 = scmp.lt.s32.totalorder %s33, 1
        %s2307 = scalar_select %p2306, %s33, 1
        %p2308 = scmp.lt.s32.totalorder %s2305, 1
        %s2309 = scalar_select %p2308, %s2305, 1
        %s2310 = smul.addr %s2307, 2
        %s2311 = sadd.s32 %s2309, %s2310
        %s2312 = smul.addr %s2311, 4
        %s2313 = scalar_lea.vmem %s13, %s2312
      $region92: #{frescat_corner_forward.2} parent=87 // pred_fallthru
        _
      // Predicated region
      $region93: #{frescat_corner_forward.2} parent=87 // pred_check
        %p2314 = pneg %p392
      $region94: #{frescat_corner_forward.2} parent=87 // pred_check_branch
        %2316 = sbr.rel (%p2314) target = $region96
      $region95: #{frescat_corner_forward.2} parent=87 // pred_region
        %s2317 = smul.u32 2, %s34
        %p2318 = scmp.lt.s32.totalorder %s33, 1
        %s2319 = scalar_select %p2318, %s33, 1
        %p2320 = scmp.lt.s32.totalorder %s2317, 1
        %s2321 = scalar_select %p2320, %s2317, 1
        %s2322 = smul.addr %s2319, 2
        %s2323 = sadd.s32 %s2321, %s2322
        %s2324 = smul.addr %s2323, 4
        %s2325 = scalar_lea.vmem %s14, %s2324
      $region96: #{frescat_corner_forward.2} parent=87 // pred_fallthru
        _
      // Predicated region
      $region97: #{frescat_corner_forward.2} parent=87 // pred_check
        %p2326 = pneg %p420
      $region98: #{frescat_corner_forward.2} parent=87 // pred_check_branch
        %2328 = sbr.rel (%p2326) target = $region100
      $region99: #{frescat_corner_forward.2} parent=87 // pred_region
        %s2329 = smul.u32 2, %s34
        %p2330 = scmp.lt.s32.totalorder %s33, 1
        %s2331 = scalar_select %p2330, %s33, 1
        %p2332 = scmp.lt.s32.totalorder %s2329, 1
        %s2333 = scalar_select %p2332, %s2329, 1
        %s2334 = smul.addr %s2331, 4
        %s2335 = sadd.s32 %s2333, %s2334
        %s2336 = smul.addr %s2335, 8
        %s2337 = scalar_lea.vmem %s15, %s2336
      $region100: #{frescat_corner_forward.2} parent=87 // pred_fallthru
        _
    $region88: #{frescat_corner_forward.2} parent=5 // pred_fallthru
      _
  $region6: #{frescat_corner_forward.2} parent=0 // loop_footer
    %s26 = sadd.s32 1, %s22
  $region7: #{frescat_corner_forward.2} parent=0 // loop_footer_branch
    %21 = sbr.rel target = $region3
  $region8: #{frescat_corner_forward.2} parent=0 // loop_exit
    _

// kernel: frescat_corner_forward.3
$region0: #{frescat_corner_forward.3}
  #allocation0 [shape = 'u32[]', space=smem, size = 0x4, offset = 0x4, fixed_abs, tag = 'smem constant byte address 0x4 - core index']
  #allocation1 [shape = 'u32[144,128]{1,0:T(1,128)}', space=vmem, size = 0x12000, scoped, tag = 'internal scratch']
  %s0 = inlined_call_operand.vmem [shape: f32[2,4,1024], index: 0, kind: input, shape index: {}]
  %s1 = inlined_call_operand.vmem [shape: f32[2,4,1024], index: 1, kind: input, shape index: {}]
  %s2 = inlined_call_operand.vmem [shape: f32[2,4,1024], index: 2, kind: input, shape index: {}]
  %s3 = inlined_call_operand.vmem [shape: f32[4,4], index: 3, kind: input, shape index: {}]
  %s4 = inlined_call_operand.vmem [shape: f32[4,4], index: 4, kind: input, shape index: {}]
  %s5 = inlined_call_operand.vmem [shape: f32[4,1], index: 5, kind: input, shape index: {}]
  %s6 = inlined_call_operand.vmem [shape: f32[2,4,1024], index: 6, kind: output, shape index: {}]
  %s7 = sld [smem:[#allocation0]]
  $region57: #{frescat_corner_forward.3} parent=0
    _
  %s9 = ssub.s32 1, %s7
  %s10 = scalar_select 0, %s9, %s7
  loop: start=0, step=1, limit=4
  $region2: #{frescat_corner_forward.3} parent=0 // loop_pre_header
    _
  $region3: #{frescat_corner_forward.3} parent=0 // loop_header
    %s12 = sphi 0, %s16
    %p13 = scmp.ge.s32.totalorder %s12, 4
    %s19 = sphi 0, %s31
    %s20 = sphi 0, %s27
    %s21 = sphi 0, %s19
    %s22 = sphi 0, %s20
    %s23 = sphi 0, %s21
    %s24 = sphi 0, %s22
    %s36 = sphi 0, %s38
    %s39 = sphi 0, %s36
    %s40 = sphi 0, %s39
    %s56 = sphi 0, %s40
    %s64 = sphi 0, %s66
    %s67 = sphi 0, %s64
    %s68 = sphi 0, %s67
    %s84 = sphi 0, %s68
    %s92 = sphi 0, %s94
    %s95 = sphi 0, %s92
    %s96 = sphi 0, %s95
    %s112 = sphi 0, %s96
    %s116 = sphi 0, %s116
    %s118 = sphi 0, %s116
    %s119 = sphi 0, %s118
    %s133 = sphi 0, %s119
    %s137 = sphi 0, %s137
    %s139 = sphi 0, %s137
    %s140 = sphi 0, %s139
    %s154 = sphi 0, %s140
    %s158 = sphi 0, %s158
    %s160 = sphi 0, %s158
    %s161 = sphi 0, %s160
    %s175 = sphi 0, %s161
    %s183 = sphi 0, %s185
    %s186 = sphi 0, %s183
    %s187 = sphi 0, %s186
    %s203 = sphi 0, %s187
  $region4: #{frescat_corner_forward.3} parent=0 // loop_header_branch
    %15 = sbr.rel (%p13) target = $region8
  $region5: #{frescat_corner_forward.3} parent=0 // loop_body
    %s17 = ssub.s32 %s12, 1
    %s18 = ssub.s32 %s12, 2
    %s25 = sadd.s32 1, %s20
    %p26 = scmp.ge.s32.totalorder %s25, 1
    %s27 = scalar_select %p26, 0, %s25
    %s28 = sadd.s32 1, %s19
    %s29 = scalar_select %p26, %s28, %s19
    %p30 = scmp.ge.s32.totalorder %s29, 2
    %s31 = scalar_select %p30, 0, %s29
    %s32 = ssub.s32 %s19, %s31
    %s33 = ssub.s32 %s20, %s27
    %s34 = sor.u32 %s32, %s33
    %p35 = scmp.eq.s32.totalorder %s34, 0
    %s37 = sadd.s32 %s36, 1
    %s38 = scalar_select %p35, %s36, %s37
    %p41 = pneg %p35
    %p42 = scmp.eq.s32.totalorder %s12, 1
    %p43 = por %p41, %p42
    %p44 = scmp.ne.s32.totalorder %s36, %s39
    %p45 = scmp.eq.s32.totalorder %s12, 0
    %p46 = por %p44, %p45
    %p47 = scmp.ne.s32.totalorder %s36, %s39
    %p48 = scmp.eq.s32.totalorder %s17, 1
    %p49 = por %p47, %p48
    %p50 = scmp.ne.s32.totalorder %s39, %s40
    %p51 = scmp.eq.s32.totalorder %s17, 0
    %p52 = por %p50, %p51
    %p53 = scmp.ne.s32.totalorder %s39, %s40
    %p54 = scmp.eq.s32.totalorder %s18, 1
    %p55 = por %p53, %p54
    %p57 = scmp.ne.s32.totalorder %s40, %s56
    %p58 = scmp.eq.s32.totalorder %s18, 0
    %p59 = por %p57, %p58
    %s60 = ssub.s32 %s19, %s31
    %s61 = ssub.s32 %s20, %s27
    %s62 = sor.u32 %s60, %s61
    %p63 = scmp.eq.s32.totalorder %s62, 0
    %s65 = sadd.s32 %s64, 1
    %s66 = scalar_select %p63, %s64, %s65
    %p69 = pneg %p63
    %p70 = scmp.eq.s32.totalorder %s12, 1
    %p71 = por %p69, %p70
    %p72 = scmp.ne.s32.totalorder %s64, %s67
    %p73 = scmp.eq.s32.totalorder %s12, 0
    %p74 = por %p72, %p73
    %p75 = scmp.ne.s32.totalorder %s64, %s67
    %p76 = scmp.eq.s32.totalorder %s17, 1
    %p77 = por %p75, %p76
    %p78 = scmp.ne.s32.totalorder %s67, %s68
    %p79 = scmp.eq.s32.totalorder %s17, 0
    %p80 = por %p78, %p79
    %p81 = scmp.ne.s32.totalorder %s67, %s68
    %p82 = scmp.eq.s32.totalorder %s18, 1
    %p83 = por %p81, %p82
    %p85 = scmp.ne.s32.totalorder %s68, %s84
    %p86 = scmp.eq.s32.totalorder %s18, 0
    %p87 = por %p85, %p86
    %s88 = ssub.s32 %s19, %s31
    %s89 = ssub.s32 %s20, %s27
    %s90 = sor.u32 %s88, %s89
    %p91 = scmp.eq.s32.totalorder %s90, 0
    %s93 = sadd.s32 %s92, 1
    %s94 = scalar_select %p91, %s92, %s93
    %p97 = pneg %p91
    %p98 = scmp.eq.s32.totalorder %s12, 1
    %p99 = por %p97, %p98
    %p100 = scmp.ne.s32.totalorder %s92, %s95
    %p101 = scmp.eq.s32.totalorder %s12, 0
    %p102 = por %p100, %p101
    %p103 = scmp.ne.s32.totalorder %s92, %s95
    %p104 = scmp.eq.s32.totalorder %s17, 1
    %p105 = por %p103, %p104
    %p106 = scmp.ne.s32.totalorder %s95, %s96
    %p107 = scmp.eq.s32.totalorder %s17, 0
    %p108 = por %p106, %p107
    %p109 = scmp.ne.s32.totalorder %s95, %s96
    %p110 = scmp.eq.s32.totalorder %s18, 1
    %p111 = por %p109, %p110
    %p113 = scmp.ne.s32.totalorder %s96, %s112
    %p114 = scmp.eq.s32.totalorder %s18, 0
    %p115 = por %p113, %p114
    %s117 = sadd.s32 %s116, 1
    %p120 = scmp.eq.s32.totalorder %s12, 1
    %p121 = scmp.ne.s32.totalorder %s116, %s118
    %p122 = scmp.eq.s32.totalorder %s12, 0
    %p123 = por %p121, %p122
    %p124 = scmp.ne.s32.totalorder %s116, %s118
    %p125 = scmp.eq.s32.totalorder %s17, 1
    %p126 = por %p124, %p125
    %p127 = scmp.ne.s32.totalorder %s118, %s119
    %p128 = scmp.eq.s32.totalorder %s17, 0
    %p129 = por %p127, %p128
    %p130 = scmp.ne.s32.totalorder %s118, %s119
    %p131 = scmp.eq.s32.totalorder %s18, 1
    %p132 = por %p130, %p131
    %p134 = scmp.ne.s32.totalorder %s119, %s133
    %p135 = scmp.eq.s32.totalorder %s18, 0
    %p136 = por %p134, %p135
    %s138 = sadd.s32 %s137, 1
    %p141 = scmp.eq.s32.totalorder %s12, 1
    %p142 = scmp.ne.s32.totalorder %s137, %s139
    %p143 = scmp.eq.s32.totalorder %s12, 0
    %p144 = por %p142, %p143
    %p145 = scmp.ne.s32.totalorder %s137, %s139
    %p146 = scmp.eq.s32.totalorder %s17, 1
    %p147 = por %p145, %p146
    %p148 = scmp.ne.s32.totalorder %s139, %s140
    %p149 = scmp.eq.s32.totalorder %s17, 0
    %p150 = por %p148, %p149
    %p151 = scmp.ne.s32.totalorder %s139, %s140
    %p152 = scmp.eq.s32.totalorder %s18, 1
    %p153 = por %p151, %p152
    %p155 = scmp.ne.s32.totalorder %s140, %s154
    %p156 = scmp.eq.s32.totalorder %s18, 0
    %p157 = por %p155, %p156
    %s159 = sadd.s32 %s158, 1
    %p162 = scmp.eq.s32.totalorder %s12, 1
    %p163 = scmp.ne.s32.totalorder %s158, %s160
    %p164 = scmp.eq.s32.totalorder %s12, 0
    %p165 = por %p163, %p164
    %p166 = scmp.ne.s32.totalorder %s158, %s160
    %p167 = scmp.eq.s32.totalorder %s17, 1
    %p168 = por %p166, %p167
    %p169 = scmp.ne.s32.totalorder %s160, %s161
    %p170 = scmp.eq.s32.totalorder %s17, 0
    %p171 = por %p169, %p170
    %p172 = scmp.ne.s32.totalorder %s160, %s161
    %p173 = scmp.eq.s32.totalorder %s18, 1
    %p174 = por %p172, %p173
    %p176 = scmp.ne.s32.totalorder %s161, %s175
    %p177 = scmp.eq.s32.totalorder %s18, 0
    %p178 = por %p176, %p177
    %s179 = ssub.s32 %s19, %s31
    %s180 = ssub.s32 %s20, %s27
    %s181 = sor.u32 %s179, %s180
    %p182 = scmp.eq.s32.totalorder %s181, 0
    %s184 = sadd.s32 %s183, 1
    %s185 = scalar_select %p182, %s183, %s184
    %p188 = pneg %p182
    %p189 = scmp.eq.s32.totalorder %s12, 1
    %p190 = por %p188, %p189
    %p191 = scmp.ne.s32.totalorder %s183, %s186
    %p192 = scmp.eq.s32.totalorder %s12, 0
    %p193 = por %p191, %p192
    %p194 = scmp.ne.s32.totalorder %s183, %s186
    %p195 = scmp.eq.s32.totalorder %s17, 1
    %p196 = por %p194, %p195
    %p197 = scmp.ne.s32.totalorder %s186, %s187
    %p198 = scmp.eq.s32.totalorder %s17, 0
    %p199 = por %p197, %p198
    %p200 = scmp.ne.s32.totalorder %s186, %s187
    %p201 = scmp.eq.s32.totalorder %s18, 1
    %p202 = por %p200, %p201
    %p204 = scmp.ne.s32.totalorder %s187, %s203
    %p205 = scmp.eq.s32.totalorder %s18, 0
    %p206 = por %p204, %p205
    %p207 = scmp.le.s32.totalorder 1, %s12
    %p208 = scmp.lt.s32.totalorder %s12, 3
    %p209 = pnand %p207, %p208
    %p210 = pneg %p209
    // Predicated region
    $region9: #{frescat_corner_forward.3} parent=5 // pred_check
      _
    $region10: #{frescat_corner_forward.3} parent=5 // pred_check_branch
      %212 = sbr.rel (%p209) target = $region12
    $region11: #{frescat_corner_forward.3} parent=5 // pred_region
      %s213 = ssub.s32 %s12, 1
      // Predicated region
      $region13: #{frescat_corner_forward.3} parent=11 // pred_check
        %p214 = pneg %p129
      $region14: #{frescat_corner_forward.3} parent=11 // pred_check_branch
        %216 = sbr.rel (%p214) target = $region16
      $region15: #{frescat_corner_forward.3} parent=11 // pred_region
        _
      $region16: #{frescat_corner_forward.3} parent=11 // pred_fallthru
        _
      // Predicated region
      $region17: #{frescat_corner_forward.3} parent=11 // pred_check
        %p217 = pneg %p150
      $region18: #{frescat_corner_forward.3} parent=11 // pred_check_branch
        %219 = sbr.rel (%p217) target = $region20
      $region19: #{frescat_corner_forward.3} parent=11 // pred_region
        _
      $region20: #{frescat_corner_forward.3} parent=11 // pred_fallthru
        _
      // Predicated region
      $region21: #{frescat_corner_forward.3} parent=11 // pred_check
        %p220 = pneg %p171
      $region22: #{frescat_corner_forward.3} parent=11 // pred_check_branch
        %222 = sbr.rel (%p220) target = $region24
      $region23: #{frescat_corner_forward.3} parent=11 // pred_region
        _
      $region24: #{frescat_corner_forward.3} parent=11 // pred_fallthru
        _
    $region12: #{frescat_corner_forward.3} parent=5 // pred_fallthru
      _
    %p223 = scmp.lt.s32.totalorder %s12, 2
    // Predicated region
    $region25: #{frescat_corner_forward.3} parent=5 // pred_check
      %p224 = pneg %p223
    $region26: #{frescat_corner_forward.3} parent=5 // pred_check_branch
      %226 = sbr.rel (%p224) target = $region28
    $region27: #{frescat_corner_forward.3} parent=5 // pred_region
      // Predicated region
      $region29: #{frescat_corner_forward.3} parent=27 // pred_check
        %p227 = pneg %p46
      $region30: #{frescat_corner_forward.3} parent=27 // pred_check_branch
        %229 = sbr.rel (%p227) target = $region32
      $region31: #{frescat_corner_forward.3} parent=27 // pred_region
        %s230 = smul.u32 8, %s20
        %p231 = scmp.lt.s32.totalorder %s19, 1
        %s232 = scalar_select %p231, %s19, 1
        %p233 = scmp.lt.s32.totalorder %s230, 7
        %s234 = scalar_select %p233, %s230, 7
        %s235 = smul.addr %s232, 8
        %s236 = sadd.s32 %s234, %s235
        %s237 = smul.addr %s236, 4
        %s238 = scalar_lea.vmem %s0, %s237
        %s239 = smul.u32 8, %s20
      $region32: #{frescat_corner_forward.3} parent=27 // pred_fallthru
        _
      // Predicated region
      $region33: #{frescat_corner_forward.3} parent=27 // pred_check
        %p240 = pneg %p74
      $region34: #{frescat_corner_forward.3} parent=27 // pred_check_branch
        %242 = sbr.rel (%p240) target = $region36
      $region35: #{frescat_corner_forward.3} parent=27 // pred_region
        %s243 = smul.u32 8, %s20
        %p244 = scmp.lt.s32.totalorder %s19, 1
        %s245 = scalar_select %p244, %s19, 1
        %p246 = scmp.lt.s32.totalorder %s243, 7
        %s247 = scalar_select %p246, %s243, 7
        %s248 = smul.addr %s245, 8
        %s249 = sadd.s32 %s247, %s248
        %s250 = smul.addr %s249, 4
        %s251 = scalar_lea.vmem %s1, %s250
        %s252 = smul.u32 8, %s20
      $region36: #{frescat_corner_forward.3} parent=27 // pred_fallthru
        _
      // Predicated region
      $region37: #{frescat_corner_forward.3} parent=27 // pred_check
        %p253 = pneg %p102
      $region38: #{frescat_corner_forward.3} parent=27 // pred_check_branch
        %255 = sbr.rel (%p253) target = $region40
      $region39: #{frescat_corner_forward.3} parent=27 // pred_region
        %s256 = smul.u32 8, %s20
        %p257 = scmp.lt.s32.totalorder %s19, 1
        %s258 = scalar_select %p257, %s19, 1
        %p259 = scmp.lt.s32.totalorder %s256, 7
        %s260 = scalar_select %p259, %s256, 7
        %s261 = smul.addr %s258, 8
        %s262 = sadd.s32 %s260, %s261
        %s263 = smul.addr %s262, 4
        %s264 = scalar_lea.vmem %s2, %s263
        %s265 = smul.u32 8, %s20
      $region40: #{frescat_corner_forward.3} parent=27 // pred_fallthru
        _
    $region28: #{frescat_corner_forward.3} parent=5 // pred_fallthru
      _
    %p266 = scmp.le.s32.totalorder 1, %s12
    %p267 = scmp.lt.s32.totalorder %s12, 3
    %p268 = pnand %p266, %p267
    %p269 = pneg %p268
    // Predicated region
    $region41: #{frescat_corner_forward.3} parent=5 // pred_check
      _
    $region42: #{frescat_corner_forward.3} parent=5 // pred_check_branch
      %271 = sbr.rel (%p268) target = $region44
    $region43: #{frescat_corner_forward.3} parent=5 // pred_region
      %s272 = ssub.s32 %s12, 1
      %s273 = smul.u32 8, %s22
      %p274 = scmp.lt.s32.totalorder %s21, 1
      %s275 = scalar_select %p274, %s21, 1
      %p276 = scmp.lt.s32.totalorder %s273, 7
      %s277 = scalar_select %p276, %s273, 7
      %s278 = smul.addr %s275, 8
      %s279 = sadd.s32 %s277, %s278
      %s280 = smul.addr %s279, 4
      %s281 = scalar_lea.vmem %s0, %s280
      %p282 = pneg %p52
      %p283 = pneg %p49
      %s284 = smul.u32 8, %s22
      %p285 = scmp.lt.s32.totalorder %s21, 1
      %s286 = scalar_select %p285, %s21, 1
      %p287 = scmp.lt.s32.totalorder %s284, 7
      %s288 = scalar_select %p287, %s284, 7
      %s289 = smul.addr %s286, 8
      %s290 = sadd.s32 %s288, %s289
      %s291 = smul.addr %s290, 4
      %s292 = scalar_lea.vmem %s1, %s291
      %p293 = pneg %p80
      %p294 = pneg %p77
      %s295 = smul.u32 8, %s22
      %p296 = scmp.lt.s32.totalorder %s21, 1
      %s297 = scalar_select %p296, %s21, 1
      %p298 = scmp.lt.s32.totalorder %s295, 7
      %s299 = scalar_select %p298, %s295, 7
      %s300 = smul.addr %s297, 8
      %s301 = sadd.s32 %s299, %s300
      %s302 = smul.addr %s301, 4
      %s303 = scalar_lea.vmem %s2, %s302
      %p304 = pneg %p108
      %p305 = pneg %p105
      %p306 = pneg %p129
      %p307 = pneg %p126
      %p308 = pneg %p150
      %p309 = pneg %p147
      %p310 = pneg %p171
      %p311 = pneg %p168
      %p312 = pneg %p199
      %p313 = pneg %p196
      %s314 = smul.u32 8, %s22
      %p315 = scmp.lt.s32.totalorder %s21, 1
      %s316 = scalar_select %p315, %s21, 1
      %p317 = scmp.lt.s32.totalorder %s314, 7
      %s318 = scalar_select %p317, %s314, 7
      %s319 = smul.addr %s316, 8
      %s320 = sadd.s32 %s318, %s319
      %s321 = smul.addr %s320, 4
      %s322 = scalar_lea.vmem %s6, %s321
      %s323 = smul.u32 8, %s22
      %p324 = scmp.lt.s32.totalorder %s21, 1
      %s325 = scalar_select %p324, %s21, 1
      %p326 = scmp.lt.s32.totalorder %s323, 7
      %s327 = scalar_select %p326, %s323, 7
      %s328 = smul.addr %s325, 8
      %s329 = sadd.s32 %s327, %s328
      %s330 = smul.addr %s329, 4
      %s331 = scalar_lea.vmem %s0, %s330
      %s332 = smul.u32 8, %s22
      %s333 = smul.u32 8, %s22
      %p334 = scmp.lt.s32.totalorder %s21, 1
      %s335 = scalar_select %p334, %s21, 1
      %p336 = scmp.lt.s32.totalorder %s333, 7
      %s337 = scalar_select %p336, %s333, 7
      %s338 = smul.addr %s335, 8
      %s339 = sadd.s32 %s337, %s338
      %s340 = smul.addr %s339, 4
      %s341 = scalar_lea.vmem %s1, %s340
      %s342 = smul.u32 8, %s22
      %s343 = smul.u32 8, %s22
      %p344 = scmp.lt.s32.totalorder %s21, 1
      %s345 = scalar_select %p344, %s21, 1
      %p346 = scmp.lt.s32.totalorder %s343, 7
      %s347 = scalar_select %p346, %s343, 7
      %s348 = smul.addr %s345, 8
      %s349 = sadd.s32 %s347, %s348
      %s350 = smul.addr %s349, 4
      %s351 = scalar_lea.vmem %s2, %s350
      %s352 = smul.u32 8, %s22
      %s353 = smul.u32 8, %s22
      %p354 = scmp.lt.s32.totalorder %s21, 1
      %s355 = scalar_select %p354, %s21, 1
      %p356 = scmp.lt.s32.totalorder %s353, 7
      %s357 = scalar_select %p356, %s353, 7
      %s358 = smul.addr %s355, 8
      %s359 = sadd.s32 %s357, %s358
      %s360 = smul.addr %s359, 4
      %s361 = scalar_lea.vmem %s6, %s360
      %s362 = smul.u32 8, %s22
      %v363 = vld [vmem:[%s341] sm:$0xff]
      %v364 = vld [vmem:[%s341 + $0x8] sm:$0xff]
      %v365 = vld [vmem:[%s341 + $0x10] sm:$0xff]
      %v366 = vld [vmem:[%s341 + $0x18] sm:$0xff]
      %v367 = vld [vmem:[%s351] sm:$0xff]
      %v368 = vld [vmem:[%s351 + $0x8] sm:$0xff]
      %v369 = vld [vmem:[%s351 + $0x10] sm:$0xff]
      %v370 = vld [vmem:[%s351 + $0x18] sm:$0xff]
      %v371 = vmul.f32 %v363, %v363
      %v372 = vmul.f32 %v364, %v364
      %v373 = vmul.f32 %v365, %v365
      %v374 = vmul.f32 %v366, %v366
      %v375 = vmul.f32 %v367, %v367
      %v376 = vmul.f32 %v368, %v368
      %v377 = vmul.f32 %v369, %v369
      %v378 = vmul.f32 %v370, %v370
      %v379 = vadd.f32 %v371, %v375
      %v380 = vadd.f32 %v372, %v376
      %v381 = vadd.f32 %v373, %v377
      %v382 = vadd.f32 %v374, %v378
      %v383 = vrsqrt.pop %v379
      %v384 = vmul.f32 %v379, %v383
      %vm385 = vcmp.eq.f32.partialorder %v379, inf
      %v386 = vsel %vm385, %v379, %v384
      %vm387 = vcmp.eq.f32.partialorder %v379, 0.0
      %v388 = vand.u32 %v379, 2147483648
      %v389 = vsel %vm387, %v388, %v386
      %v390 = vrsqrt.pop %v380
      %v391 = vmul.f32 %v380, %v390
      %vm392 = vcmp.eq.f32.partialorder %v380, inf
      %v393 = vsel %vm392, %v380, %v391
      %vm394 = vcmp.eq.f32.partialorder %v380, 0.0
      %v395 = vand.u32 %v380, 2147483648
      %v396 = vsel %vm394, %v395, %v393
      %v397 = vrsqrt.pop %v381
      %v398 = vmul.f32 %v381, %v397
      %vm399 = vcmp.eq.f32.partialorder %v381, inf
      %v400 = vsel %vm399, %v381, %v398
      %vm401 = vcmp.eq.f32.partialorder %v381, 0.0
      %v402 = vand.u32 %v381, 2147483648
      %v403 = vsel %vm401, %v402, %v400
      %v404 = vrsqrt.pop %v382
      %v405 = vmul.f32 %v382, %v404
      %vm406 = vcmp.eq.f32.partialorder %v382, inf
      %v407 = vsel %vm406, %v382, %v405
      %vm408 = vcmp.eq.f32.partialorder %v382, 0.0
      %v409 = vand.u32 %v382, 2147483648
      %v410 = vsel %vm408, %v409, %v407
      %v411 = vld [vmem:[%s331] sm:$0xff]
      %v412 = vld [vmem:[%s331 + $0x8] sm:$0xff]
      %v413 = vld [vmem:[%s331 + $0x10] sm:$0xff]
      %v414 = vld [vmem:[%s331 + $0x18] sm:$0xff]
      %v415 = vld [vmem:[%s3] sm:$0xf]
      %417 = vset.pattern.permute.xlu0 0
      %418 = vperm.xlu0 %417, %v415
      %v419 = vpop.permute.xlu0 %418
      %v425 = vlaneseq
      %v426 = vshrl.u32 %v425, 7
      %v427 = vsub.s32 0, %v426
      %v428 = vrot.slane %v411, %v427
      %v429 = vlaneseq
      %v430 = vshrl.u32 %v429, 7
      %v431 = vsub.s32 4, %v430
      %v432 = vrot.slane %v411, %v431
      %v433 = vlaneseq
      %v434 = vshrl.u32 %v433, 7
      %v435 = vsub.s32 0, %v434
      %v436 = vrot.slane %v412, %v435
      %v437 = vlaneseq
      %v438 = vshrl.u32 %v437, 7
      %v439 = vsub.s32 4, %v438
      %v440 = vrot.slane %v412, %v439
      %v441 = vlaneseq
      %v442 = vshrl.u32 %v441, 7
      %v443 = vsub.s32 0, %v442
      %v444 = vrot.slane %v413, %v443
      %v445 = vlaneseq
      %v446 = vshrl.u32 %v445, 7
      %v447 = vsub.s32 4, %v446
      %v448 = vrot.slane %v413, %v447
      %v449 = vlaneseq
      %v450 = vshrl.u32 %v449, 7
      %v451 = vsub.s32 0, %v450
      %v452 = vrot.slane %v414, %v451
      %v453 = vlaneseq
      %v454 = vshrl.u32 %v453, 7
      %v455 = vsub.s32 4, %v454
      %v456 = vrot.slane %v414, %v455
      %v465 = vlaneseq
      %v466 = vshrl.u32 %v465, 7
      %v467 = vsub.s32 0, %v466
      %v468 = vrot.slane %v428, %v467
      %v469 = vlaneseq
      %v470 = vshrl.u32 %v469, 7
      %v471 = vsub.s32 0, %v470
      %v472 = vrot.slane %v432, %v471
      %v473 = vlaneseq
      %v474 = vshrl.u32 %v473, 7
      %v475 = vsub.s32 0, %v474
      %v476 = vrot.slane %v436, %v475
      %v477 = vlaneseq
      %v478 = vshrl.u32 %v477, 7
      %v479 = vsub.s32 0, %v478
      %v480 = vrot.slane %v440, %v479
      %v481 = vlaneseq
      %v482 = vshrl.u32 %v481, 7
      %v483 = vsub.s32 0, %v482
      %v484 = vrot.slane %v444, %v483
      %v485 = vlaneseq
      %v486 = vshrl.u32 %v485, 7
      %v487 = vsub.s32 0, %v486
      %v488 = vrot.slane %v448, %v487
      %v489 = vlaneseq
      %v490 = vshrl.u32 %v489, 7
      %v491 = vsub.s32 0, %v490
      %v492 = vrot.slane %v452, %v491
      %v493 = vlaneseq
      %v494 = vshrl.u32 %v493, 7
      %v495 = vsub.s32 0, %v494
      %v496 = vrot.slane %v456, %v495
      %v497 = vmul.f32 %v419, %v468
      %v498 = vmul.f32 %v419, %v472
      %v499 = vmul.f32 %v419, %v476
      %v500 = vmul.f32 %v419, %v480
      %v501 = vmul.f32 %v419, %v484
      %v502 = vmul.f32 %v419, %v488
      %v503 = vmul.f32 %v419, %v492
      %v504 = vmul.f32 %v419, %v496
      %505 = vset.pattern.permute.xlu0 1
      %506 = vperm.xlu0 %505, %v415
      %v507 = vpop.permute.xlu0 %506
      %v509 = vlaneseq
      %v510 = vshrl.u32 %v509, 7
      %v511 = vsub.s32 1, %v510
      %v512 = vrot.slane %v411, %v511
      %v513 = vlaneseq
      %v514 = vshrl.u32 %v513, 7
      %v515 = vsub.s32 5, %v514
      %v516 = vrot.slane %v411, %v515
      %v517 = vlaneseq
      %v518 = vshrl.u32 %v517, 7
      %v519 = vsub.s32 1, %v518
      %v520 = vrot.slane %v412, %v519
      %v521 = vlaneseq
      %v522 = vshrl.u32 %v521, 7
      %v523 = vsub.s32 5, %v522
      %v524 = vrot.slane %v412, %v523
      %v525 = vlaneseq
      %v526 = vshrl.u32 %v525, 7
      %v527 = vsub.s32 1, %v526
      %v528 = vrot.slane %v413, %v527
      %v529 = vlaneseq
      %v530 = vshrl.u32 %v529, 7
      %v531 = vsub.s32 5, %v530
      %v532 = vrot.slane %v413, %v531
      %v533 = vlaneseq
      %v534 = vshrl.u32 %v533, 7
      %v535 = vsub.s32 1, %v534
      %v536 = vrot.slane %v414, %v535
      %v537 = vlaneseq
      %v538 = vshrl.u32 %v537, 7
      %v539 = vsub.s32 5, %v538
      %v540 = vrot.slane %v414, %v539
      %v549 = vlaneseq
      %v550 = vshrl.u32 %v549, 7
      %v551 = vsub.s32 1, %v550
      %v552 = vrot.slane %v512, %v551
      %v553 = vlaneseq
      %v554 = vshrl.u32 %v553, 7
      %v555 = vsub.s32 1, %v554
      %v556 = vrot.slane %v516, %v555
      %v557 = vlaneseq
      %v558 = vshrl.u32 %v557, 7
      %v559 = vsub.s32 1, %v558
      %v560 = vrot.slane %v520, %v559
      %v561 = vlaneseq
      %v562 = vshrl.u32 %v561, 7
      %v563 = vsub.s32 1, %v562
      %v564 = vrot.slane %v524, %v563
      %v565 = vlaneseq
      %v566 = vshrl.u32 %v565, 7
      %v567 = vsub.s32 1, %v566
      %v568 = vrot.slane %v528, %v567
      %v569 = vlaneseq
      %v570 = vshrl.u32 %v569, 7
      %v571 = vsub.s32 1, %v570
      %v572 = vrot.slane %v532, %v571
      %v573 = vlaneseq
      %v574 = vshrl.u32 %v573, 7
      %v575 = vsub.s32 1, %v574
      %v576 = vrot.slane %v536, %v575
      %v577 = vlaneseq
      %v578 = vshrl.u32 %v577, 7
      %v579 = vsub.s32 1, %v578
      %v580 = vrot.slane %v540, %v579
      %v581 = vmul.f32 %v507, %v552
      %v582 = vmul.f32 %v507, %v556
      %v583 = vmul.f32 %v507, %v560
      %v584 = vmul.f32 %v507, %v564
      %v585 = vmul.f32 %v507, %v568
      %v586 = vmul.f32 %v507, %v572
      %v587 = vmul.f32 %v507, %v576
      %v588 = vmul.f32 %v507, %v580
      %v589 = vadd.f32 %v497, %v581
      %v590 = vadd.f32 %v498, %v582
      %v591 = vadd.f32 %v499, %v583
      %v592 = vadd.f32 %v500, %v584
      %v593 = vadd.f32 %v501, %v585
      %v594 = vadd.f32 %v502, %v586
      %v595 = vadd.f32 %v503, %v587
      %v596 = vadd.f32 %v504, %v588
      %597 = vset.pattern.permute.xlu0 2
      %598 = vperm.xlu0 %597, %v415
      %v599 = vpop.permute.xlu0 %598
      %v601 = vlaneseq
      %v602 = vshrl.u32 %v601, 7
      %v603 = vsub.s32 2, %v602
      %v604 = vrot.slane %v411, %v603
      %v605 = vlaneseq
      %v606 = vshrl.u32 %v605, 7
      %v607 = vsub.s32 6, %v606
      %v608 = vrot.slane %v411, %v607
      %v609 = vlaneseq
      %v610 = vshrl.u32 %v609, 7
      %v611 = vsub.s32 2, %v610
      %v612 = vrot.slane %v412, %v611
      %v613 = vlaneseq
      %v614 = vshrl.u32 %v613, 7
      %v615 = vsub.s32 6, %v614
      %v616 = vrot.slane %v412, %v615
      %v617 = vlaneseq
      %v618 = vshrl.u32 %v617, 7
      %v619 = vsub.s32 2, %v618
      %v620 = vrot.slane %v413, %v619
      %v621 = vlaneseq
      %v622 = vshrl.u32 %v621, 7
      %v623 = vsub.s32 6, %v622
      %v624 = vrot.slane %v413, %v623
      %v625 = vlaneseq
      %v626 = vshrl.u32 %v625, 7
      %v627 = vsub.s32 2, %v626
      %v628 = vrot.slane %v414, %v627
      %v629 = vlaneseq
      %v630 = vshrl.u32 %v629, 7
      %v631 = vsub.s32 6, %v630
      %v632 = vrot.slane %v414, %v631
      %v641 = vlaneseq
      %v642 = vshrl.u32 %v641, 7
      %v643 = vsub.s32 2, %v642
      %v644 = vrot.slane %v604, %v643
      %v645 = vlaneseq
      %v646 = vshrl.u32 %v645, 7
      %v647 = vsub.s32 2, %v646
      %v648 = vrot.slane %v608, %v647
      %v649 = vlaneseq
      %v650 = vshrl.u32 %v649, 7
      %v651 = vsub.s32 2, %v650
      %v652 = vrot.slane %v612, %v651
      %v653 = vlaneseq
      %v654 = vshrl.u32 %v653, 7
      %v655 = vsub.s32 2, %v654
      %v656 = vrot.slane %v616, %v655
      %v657 = vlaneseq
      %v658 = vshrl.u32 %v657, 7
      %v659 = vsub.s32 2, %v658
      %v660 = vrot.slane %v620, %v659
      %v661 = vlaneseq
      %v662 = vshrl.u32 %v661, 7
      %v663 = vsub.s32 2, %v662
      %v664 = vrot.slane %v624, %v663
      %v665 = vlaneseq
      %v666 = vshrl.u32 %v665, 7
      %v667 = vsub.s32 2, %v666
      %v668 = vrot.slane %v628, %v667
      %v669 = vlaneseq
      %v670 = vshrl.u32 %v669, 7
      %v671 = vsub.s32 2, %v670
      %v672 = vrot.slane %v632, %v671
      %v673 = vmul.f32 %v599, %v644
      %v674 = vmul.f32 %v599, %v648
      %v675 = vmul.f32 %v599, %v652
      %v676 = vmul.f32 %v599, %v656
      %v677 = vmul.f32 %v599, %v660
      %v678 = vmul.f32 %v599, %v664
      %v679 = vmul.f32 %v599, %v668
      %v680 = vmul.f32 %v599, %v672
      %v681 = vadd.f32 %v589, %v673
      %v682 = vadd.f32 %v590, %v674
      %v683 = vadd.f32 %v591, %v675
      %v684 = vadd.f32 %v592, %v676
      %v685 = vadd.f32 %v593, %v677
      %v686 = vadd.f32 %v594, %v678
      %v687 = vadd.f32 %v595, %v679
      %v688 = vadd.f32 %v596, %v680
      %689 = vset.pattern.permute.xlu0 3
      %690 = vperm.xlu0 %689, %v415
      %v691 = vpop.permute.xlu0 %690
      %v693 = vlaneseq
      %v694 = vshrl.u32 %v693, 7
      %v695 = vsub.s32 3, %v694
      %v696 = vrot.slane %v411, %v695
      %v697 = vlaneseq
      %v698 = vshrl.u32 %v697, 7
      %v699 = vsub.s32 7, %v698
      %v700 = vrot.slane %v411, %v699
      %v701 = vlaneseq
      %v702 = vshrl.u32 %v701, 7
      %v703 = vsub.s32 3, %v702
      %v704 = vrot.slane %v412, %v703
      %v705 = vlaneseq
      %v706 = vshrl.u32 %v705, 7
      %v707 = vsub.s32 7, %v706
      %v708 = vrot.slane %v412, %v707
      %v709 = vlaneseq
      %v710 = vshrl.u32 %v709, 7
      %v711 = vsub.s32 3, %v710
      %v712 = vrot.slane %v413, %v711
      %v713 = vlaneseq
      %v714 = vshrl.u32 %v713, 7
      %v715 = vsub.s32 7, %v714
      %v716 = vrot.slane %v413, %v715
      %v717 = vlaneseq
      %v718 = vshrl.u32 %v717, 7
      %v719 = vsub.s32 3, %v718
      %v720 = vrot.slane %v414, %v719
      %v721 = vlaneseq
      %v722 = vshrl.u32 %v721, 7
      %v723 = vsub.s32 7, %v722
      %v724 = vrot.slane %v414, %v723
      %v733 = vlaneseq
      %v734 = vshrl.u32 %v733, 7
      %v735 = vsub.s32 3, %v734
      %v736 = vrot.slane %v696, %v735
      %v737 = vlaneseq
      %v738 = vshrl.u32 %v737, 7
      %v739 = vsub.s32 3, %v738
      %v740 = vrot.slane %v700, %v739
      %v741 = vlaneseq
      %v742 = vshrl.u32 %v741, 7
      %v743 = vsub.s32 3, %v742
      %v744 = vrot.slane %v704, %v743
      %v745 = vlaneseq
      %v746 = vshrl.u32 %v745, 7
      %v747 = vsub.s32 3, %v746
      %v748 = vrot.slane %v708, %v747
      %v749 = vlaneseq
      %v750 = vshrl.u32 %v749, 7
      %v751 = vsub.s32 3, %v750
      %v752 = vrot.slane %v712, %v751
      %v753 = vlaneseq
      %v754 = vshrl.u32 %v753, 7
      %v755 = vsub.s32 3, %v754
      %v756 = vrot.slane %v716, %v755
      %v757 = vlaneseq
      %v758 = vshrl.u32 %v757, 7
      %v759 = vsub.s32 3, %v758
      %v760 = vrot.slane %v720, %v759
      %v761 = vlaneseq
      %v762 = vshrl.u32 %v761, 7
      %v763 = vsub.s32 3, %v762
      %v764 = vrot.slane %v724, %v763
      %v765 = vmul.f32 %v691, %v736
      %v766 = vmul.f32 %v691, %v740
      %v767 = vmul.f32 %v691, %v744
      %v768 = vmul.f32 %v691, %v748
      %v769 = vmul.f32 %v691, %v752
      %v770 = vmul.f32 %v691, %v756
      %v771 = vmul.f32 %v691, %v760
      %v772 = vmul.f32 %v691, %v764
      %v773 = vadd.f32 %v681, %v765
      %v774 = vadd.f32 %v682, %v766
      %v775 = vadd.f32 %v683, %v767
      %v776 = vadd.f32 %v684, %v768
      %v777 = vadd.f32 %v685, %v769
      %v778 = vadd.f32 %v686, %v770
      %v779 = vadd.f32 %v687, %v771
      %v780 = vadd.f32 %v688, %v772
      %v781 = vld [vmem:[%s4] sm:$0xf]
      %783 = vset.pattern.permute.xlu0 0
      %784 = vperm.xlu0 %783, %v781
      %v785 = vpop.permute.xlu0 %784
      %v791 = vlaneseq
      %v792 = vshrl.u32 %v791, 7
      %v793 = vsub.s32 0, %v792
      %v794 = vrot.slane %v389, %v793
      %v795 = vlaneseq
      %v796 = vshrl.u32 %v795, 7
      %v797 = vsub.s32 4, %v796
      %v798 = vrot.slane %v389, %v797
      %v799 = vlaneseq
      %v800 = vshrl.u32 %v799, 7
      %v801 = vsub.s32 0, %v800
      %v802 = vrot.slane %v396, %v801
      %v803 = vlaneseq
      %v804 = vshrl.u32 %v803, 7
      %v805 = vsub.s32 4, %v804
      %v806 = vrot.slane %v396, %v805
      %v807 = vlaneseq
      %v808 = vshrl.u32 %v807, 7
      %v809 = vsub.s32 0, %v808
      %v810 = vrot.slane %v403, %v809
      %v811 = vlaneseq
      %v812 = vshrl.u32 %v811, 7
      %v813 = vsub.s32 4, %v812
      %v814 = vrot.slane %v403, %v813
      %v815 = vlaneseq
      %v816 = vshrl.u32 %v815, 7
      %v817 = vsub.s32 0, %v816
      %v818 = vrot.slane %v410, %v817
      %v819 = vlaneseq
      %v820 = vshrl.u32 %v819, 7
      %v821 = vsub.s32 4, %v820
      %v822 = vrot.slane %v410, %v821
      %v831 = vlaneseq
      %v832 = vshrl.u32 %v831, 7
      %v833 = vsub.s32 0, %v832
      %v834 = vrot.slane %v794, %v833
      %v835 = vlaneseq
      %v836 = vshrl.u32 %v835, 7
      %v837 = vsub.s32 0, %v836
      %v838 = vrot.slane %v798, %v837
      %v839 = vlaneseq
      %v840 = vshrl.u32 %v839, 7
      %v841 = vsub.s32 0, %v840
      %v842 = vrot.slane %v802, %v841
      %v843 = vlaneseq
      %v844 = vshrl.u32 %v843, 7
      %v845 = vsub.s32 0, %v844
      %v846 = vrot.slane %v806, %v845
      %v847 = vlaneseq
      %v848 = vshrl.u32 %v847, 7
      %v849 = vsub.s32 0, %v848
      %v850 = vrot.slane %v810, %v849
      %v851 = vlaneseq
      %v852 = vshrl.u32 %v851, 7
      %v853 = vsub.s32 0, %v852
      %v854 = vrot.slane %v814, %v853
      %v855 = vlaneseq
      %v856 = vshrl.u32 %v855, 7
      %v857 = vsub.s32 0, %v856
      %v858 = vrot.slane %v818, %v857
      %v859 = vlaneseq
      %v860 = vshrl.u32 %v859, 7
      %v861 = vsub.s32 0, %v860
      %v862 = vrot.slane %v822, %v861
      %v863 = vmul.f32 %v785, %v834
      %v864 = vmul.f32 %v785, %v838
      %v865 = vmul.f32 %v785, %v842
      %v866 = vmul.f32 %v785, %v846
      %v867 = vmul.f32 %v785, %v850
      %v868 = vmul.f32 %v785, %v854
      %v869 = vmul.f32 %v785, %v858
      %v870 = vmul.f32 %v785, %v862
      %871 = vset.pattern.permute.xlu0 1
      %872 = vperm.xlu0 %871, %v781
      %v873 = vpop.permute.xlu0 %872
      %v875 = vlaneseq
      %v876 = vshrl.u32 %v875, 7
      %v877 = vsub.s32 1, %v876
      %v878 = vrot.slane %v389, %v877
      %v879 = vlaneseq
      %v880 = vshrl.u32 %v879, 7
      %v881 = vsub.s32 5, %v880
      %v882 = vrot.slane %v389, %v881
      %v883 = vlaneseq
      %v884 = vshrl.u32 %v883, 7
      %v885 = vsub.s32 1, %v884
      %v886 = vrot.slane %v396, %v885
      %v887 = vlaneseq
      %v888 = vshrl.u32 %v887, 7
      %v889 = vsub.s32 5, %v888
      %v890 = vrot.slane %v396, %v889
      %v891 = vlaneseq
      %v892 = vshrl.u32 %v891, 7
      %v893 = vsub.s32 1, %v892
      %v894 = vrot.slane %v403, %v893
      %v895 = vlaneseq
      %v896 = vshrl.u32 %v895, 7
      %v897 = vsub.s32 5, %v896
      %v898 = vrot.slane %v403, %v897
      %v899 = vlaneseq
      %v900 = vshrl.u32 %v899, 7
      %v901 = vsub.s32 1, %v900
      %v902 = vrot.slane %v410, %v901
      %v903 = vlaneseq
      %v904 = vshrl.u32 %v903, 7
      %v905 = vsub.s32 5, %v904
      %v906 = vrot.slane %v410, %v905
      %v915 = vlaneseq
      %v916 = vshrl.u32 %v915, 7
      %v917 = vsub.s32 1, %v916
      %v918 = vrot.slane %v878, %v917
      %v919 = vlaneseq
      %v920 = vshrl.u32 %v919, 7
      %v921 = vsub.s32 1, %v920
      %v922 = vrot.slane %v882, %v921
      %v923 = vlaneseq
      %v924 = vshrl.u32 %v923, 7
      %v925 = vsub.s32 1, %v924
      %v926 = vrot.slane %v886, %v925
      %v927 = vlaneseq
      %v928 = vshrl.u32 %v927, 7
      %v929 = vsub.s32 1, %v928
      %v930 = vrot.slane %v890, %v929
      %v931 = vlaneseq
      %v932 = vshrl.u32 %v931, 7
      %v933 = vsub.s32 1, %v932
      %v934 = vrot.slane %v894, %v933
      %v935 = vlaneseq
      %v936 = vshrl.u32 %v935, 7
      %v937 = vsub.s32 1, %v936
      %v938 = vrot.slane %v898, %v937
      %v939 = vlaneseq
      %v940 = vshrl.u32 %v939, 7
      %v941 = vsub.s32 1, %v940
      %v942 = vrot.slane %v902, %v941
      %v943 = vlaneseq
      %v944 = vshrl.u32 %v943, 7
      %v945 = vsub.s32 1, %v944
      %v946 = vrot.slane %v906, %v945
      %v947 = vmul.f32 %v873, %v918
      %v948 = vmul.f32 %v873, %v922
      %v949 = vmul.f32 %v873, %v926
      %v950 = vmul.f32 %v873, %v930
      %v951 = vmul.f32 %v873, %v934
      %v952 = vmul.f32 %v873, %v938
      %v953 = vmul.f32 %v873, %v942
      %v954 = vmul.f32 %v873, %v946
      %v955 = vadd.f32 %v863, %v947
      %v956 = vadd.f32 %v864, %v948
      %v957 = vadd.f32 %v865, %v949
      %v958 = vadd.f32 %v866, %v950
      %v959 = vadd.f32 %v867, %v951
      %v960 = vadd.f32 %v868, %v952
      %v961 = vadd.f32 %v869, %v953
      %v962 = vadd.f32 %v870, %v954
      %963 = vset.pattern.permute.xlu0 2
      %964 = vperm.xlu0 %963, %v781
      %v965 = vpop.permute.xlu0 %964
      %v967 = vlaneseq
      %v968 = vshrl.u32 %v967, 7
      %v969 = vsub.s32 2, %v968
      %v970 = vrot.slane %v389, %v969
      %v971 = vlaneseq
      %v972 = vshrl.u32 %v971, 7
      %v973 = vsub.s32 6, %v972
      %v974 = vrot.slane %v389, %v973
      %v975 = vlaneseq
      %v976 = vshrl.u32 %v975, 7
      %v977 = vsub.s32 2, %v976
      %v978 = vrot.slane %v396, %v977
      %v979 = vlaneseq
      %v980 = vshrl.u32 %v979, 7
      %v981 = vsub.s32 6, %v980
      %v982 = vrot.slane %v396, %v981
      %v983 = vlaneseq
      %v984 = vshrl.u32 %v983, 7
      %v985 = vsub.s32 2, %v984
      %v986 = vrot.slane %v403, %v985
      %v987 = vlaneseq
      %v988 = vshrl.u32 %v987, 7
      %v989 = vsub.s32 6, %v988
      %v990 = vrot.slane %v403, %v989
      %v991 = vlaneseq
      %v992 = vshrl.u32 %v991, 7
      %v993 = vsub.s32 2, %v992
      %v994 = vrot.slane %v410, %v993
      %v995 = vlaneseq
      %v996 = vshrl.u32 %v995, 7
      %v997 = vsub.s32 6, %v996
      %v998 = vrot.slane %v410, %v997
      %v1007 = vlaneseq
      %v1008 = vshrl.u32 %v1007, 7
      %v1009 = vsub.s32 2, %v1008
      %v1010 = vrot.slane %v970, %v1009
      %v1011 = vlaneseq
      %v1012 = vshrl.u32 %v1011, 7
      %v1013 = vsub.s32 2, %v1012
      %v1014 = vrot.slane %v974, %v1013
      %v1015 = vlaneseq
      %v1016 = vshrl.u32 %v1015, 7
      %v1017 = vsub.s32 2, %v1016
      %v1018 = vrot.slane %v978, %v1017
      %v1019 = vlaneseq
      %v1020 = vshrl.u32 %v1019, 7
      %v1021 = vsub.s32 2, %v1020
      %v1022 = vrot.slane %v982, %v1021
      %v1023 = vlaneseq
      %v1024 = vshrl.u32 %v1023, 7
      %v1025 = vsub.s32 2, %v1024
      %v1026 = vrot.slane %v986, %v1025
      %v1027 = vlaneseq
      %v1028 = vshrl.u32 %v1027, 7
      %v1029 = vsub.s32 2, %v1028
      %v1030 = vrot.slane %v990, %v1029
      %v1031 = vlaneseq
      %v1032 = vshrl.u32 %v1031, 7
      %v1033 = vsub.s32 2, %v1032
      %v1034 = vrot.slane %v994, %v1033
      %v1035 = vlaneseq
      %v1036 = vshrl.u32 %v1035, 7
      %v1037 = vsub.s32 2, %v1036
      %v1038 = vrot.slane %v998, %v1037
      %v1039 = vmul.f32 %v965, %v1010
      %v1040 = vmul.f32 %v965, %v1014
      %v1041 = vmul.f32 %v965, %v1018
      %v1042 = vmul.f32 %v965, %v1022
      %v1043 = vmul.f32 %v965, %v1026
      %v1044 = vmul.f32 %v965, %v1030
      %v1045 = vmul.f32 %v965, %v1034
      %v1046 = vmul.f32 %v965, %v1038
      %v1047 = vadd.f32 %v955, %v1039
      %v1048 = vadd.f32 %v956, %v1040
      %v1049 = vadd.f32 %v957, %v1041
      %v1050 = vadd.f32 %v958, %v1042
      %v1051 = vadd.f32 %v959, %v1043
      %v1052 = vadd.f32 %v960, %v1044
      %v1053 = vadd.f32 %v961, %v1045
      %v1054 = vadd.f32 %v962, %v1046
      %1055 = vset.pattern.permute.xlu0 3
      %1056 = vperm.xlu0 %1055, %v781
      %v1057 = vpop.permute.xlu0 %1056
      %v1059 = vlaneseq
      %v1060 = vshrl.u32 %v1059, 7
      %v1061 = vsub.s32 3, %v1060
      %v1062 = vrot.slane %v389, %v1061
      %v1063 = vlaneseq
      %v1064 = vshrl.u32 %v1063, 7
      %v1065 = vsub.s32 7, %v1064
      %v1066 = vrot.slane %v389, %v1065
      %v1067 = vlaneseq
      %v1068 = vshrl.u32 %v1067, 7
      %v1069 = vsub.s32 3, %v1068
      %v1070 = vrot.slane %v396, %v1069
      %v1071 = vlaneseq
      %v1072 = vshrl.u32 %v1071, 7
      %v1073 = vsub.s32 7, %v1072
      %v1074 = vrot.slane %v396, %v1073
      %v1075 = vlaneseq
      %v1076 = vshrl.u32 %v1075, 7
      %v1077 = vsub.s32 3, %v1076
      %v1078 = vrot.slane %v403, %v1077
      %v1079 = vlaneseq
      %v1080 = vshrl.u32 %v1079, 7
      %v1081 = vsub.s32 7, %v1080
      %v1082 = vrot.slane %v403, %v1081
      %v1083 = vlaneseq
      %v1084 = vshrl.u32 %v1083, 7
      %v1085 = vsub.s32 3, %v1084
      %v1086 = vrot.slane %v410, %v1085
      %v1087 = vlaneseq
      %v1088 = vshrl.u32 %v1087, 7
      %v1089 = vsub.s32 7, %v1088
      %v1090 = vrot.slane %v410, %v1089
      %v1099 = vlaneseq
      %v1100 = vshrl.u32 %v1099, 7
      %v1101 = vsub.s32 3, %v1100
      %v1102 = vrot.slane %v1062, %v1101
      %v1103 = vlaneseq
      %v1104 = vshrl.u32 %v1103, 7
      %v1105 = vsub.s32 3, %v1104
      %v1106 = vrot.slane %v1066, %v1105
      %v1107 = vlaneseq
      %v1108 = vshrl.u32 %v1107, 7
      %v1109 = vsub.s32 3, %v1108
      %v1110 = vrot.slane %v1070, %v1109
      %v1111 = vlaneseq
      %v1112 = vshrl.u32 %v1111, 7
      %v1113 = vsub.s32 3, %v1112
      %v1114 = vrot.slane %v1074, %v1113
      %v1115 = vlaneseq
      %v1116 = vshrl.u32 %v1115, 7
      %v1117 = vsub.s32 3, %v1116
      %v1118 = vrot.slane %v1078, %v1117
      %v1119 = vlaneseq
      %v1120 = vshrl.u32 %v1119, 7
      %v1121 = vsub.s32 3, %v1120
      %v1122 = vrot.slane %v1082, %v1121
      %v1123 = vlaneseq
      %v1124 = vshrl.u32 %v1123, 7
      %v1125 = vsub.s32 3, %v1124
      %v1126 = vrot.slane %v1086, %v1125
      %v1127 = vlaneseq
      %v1128 = vshrl.u32 %v1127, 7
      %v1129 = vsub.s32 3, %v1128
      %v1130 = vrot.slane %v1090, %v1129
      %v1131 = vmul.f32 %v1057, %v1102
      %v1132 = vmul.f32 %v1057, %v1106
      %v1133 = vmul.f32 %v1057, %v1110
      %v1134 = vmul.f32 %v1057, %v1114
      %v1135 = vmul.f32 %v1057, %v1118
      %v1136 = vmul.f32 %v1057, %v1122
      %v1137 = vmul.f32 %v1057, %v1126
      %v1138 = vmul.f32 %v1057, %v1130
      %v1139 = vadd.f32 %v1047, %v1131
      %v1140 = vadd.f32 %v1048, %v1132
      %v1141 = vadd.f32 %v1049, %v1133
      %v1142 = vadd.f32 %v1050, %v1134
      %v1143 = vadd.f32 %v1051, %v1135
      %v1144 = vadd.f32 %v1052, %v1136
      %v1145 = vadd.f32 %v1053, %v1137
      %v1146 = vadd.f32 %v1054, %v1138
      %v1147 = vadd.f32 %v773, %v1139
      %v1148 = vadd.f32 %v774, %v1140
      %v1149 = vadd.f32 %v775, %v1141
      %v1150 = vadd.f32 %v776, %v1142
      %v1151 = vadd.f32 %v777, %v1143
      %v1152 = vadd.f32 %v778, %v1144
      %v1153 = vadd.f32 %v779, %v1145
      %v1154 = vadd.f32 %v780, %v1146
      %v1155 = vld [vmem:[%s5] sm:$0xf]
      %1157 = vset.pattern.permute.xlu0 0
      %1158 = vperm.xlu0 %1157, %v1155
      %v1159 = vpop.permute.xlu0 %1158
      %v1161 = vadd.f32 %v1147, %v1159
      %v1162 = vadd.f32 %v1148, %v1159
      %v1163 = vadd.f32 %v1149, %v1159
      %v1164 = vadd.f32 %v1150, %v1159
      %v1165 = vadd.f32 %v1151, %v1159
      %v1166 = vadd.f32 %v1152, %v1159
      %v1167 = vadd.f32 %v1153, %v1159
      %v1168 = vadd.f32 %v1154, %v1159
      %v1177 = vcombine.low %v1161, %v1162
      %v1178 = vcombine.low %v1163, %v1164
      %v1179 = vcombine.low %v1165, %v1166
      %v1180 = vcombine.low %v1167, %v1168
      %1185 = vst [vmem:[%s361] sm:$0xff] %v1177
      %1186 = vst [vmem:[%s361 + $0x8] sm:$0xff] %v1178
      %1187 = vst [vmem:[%s361 + $0x10] sm:$0xff] %v1179
      %1188 = vst [vmem:[%s361 + $0x18] sm:$0xff] %v1180
      %s1189 = smul.u32 8, %s22
      %p1190 = scmp.lt.s32.totalorder %s21, 1
      %s1191 = scalar_select %p1190, %s21, 1
      %p1192 = scmp.lt.s32.totalorder %s1189, 7
      %s1193 = scalar_select %p1192, %s1189, 7
      %s1194 = smul.addr %s1191, 8
      %s1195 = sadd.s32 %s1193, %s1194
      %s1196 = smul.addr %s1195, 4
      %s1197 = scalar_lea.vmem %s6, %s1196
      // Predicated region
      $region45: #{frescat_corner_forward.3} parent=43 // pred_check
        %p1198 = pneg %p196
      $region46: #{frescat_corner_forward.3} parent=43 // pred_check_branch
        %1200 = sbr.rel (%p1198) target = $region48
      $region47: #{frescat_corner_forward.3} parent=43 // pred_region
        %s1201 = smul.u32 8, %s22
      $region48: #{frescat_corner_forward.3} parent=43 // pred_fallthru
        _
    $region44: #{frescat_corner_forward.3} parent=5 // pred_fallthru
      _
    %p1202 = scmp.le.s32.totalorder 2, %s12
    // Predicated region
    $region49: #{frescat_corner_forward.3} parent=5 // pred_check
      %p1203 = pneg %p1202
    $region50: #{frescat_corner_forward.3} parent=5 // pred_check_branch
      %1205 = sbr.rel (%p1203) target = $region52
    $region51: #{frescat_corner_forward.3} parent=5 // pred_region
      %s1206 = ssub.s32 %s12, 2
      // Predicated region
      $region53: #{frescat_corner_forward.3} parent=51 // pred_check
        %p1207 = pneg %p202
      $region54: #{frescat_corner_forward.3} parent=51 // pred_check_branch
        %1209 = sbr.rel (%p1207) target = $region56
      $region55: #{frescat_corner_forward.3} parent=51 // pred_region
        %s1210 = smul.u32 8, %s24
        %p1211 = scmp.lt.s32.totalorder %s23, 1
        %s1212 = scalar_select %p1211, %s23, 1
        %p1213 = scmp.lt.s32.totalorder %s1210, 7
        %s1214 = scalar_select %p1213, %s1210, 7
        %s1215 = smul.addr %s1212, 8
        %s1216 = sadd.s32 %s1214, %s1215
        %s1217 = smul.addr %s1216, 4
        %s1218 = scalar_lea.vmem %s6, %s1217
      $region56: #{frescat_corner_forward.3} parent=51 // pred_fallthru
        _
    $region52: #{frescat_corner_forward.3} parent=5 // pred_fallthru
      _
  $region6: #{frescat_corner_forward.3} parent=0 // loop_footer
    %s16 = sadd.s32 1, %s12
  $region7: #{frescat_corner_forward.3} parent=0 // loop_footer_branch
    %11 = sbr.rel target = $region3
  $region8: #{frescat_corner_forward.3} parent=0 // loop_exit
    _

</llo_original>
